<compile_context>
chip_gen: v5e
topology: v5e:2x2
jax: 0.10.0
libtpu: 0.0.40
codegen_flags: <defaults>
</compile_context>

<pallas_src>
import functools

import jax
import jax.numpy as jnp
from jax.experimental import pallas as pl
from jax.experimental.pallas import tpu as pltpu

EPS = 1e-5  # BatchNorm2d default eps


# --------------------------------------------------------------------------
# Fused kernel: (conv3x3+BN+ReLU) x2 for stacked Q/K/V + attention + residual
# --------------------------------------------------------------------------
def _mfa_kernel(x_ref, a1_ref, b1_ref, a2_ref, b2_ref, mask_ref, esel_ref,
                o_ref, *, views, b, cout, w, hw):
    # x_ref:    (1, Cin, NL)        channel-major input, NL = views*B*HW lanes
    # a1_ref:   (9, Cmid3, Cin)     per-tap stacked Q/K/V layer-1 weights (bf16)
    # b1_ref:   (Cmid3, 1)          BN1-folded bias
    # a2_ref:   (9, Cout3, Cmid3)   per-tap block-diagonal layer-2 weights (bf16)
    # b2_ref:   (Cout3, 1)          BN2-folded bias
    # mask_ref: (9, NL)             combined (dh, dw) border masks
    # esel_ref: (B, B*HW)           image-block selector (1 inside block b)
    # o_ref:    (1, Cout, NL)       attention output + residual
    bhw = b * hw

    def shift_lanes(a, delta):
        # out[..., i] = a[..., (i + delta) % n]  (static lane rotation)
        n = a.shape[-1]
        d = delta % n
        if d == 0:
            return a
        return jnp.concatenate([a[..., d:], a[..., :d]], axis=-1)

    def conv3x3_bn_relu(src, a_ref, bias_ref):
        # src: (Cin_layer, NL) f32; one accumulated MXU matmul per tap.
        acc = None
        for t in range(9):
            dh, dw = divmod(t, 3)
            delta = (dh - 1) * w + (dw - 1)
            xt = shift_lanes(src, delta)
            if t != 4:                                  # centre tap: all-ones mask
                xt = xt * mask_ref[t:t + 1, :]
            y = jnp.dot(a_ref[t], xt.astype(jnp.bfloat16),
                        preferred_element_type=jnp.float32)
            acc = y if acc is None else acc + y
        return jnp.maximum(acc + bias_ref[...], 0.0)

    y1 = conv3x3_bn_relu(x_ref[0], a1_ref, b1_ref)      # (Cmid3, NL)
    y2 = conv3x3_bn_relu(y1, a2_ref, b2_ref)            # (Cout3, NL) stacked Q/K/V

    e_sel = esel_ref[...]                               # (B, B*HW)

    for vi in range(views):
        off = vi * bhw
        yv = y2[:, off:off + bhw]                       # aligned 1024-lane slice
        q = yv[0:cout]                                  # (Cout, B*HW)
        k = yv[cout:2 * cout]
        v = yv[2 * cout:3 * cout]

        # Scores in "diagonal" form: sd[s, b1] = <Q_b1, K_{sigma_s(b1)}>, where
        # sigma_s is the image-block permutation realised by rolling K by s*HW
        # lanes.  The identical roll is applied to V below, so the result is
        # independent of the roll direction.
        d_rows = []
        for s in range(b):
            ks = k if s == 0 else pltpu.roll(k, s * hw, axis=1)
            prod = q * ks                               # (Cout, B*HW)
            blk = jax.lax.dot_general(prod, e_sel, (((1,), (1,)), ((), ())),
                                      preferred_element_type=jnp.float32)
            d_rows.append(jnp.sum(blk, axis=0, keepdims=True))    # (1, B)
        sd = jnp.concatenate(d_rows, axis=0)            # (B_keys, B_queries)

        m = jnp.max(sd, axis=0, keepdims=True)
        e = jnp.exp(sd - m)
        p = e / jnp.sum(e, axis=0, keepdims=True)       # exact reciprocal
        pexp = jnp.dot(p, e_sel,
                       preferred_element_type=jnp.float32)        # (B, B*HW)

        o = x_ref[0, :, off:off + bhw]                  # residual (f32)
        for s in range(b):
            vs = v if s == 0 else pltpu.roll(v, s * hw, axis=1)
            o = o + pexp[s:s + 1, :] * vs
        o_ref[0, :, off:off + bhw] = o                  # single dense store


# --------------------------------------------------------------------------
# Module forward (wrapper: BN folding, weight stacking, layout plumbing)
# --------------------------------------------------------------------------
def multi_frame_attention(x, params, *, sub_batch_size, views_per_block=1):
    n, c, h, w = x.shape
    assert n % sub_batch_size == 0
    b = sub_batch_size
    v = n // b
    hw = h * w
    bhw = b * hw

    vb = views_per_block
    assert v % vb == 0, "views_per_block must divide the number of views"
    num_blocks = v // vb
    nl = vb * bhw

    cin = c
    cmid = params["Wq"]["w1"].shape[0]
    cout = params["Wq"]["w2"].shape[0]
    assert cout == cin, "residual add requires out_channels == in_channels"
    cmid3, cout3 = 3 * cmid, 3 * cout
    keys = ("Wq", "Wk", "Wv")

    def cat(name):
        return jnp.concatenate([params[kk][name] for kk in keys], axis=0)

    # --- layer 1: stack Q/K/V along cout, fold eval-BN scale into weights ---
    s1 = cat("g1") / jnp.sqrt(1.0 + EPS)                 # mean=0, var=1
    w1s = cat("w1") * s1[:, None, None, None]            # (Cmid3, Cin, 3, 3)
    a1 = jnp.transpose(w1s, (2, 3, 0, 1)).reshape(9, cmid3, cin)
    bias1 = (cat("b1") * s1 + cat("be1")).reshape(cmid3, 1)

    # --- layer 2: block-diagonal stacked weights (grouped conv, one matmul) --
    s2 = cat("g2") / jnp.sqrt(1.0 + EPS)
    w2full = jnp.zeros((cout3, cmid3, 3, 3), jnp.float32)
    for gi, gname in enumerate(keys):
        w2full = w2full.at[gi * cout:(gi + 1) * cout,
                           gi * cmid:(gi + 1) * cmid].set(params[gname]["w2"])
    w2full = w2full * s2[:, None, None, None]
    a2 = jnp.transpose(w2full, (2, 3, 0, 1)).reshape(9, cout3, cmid3)
    bias2 = (cat("b2") * s2 + cat("be2")).reshape(cout3, 1)

    a1 = a1.astype(jnp.bfloat16)        # bf16 MXU operands (f32 accumulation)
    a2 = a2.astype(jnp.bfloat16)

    # --- combined per-tap (dh, dw) border masks on the aligned HW layout ----
    rr = jnp.arange(hw) // w
    cc = jnp.arange(hw) % w
    row_ok = [rr >= 1, jnp.ones((hw,), dtype=jnp.bool_), rr <= h - 2]
    col_ok = [cc >= 1, jnp.ones((hw,), dtype=jnp.bool_), cc <= w - 2]
    mask9 = jnp.stack([(row_ok[dh] & col_ok[dw]).astype(jnp.float32)
                       for dh in range(3) for dw in range(3)])       # (9, HW)
    mask_nl = jnp.tile(mask9, (1, vb * b))                           # (9, NL)

    # --- image-block selector for per-image lane-block sums / broadcasts ----
    e_sel = (jnp.arange(bhw)[None, :] // hw
             == jnp.arange(b)[:, None]).astype(jnp.float32)          # (B, B*HW)

    # --- channel-major, lane-dense input layout: (blocks, C, vb*B*HW) -------
    xg = (x.reshape(num_blocks, vb, b, cin, hw)
            .transpose(0, 3, 1, 2, 4)
            .reshape(num_blocks, cin, nl))

    kernel = functools.partial(_mfa_kernel, views=vb, b=b, cout=cout, w=w, hw=hw)

    flops = int(2 * 9 * nl * num_blocks * (cmid3 * cin + cout3 * cmid3)
                + v * (2 * b * cout * bhw * b          # scores
                       + 2 * b * b * bhw               # P expansion
                       + 2 * b * cout * bhw * b))      # P @ V
    bytes_accessed = int(4 * (xg.size + num_blocks * cout * nl + mask_nl.size
                              + e_sel.size + bias1.size + bias2.size)
                         + 2 * (a1.size + a2.size))
    cost = pl.CostEstimate(flops=flops, transcendentals=int(v * b * b),
                           bytes_accessed=bytes_accessed)

    out = pl.pallas_call(
        kernel,
        out_shape=jax.ShapeDtypeStruct((num_blocks, cout, nl), jnp.float32),
        grid=(num_blocks,),
        in_specs=[
            pl.BlockSpec((1, cin, nl), lambda i: (i, 0, 0)),
            pl.BlockSpec((9, cmid3, cin), lambda i: (0, 0, 0)),
            pl.BlockSpec((cmid3, 1), lambda i: (0, 0)),
            pl.BlockSpec((9, cout3, cmid3), lambda i: (0, 0, 0)),
            pl.BlockSpec((cout3, 1), lambda i: (0, 0)),
            pl.BlockSpec((9, nl), lambda i: (0, 0)),
            pl.BlockSpec((b, bhw), lambda i: (0, 0)),
        ],
        out_specs=pl.BlockSpec((1, cout, nl), lambda i: (i, 0, 0)),
        compiler_params=pltpu.CompilerParams(
            dimension_semantics=("parallel",),
            vmem_limit_bytes=32 * 1024 * 1024),
        cost_estimate=cost,
    )(xg, a1, bias1, a2, bias2, mask_nl, e_sel)

    # (blocks, C, vb*B*HW) -> (N, C, H, W): cheap wrapper-side layout plumbing.
    return (out.reshape(num_blocks, cout, vb, b, hw)
               .transpose(0, 2, 3, 1, 4)
               .reshape(n, cout, h, w))


# --------------------------------------------------------------------------
# Deterministic parameter init (shapes per nn.Module __init__)
# --------------------------------------------------------------------------
def init_conv_mfa_params(key, cin, cmid, cout):
    ks = jax.random.split(key, 8)

    def conv_params(kw, kb, kg, kbe, ci, co):
        return (0.05 * jax.random.normal(kw, (co, ci, 3, 3), jnp.float32),
                0.05 * jax.random.normal(kb, (co,), jnp.float32),
                1.0 + 0.1 * jax.random.normal(kg, (co,), jnp.float32),
                0.05 * jax.random.normal(kbe, (co,), jnp.float32))

    w1, b1, g1, be1 = conv_params(ks[0], ks[1], ks[2], ks[3], cin, cmid)
    w2, b2, g2, be2 = conv_params(ks[4], ks[5], ks[6], ks[7], cmid, cout)
    return dict(w1=w1, b1=b1, g1=g1, be1=be1,
                w2=w2, b2=b2, g2=g2, be2=be2)


# --------------------------------------------------------------------------
# Pure-JAX reference (numerical sanity check)
# --------------------------------------------------------------------------
def _ref_conv_bn_relu(x, w, b, gamma, beta):
    y = jax.lax.conv_general_dilated(
        x, w, window_strides=(1, 1), padding="SAME",
        dimension_numbers=("NCHW", "OIHW", "NCHW"),
        precision=jax.lax.Precision.HIGHEST)
    y = y + b[None, :, None, None]
    y = y / jnp.sqrt(1.0 + EPS)
    y = y * gamma[None, :, None, None] + beta[None, :, None, None]
    return jnp.maximum(y, 0.0)


def _ref_mfa(x, params, sub_batch_size):
    n, c, h, w = x.shape
    vdim = n // sub_batch_size
    b = sub_batch_size
    d = c * h * w

    def proj(p):
        y = _ref_conv_bn_relu(x, p["w1"], p["b1"], p["g1"], p["be1"])
        return _ref_conv_bn_relu(y, p["w2"], p["b2"], p["g2"], p["be2"])

    q = proj(params["Wq"]).reshape(vdim, b, d)
    k = proj(params["Wk"]).reshape(vdim, b, d)
    v = proj(params["Wv"]).reshape(vdim, b, d)
    s = jnp.matmul(q, jnp.transpose(k, (0, 2, 1)),
                   precision=jax.lax.Precision.HIGHEST)
    p_att = jax.nn.softmax(s, axis=2)
    o = jnp.matmul(p_att, v, precision=jax.lax.Precision.HIGHEST)
    return o.reshape(n, c, h, w) + x


if __name__ == "__main__":
    key = jax.random.PRNGKey(0)
    kx, kq, kk, kv = jax.random.split(key, 4)

    C, H, W = 4, 16, 16          # in_channels == out_channels (residual add)
    SUB = 4                      # sub_batch_size
    N = 2 * SUB                  # V = 2 views

    x = jax.random.normal(kx, (N, C, H, W), jnp.float32)
    params = dict(Wq=init_conv_mfa_params(kq, C, C, C),
                  Wk=init_conv_mfa_params(kk, C, C, C),
                  Wv=init_conv_mfa_params(kv, C, C, C))

    fn = jax.jit(functools.partial(multi_frame_attention, sub_batch_size=SUB,
                                   views_per_block=1))
    out = fn(x, params)
    jax.block_until_ready(out)

    ref = _ref_mfa(x, params, SUB)
    assert out.shape == (N, C, H, W), out.shape
    max_err = float(jnp.max(jnp.abs(out - ref)))
    # bf16 conv matmuls (f32 accumulation) vs. an f32 HIGHEST-precision ref.
    assert max_err < 3e-2, f"max abs error too large: {max_err}"

    print("KERNEL_OK")
</pallas_src>

<mosaic_0001>
module attributes {stable_mosaic.version = 11 : i64} {
  func.func @_mfa_kernel(%arg0: i32, %arg1: memref<1x4x1024xf32, #tpu.memory_space<vmem>>, %arg2: memref<9x12x4xbf16, #tpu.memory_space<vmem>>, %arg3: memref<12x1xf32, #tpu.memory_space<vmem>>, %arg4: memref<9x12x12xbf16, #tpu.memory_space<vmem>>, %arg5: memref<12x1xf32, #tpu.memory_space<vmem>>, %arg6: memref<9x1024xf32, #tpu.memory_space<vmem>>, %arg7: memref<4x1024xf32, #tpu.memory_space<vmem>>, %arg8: memref<1x4x1024xf32, #tpu.memory_space<vmem>>) attributes {dimension_semantics = [#tpu.dimension_semantics<parallel>], iteration_bounds = array<i64: 2>, scalar_prefetch = 0 : i64, scratch_operands = 0 : i64, tpu.core_type = #tpu.core_type<tc>, window_params = [{transform_indices = @transform_0, window_bounds = array<i64: 1, 4, 1024>}, {pipeline_mode = #tpu.pipeline_mode<synchronous>, transform_indices = @transform_1, window_bounds = array<i64: 9, 12, 4>}, {pipeline_mode = #tpu.pipeline_mode<synchronous>, transform_indices = @transform_2, window_bounds = array<i64: 12, 1>}, {pipeline_mode = #tpu.pipeline_mode<synchronous>, transform_indices = @transform_3, window_bounds = array<i64: 9, 12, 12>}, {pipeline_mode = #tpu.pipeline_mode<synchronous>, transform_indices = @transform_4, window_bounds = array<i64: 12, 1>}, {pipeline_mode = #tpu.pipeline_mode<synchronous>, transform_indices = @transform_5, window_bounds = array<i64: 9, 1024>}, {pipeline_mode = #tpu.pipeline_mode<synchronous>, transform_indices = @transform_6, window_bounds = array<i64: 4, 1024>}, {transform_indices = @transform_7, window_bounds = array<i64: 1, 4, 1024>}]} {
    %c0 = arith.constant 0 : index
    %c0_0 = arith.constant 0 : index
    %c0_1 = arith.constant 0 : index
    %0 = vector.load %arg1[%c0, %c0_0, %c0_1] : memref<1x4x1024xf32, #tpu.memory_space<vmem>>, vector<1x4x1024xf32>
    %1 = vector.shape_cast %0 : vector<1x4x1024xf32> to vector<4x1024xf32>
    %2 = vector.extract_strided_slice %1 {offsets = [0, 1007], sizes = [4, 17], strides = [1, 1]} : vector<4x1024xf32> to vector<4x17xf32>
    %3 = vector.extract_strided_slice %1 {offsets = [0, 0], sizes = [4, 1007], strides = [1, 1]} : vector<4x1024xf32> to vector<4x1007xf32>
    %4 = tpu.concatenate %2, %3 in 1 : vector<4x17xf32>, vector<4x1007xf32> -> vector<4x1024xf32>
    %c0_2 = arith.constant 0 : index
    %c0_3 = arith.constant 0 : index
    %5 = vector.load %arg6[%c0_2, %c0_3] : memref<9x1024xf32, #tpu.memory_space<vmem>>, vector<1x1024xf32>
    %6 = vector.broadcast %5 : vector<1x1024xf32> to vector<4x1024xf32>
    %7 = arith.mulf %4, %6 : vector<4x1024xf32>
    %c0_4 = arith.constant 0 : index
    %c0_5 = arith.constant 0 : index
    %c0_6 = arith.constant 0 : index
    %8 = vector.load %arg2[%c0_4, %c0_5, %c0_6] : memref<9x12x4xbf16, #tpu.memory_space<vmem>>, vector<1x12x4xbf16>
    %9 = vector.shape_cast %8 : vector<1x12x4xbf16> to vector<12x4xbf16>
    %10 = arith.truncf %7 : vector<4x1024xf32> to vector<4x1024xbf16>
    %cst = arith.constant dense<0.000000e+00> : vector<12x1024xf32>
    %11 = tpu.matmul %9, %10, %cst {dimension_numbers = #tpu.dot_dimension_numbers<[1], [0], [0], [1], [0, 0, 1, 1], [], []>} : vector<12x4xbf16>, vector<4x1024xbf16>, vector<12x1024xf32> -> vector<12x1024xf32>
    %12 = vector.extract_strided_slice %1 {offsets = [0, 1008], sizes = [4, 16], strides = [1, 1]} : vector<4x1024xf32> to vector<4x16xf32>
    %13 = vector.extract_strided_slice %1 {offsets = [0, 0], sizes = [4, 1008], strides = [1, 1]} : vector<4x1024xf32> to vector<4x1008xf32>
    %14 = tpu.concatenate %12, %13 in 1 : vector<4x16xf32>, vector<4x1008xf32> -> vector<4x1024xf32>
    %c1 = arith.constant 1 : index
    %c0_7 = arith.constant 0 : index
    %15 = vector.load %arg6[%c1, %c0_7] : memref<9x1024xf32, #tpu.memory_space<vmem>>, vector<1x1024xf32>
    %16 = vector.broadcast %15 : vector<1x1024xf32> to vector<4x1024xf32>
    %17 = arith.mulf %14, %16 : vector<4x1024xf32>
    %c1_8 = arith.constant 1 : index
    %c0_9 = arith.constant 0 : index
    %c0_10 = arith.constant 0 : index
    %18 = vector.load %arg2[%c1_8, %c0_9, %c0_10] : memref<9x12x4xbf16, #tpu.memory_space<vmem>>, vector<1x12x4xbf16>
    %19 = vector.shape_cast %18 : vector<1x12x4xbf16> to vector<12x4xbf16>
    %20 = arith.truncf %17 : vector<4x1024xf32> to vector<4x1024xbf16>
    %cst_11 = arith.constant dense<0.000000e+00> : vector<12x1024xf32>
    %21 = tpu.matmul %19, %20, %cst_11 {dimension_numbers = #tpu.dot_dimension_numbers<[1], [0], [0], [1], [0, 0, 1, 1], [], []>} : vector<12x4xbf16>, vector<4x1024xbf16>, vector<12x1024xf32> -> vector<12x1024xf32>
    %22 = arith.addf %11, %21 : vector<12x1024xf32>
    %23 = vector.extract_strided_slice %1 {offsets = [0, 1009], sizes = [4, 15], strides = [1, 1]} : vector<4x1024xf32> to vector<4x15xf32>
    %24 = vector.extract_strided_slice %1 {offsets = [0, 0], sizes = [4, 1009], strides = [1, 1]} : vector<4x1024xf32> to vector<4x1009xf32>
    %25 = tpu.concatenate %23, %24 in 1 : vector<4x15xf32>, vector<4x1009xf32> -> vector<4x1024xf32>
    %c2 = arith.constant 2 : index
    %c0_12 = arith.constant 0 : index
    %26 = vector.load %arg6[%c2, %c0_12] : memref<9x1024xf32, #tpu.memory_space<vmem>>, vector<1x1024xf32>
    %27 = vector.broadcast %26 : vector<1x1024xf32> to vector<4x1024xf32>
    %28 = arith.mulf %25, %27 : vector<4x1024xf32>
    %c2_13 = arith.constant 2 : index
    %c0_14 = arith.constant 0 : index
    %c0_15 = arith.constant 0 : index
    %29 = vector.load %arg2[%c2_13, %c0_14, %c0_15] : memref<9x12x4xbf16, #tpu.memory_space<vmem>>, vector<1x12x4xbf16>
    %30 = vector.shape_cast %29 : vector<1x12x4xbf16> to vector<12x4xbf16>
    %31 = arith.truncf %28 : vector<4x1024xf32> to vector<4x1024xbf16>
    %cst_16 = arith.constant dense<0.000000e+00> : vector<12x1024xf32>
    %32 = tpu.matmul %30, %31, %cst_16 {dimension_numbers = #tpu.dot_dimension_numbers<[1], [0], [0], [1], [0, 0, 1, 1], [], []>} : vector<12x4xbf16>, vector<4x1024xbf16>, vector<12x1024xf32> -> vector<12x1024xf32>
    %33 = arith.addf %22, %32 : vector<12x1024xf32>
    %34 = vector.extract_strided_slice %1 {offsets = [0, 1023], sizes = [4, 1], strides = [1, 1]} : vector<4x1024xf32> to vector<4x1xf32>
    %35 = vector.extract_strided_slice %1 {offsets = [0, 0], sizes = [4, 1023], strides = [1, 1]} : vector<4x1024xf32> to vector<4x1023xf32>
    %36 = tpu.concatenate %34, %35 in 1 : vector<4x1xf32>, vector<4x1023xf32> -> vector<4x1024xf32>
    %c3 = arith.constant 3 : index
    %c0_17 = arith.constant 0 : index
    %37 = vector.load %arg6[%c3, %c0_17] : memref<9x1024xf32, #tpu.memory_space<vmem>>, vector<1x1024xf32>
    %38 = vector.broadcast %37 : vector<1x1024xf32> to vector<4x1024xf32>
    %39 = arith.mulf %36, %38 : vector<4x1024xf32>
    %c3_18 = arith.constant 3 : index
    %c0_19 = arith.constant 0 : index
    %c0_20 = arith.constant 0 : index
    %40 = vector.load %arg2[%c3_18, %c0_19, %c0_20] : memref<9x12x4xbf16, #tpu.memory_space<vmem>>, vector<1x12x4xbf16>
    %41 = vector.shape_cast %40 : vector<1x12x4xbf16> to vector<12x4xbf16>
    %42 = arith.truncf %39 : vector<4x1024xf32> to vector<4x1024xbf16>
    %cst_21 = arith.constant dense<0.000000e+00> : vector<12x1024xf32>
    %43 = tpu.matmul %41, %42, %cst_21 {dimension_numbers = #tpu.dot_dimension_numbers<[1], [0], [0], [1], [0, 0, 1, 1], [], []>} : vector<12x4xbf16>, vector<4x1024xbf16>, vector<12x1024xf32> -> vector<12x1024xf32>
    %44 = arith.addf %33, %43 : vector<12x1024xf32>
    %c4 = arith.constant 4 : index
    %c0_22 = arith.constant 0 : index
    %c0_23 = arith.constant 0 : index
    %45 = vector.load %arg2[%c4, %c0_22, %c0_23] : memref<9x12x4xbf16, #tpu.memory_space<vmem>>, vector<1x12x4xbf16>
    %46 = vector.shape_cast %45 : vector<1x12x4xbf16> to vector<12x4xbf16>
    %47 = arith.truncf %1 : vector<4x1024xf32> to vector<4x1024xbf16>
    %cst_24 = arith.constant dense<0.000000e+00> : vector<12x1024xf32>
    %48 = tpu.matmul %46, %47, %cst_24 {dimension_numbers = #tpu.dot_dimension_numbers<[1], [0], [0], [1], [0, 0, 1, 1], [], []>} : vector<12x4xbf16>, vector<4x1024xbf16>, vector<12x1024xf32> -> vector<12x1024xf32>
    %49 = arith.addf %44, %48 : vector<12x1024xf32>
    %50 = vector.extract_strided_slice %1 {offsets = [0, 1], sizes = [4, 1023], strides = [1, 1]} : vector<4x1024xf32> to vector<4x1023xf32>
    %51 = vector.extract_strided_slice %1 {offsets = [0, 0], sizes = [4, 1], strides = [1, 1]} : vector<4x1024xf32> to vector<4x1xf32>
    %52 = tpu.concatenate %50, %51 in 1 : vector<4x1023xf32>, vector<4x1xf32> -> vector<4x1024xf32>
    %c5 = arith.constant 5 : index
    %c0_25 = arith.constant 0 : index
    %53 = vector.load %arg6[%c5, %c0_25] : memref<9x1024xf32, #tpu.memory_space<vmem>>, vector<1x1024xf32>
    %54 = vector.broadcast %53 : vector<1x1024xf32> to vector<4x1024xf32>
    %55 = arith.mulf %52, %54 : vector<4x1024xf32>
    %c5_26 = arith.constant 5 : index
    %c0_27 = arith.constant 0 : index
    %c0_28 = arith.constant 0 : index
    %56 = vector.load %arg2[%c5_26, %c0_27, %c0_28] : memref<9x12x4xbf16, #tpu.memory_space<vmem>>, vector<1x12x4xbf16>
    %57 = vector.shape_cast %56 : vector<1x12x4xbf16> to vector<12x4xbf16>
    %58 = arith.truncf %55 : vector<4x1024xf32> to vector<4x1024xbf16>
    %cst_29 = arith.constant dense<0.000000e+00> : vector<12x1024xf32>
    %59 = tpu.matmul %57, %58, %cst_29 {dimension_numbers = #tpu.dot_dimension_numbers<[1], [0], [0], [1], [0, 0, 1, 1], [], []>} : vector<12x4xbf16>, vector<4x1024xbf16>, vector<12x1024xf32> -> vector<12x1024xf32>
    %60 = arith.addf %49, %59 : vector<12x1024xf32>
    %61 = vector.extract_strided_slice %1 {offsets = [0, 15], sizes = [4, 1009], strides = [1, 1]} : vector<4x1024xf32> to vector<4x1009xf32>
    %62 = vector.extract_strided_slice %1 {offsets = [0, 0], sizes = [4, 15], strides = [1, 1]} : vector<4x1024xf32> to vector<4x15xf32>
    %63 = tpu.concatenate %61, %62 in 1 : vector<4x1009xf32>, vector<4x15xf32> -> vector<4x1024xf32>
    %c6 = arith.constant 6 : index
    %c0_30 = arith.constant 0 : index
    %64 = vector.load %arg6[%c6, %c0_30] : memref<9x1024xf32, #tpu.memory_space<vmem>>, vector<1x1024xf32>
    %65 = vector.broadcast %64 : vector<1x1024xf32> to vector<4x1024xf32>
    %66 = arith.mulf %63, %65 : vector<4x1024xf32>
    %c6_31 = arith.constant 6 : index
    %c0_32 = arith.constant 0 : index
    %c0_33 = arith.constant 0 : index
    %67 = vector.load %arg2[%c6_31, %c0_32, %c0_33] : memref<9x12x4xbf16, #tpu.memory_space<vmem>>, vector<1x12x4xbf16>
    %68 = vector.shape_cast %67 : vector<1x12x4xbf16> to vector<12x4xbf16>
    %69 = arith.truncf %66 : vector<4x1024xf32> to vector<4x1024xbf16>
    %cst_34 = arith.constant dense<0.000000e+00> : vector<12x1024xf32>
    %70 = tpu.matmul %68, %69, %cst_34 {dimension_numbers = #tpu.dot_dimension_numbers<[1], [0], [0], [1], [0, 0, 1, 1], [], []>} : vector<12x4xbf16>, vector<4x1024xbf16>, vector<12x1024xf32> -> vector<12x1024xf32>
    %71 = arith.addf %60, %70 : vector<12x1024xf32>
    %72 = vector.extract_strided_slice %1 {offsets = [0, 16], sizes = [4, 1008], strides = [1, 1]} : vector<4x1024xf32> to vector<4x1008xf32>
    %73 = vector.extract_strided_slice %1 {offsets = [0, 0], sizes = [4, 16], strides = [1, 1]} : vector<4x1024xf32> to vector<4x16xf32>
    %74 = tpu.concatenate %72, %73 in 1 : vector<4x1008xf32>, vector<4x16xf32> -> vector<4x1024xf32>
    %c7 = arith.constant 7 : index
    %c0_35 = arith.constant 0 : index
    %75 = vector.load %arg6[%c7, %c0_35] : memref<9x1024xf32, #tpu.memory_space<vmem>>, vector<1x1024xf32>
    %76 = vector.broadcast %75 : vector<1x1024xf32> to vector<4x1024xf32>
    %77 = arith.mulf %74, %76 : vector<4x1024xf32>
    %c7_36 = arith.constant 7 : index
    %c0_37 = arith.constant 0 : index
    %c0_38 = arith.constant 0 : index
    %78 = vector.load %arg2[%c7_36, %c0_37, %c0_38] : memref<9x12x4xbf16, #tpu.memory_space<vmem>>, vector<1x12x4xbf16>
    %79 = vector.shape_cast %78 : vector<1x12x4xbf16> to vector<12x4xbf16>
    %80 = arith.truncf %77 : vector<4x1024xf32> to vector<4x1024xbf16>
    %cst_39 = arith.constant dense<0.000000e+00> : vector<12x1024xf32>
    %81 = tpu.matmul %79, %80, %cst_39 {dimension_numbers = #tpu.dot_dimension_numbers<[1], [0], [0], [1], [0, 0, 1, 1], [], []>} : vector<12x4xbf16>, vector<4x1024xbf16>, vector<12x1024xf32> -> vector<12x1024xf32>
    %82 = arith.addf %71, %81 : vector<12x1024xf32>
    %83 = vector.extract_strided_slice %1 {offsets = [0, 17], sizes = [4, 1007], strides = [1, 1]} : vector<4x1024xf32> to vector<4x1007xf32>
    %84 = vector.extract_strided_slice %1 {offsets = [0, 0], sizes = [4, 17], strides = [1, 1]} : vector<4x1024xf32> to vector<4x17xf32>
    %85 = tpu.concatenate %83, %84 in 1 : vector<4x1007xf32>, vector<4x17xf32> -> vector<4x1024xf32>
    %c8 = arith.constant 8 : index
    %c0_40 = arith.constant 0 : index
    %86 = vector.load %arg6[%c8, %c0_40] : memref<9x1024xf32, #tpu.memory_space<vmem>>, vector<1x1024xf32>
    %87 = vector.broadcast %86 : vector<1x1024xf32> to vector<4x1024xf32>
    %88 = arith.mulf %85, %87 : vector<4x1024xf32>
    %c8_41 = arith.constant 8 : index
    %c0_42 = arith.constant 0 : index
    %c0_43 = arith.constant 0 : index
    %89 = vector.load %arg2[%c8_41, %c0_42, %c0_43] : memref<9x12x4xbf16, #tpu.memory_space<vmem>>, vector<1x12x4xbf16>
    %90 = vector.shape_cast %89 : vector<1x12x4xbf16> to vector<12x4xbf16>
    %91 = arith.truncf %88 : vector<4x1024xf32> to vector<4x1024xbf16>
    %cst_44 = arith.constant dense<0.000000e+00> : vector<12x1024xf32>
    %92 = tpu.matmul %90, %91, %cst_44 {dimension_numbers = #tpu.dot_dimension_numbers<[1], [0], [0], [1], [0, 0, 1, 1], [], []>} : vector<12x4xbf16>, vector<4x1024xbf16>, vector<12x1024xf32> -> vector<12x1024xf32>
    %93 = arith.addf %82, %92 : vector<12x1024xf32>
    %c0_45 = arith.constant 0 : index
    %c0_46 = arith.constant 0 : index
    %94 = vector.load %arg3[%c0_45, %c0_46] : memref<12x1xf32, #tpu.memory_space<vmem>>, vector<12x1xf32>
    %95 = vector.broadcast %94 : vector<12x1xf32> to vector<12x1024xf32>
    %96 = arith.addf %93, %95 : vector<12x1024xf32>
    %cst_47 = arith.constant 0.000000e+00 : f32
    %97 = vector.broadcast %cst_47 : f32 to vector<12x1024xf32>
    %98 = arith.maximumf %96, %97 : vector<12x1024xf32>
    %99 = vector.extract_strided_slice %98 {offsets = [0, 1007], sizes = [12, 17], strides = [1, 1]} : vector<12x1024xf32> to vector<12x17xf32>
    %100 = vector.extract_strided_slice %98 {offsets = [0, 0], sizes = [12, 1007], strides = [1, 1]} : vector<12x1024xf32> to vector<12x1007xf32>
    %101 = tpu.concatenate %99, %100 in 1 : vector<12x17xf32>, vector<12x1007xf32> -> vector<12x1024xf32>
    %c0_48 = arith.constant 0 : index
    %c0_49 = arith.constant 0 : index
    %102 = vector.load %arg6[%c0_48, %c0_49] : memref<9x1024xf32, #tpu.memory_space<vmem>>, vector<1x1024xf32>
    %103 = vector.broadcast %102 : vector<1x1024xf32> to vector<12x1024xf32>
    %104 = arith.mulf %101, %103 : vector<12x1024xf32>
    %c0_50 = arith.constant 0 : index
    %c0_51 = arith.constant 0 : index
    %c0_52 = arith.constant 0 : index
    %105 = vector.load %arg4[%c0_50, %c0_51, %c0_52] : memref<9x12x12xbf16, #tpu.memory_space<vmem>>, vector<1x12x12xbf16>
    %106 = vector.shape_cast %105 : vector<1x12x12xbf16> to vector<12x12xbf16>
    %107 = arith.truncf %104 : vector<12x1024xf32> to vector<12x1024xbf16>
    %cst_53 = arith.constant dense<0.000000e+00> : vector<12x1024xf32>
    %108 = tpu.matmul %106, %107, %cst_53 {dimension_numbers = #tpu.dot_dimension_numbers<[1], [0], [0], [1], [0, 0, 1, 1], [], []>} : vector<12x12xbf16>, vector<12x1024xbf16>, vector<12x1024xf32> -> vector<12x1024xf32>
    %109 = vector.extract_strided_slice %98 {offsets = [0, 1008], sizes = [12, 16], strides = [1, 1]} : vector<12x1024xf32> to vector<12x16xf32>
    %110 = vector.extract_strided_slice %98 {offsets = [0, 0], sizes = [12, 1008], strides = [1, 1]} : vector<12x1024xf32> to vector<12x1008xf32>
    %111 = tpu.concatenate %109, %110 in 1 : vector<12x16xf32>, vector<12x1008xf32> -> vector<12x1024xf32>
    %c1_54 = arith.constant 1 : index
    %c0_55 = arith.constant 0 : index
    %112 = vector.load %arg6[%c1_54, %c0_55] : memref<9x1024xf32, #tpu.memory_space<vmem>>, vector<1x1024xf32>
    %113 = vector.broadcast %112 : vector<1x1024xf32> to vector<12x1024xf32>
    %114 = arith.mulf %111, %113 : vector<12x1024xf32>
    %c1_56 = arith.constant 1 : index
    %c0_57 = arith.constant 0 : index
    %c0_58 = arith.constant 0 : index
    %115 = vector.load %arg4[%c1_56, %c0_57, %c0_58] : memref<9x12x12xbf16, #tpu.memory_space<vmem>>, vector<1x12x12xbf16>
    %116 = vector.shape_cast %115 : vector<1x12x12xbf16> to vector<12x12xbf16>
    %117 = arith.truncf %114 : vector<12x1024xf32> to vector<12x1024xbf16>
    %cst_59 = arith.constant dense<0.000000e+00> : vector<12x1024xf32>
    %118 = tpu.matmul %116, %117, %cst_59 {dimension_numbers = #tpu.dot_dimension_numbers<[1], [0], [0], [1], [0, 0, 1, 1], [], []>} : vector<12x12xbf16>, vector<12x1024xbf16>, vector<12x1024xf32> -> vector<12x1024xf32>
    %119 = arith.addf %108, %118 : vector<12x1024xf32>
    %120 = vector.extract_strided_slice %98 {offsets = [0, 1009], sizes = [12, 15], strides = [1, 1]} : vector<12x1024xf32> to vector<12x15xf32>
    %121 = vector.extract_strided_slice %98 {offsets = [0, 0], sizes = [12, 1009], strides = [1, 1]} : vector<12x1024xf32> to vector<12x1009xf32>
    %122 = tpu.concatenate %120, %121 in 1 : vector<12x15xf32>, vector<12x1009xf32> -> vector<12x1024xf32>
    %c2_60 = arith.constant 2 : index
    %c0_61 = arith.constant 0 : index
    %123 = vector.load %arg6[%c2_60, %c0_61] : memref<9x1024xf32, #tpu.memory_space<vmem>>, vector<1x1024xf32>
    %124 = vector.broadcast %123 : vector<1x1024xf32> to vector<12x1024xf32>
    %125 = arith.mulf %122, %124 : vector<12x1024xf32>
    %c2_62 = arith.constant 2 : index
    %c0_63 = arith.constant 0 : index
    %c0_64 = arith.constant 0 : index
    %126 = vector.load %arg4[%c2_62, %c0_63, %c0_64] : memref<9x12x12xbf16, #tpu.memory_space<vmem>>, vector<1x12x12xbf16>
    %127 = vector.shape_cast %126 : vector<1x12x12xbf16> to vector<12x12xbf16>
    %128 = arith.truncf %125 : vector<12x1024xf32> to vector<12x1024xbf16>
    %cst_65 = arith.constant dense<0.000000e+00> : vector<12x1024xf32>
    %129 = tpu.matmul %127, %128, %cst_65 {dimension_numbers = #tpu.dot_dimension_numbers<[1], [0], [0], [1], [0, 0, 1, 1], [], []>} : vector<12x12xbf16>, vector<12x1024xbf16>, vector<12x1024xf32> -> vector<12x1024xf32>
    %130 = arith.addf %119, %129 : vector<12x1024xf32>
    %131 = vector.extract_strided_slice %98 {offsets = [0, 1023], sizes = [12, 1], strides = [1, 1]} : vector<12x1024xf32> to vector<12x1xf32>
    %132 = vector.extract_strided_slice %98 {offsets = [0, 0], sizes = [12, 1023], strides = [1, 1]} : vector<12x1024xf32> to vector<12x1023xf32>
    %133 = tpu.concatenate %131, %132 in 1 : vector<12x1xf32>, vector<12x1023xf32> -> vector<12x1024xf32>
    %c3_66 = arith.constant 3 : index
    %c0_67 = arith.constant 0 : index
    %134 = vector.load %arg6[%c3_66, %c0_67] : memref<9x1024xf32, #tpu.memory_space<vmem>>, vector<1x1024xf32>
    %135 = vector.broadcast %134 : vector<1x1024xf32> to vector<12x1024xf32>
    %136 = arith.mulf %133, %135 : vector<12x1024xf32>
    %c3_68 = arith.constant 3 : index
    %c0_69 = arith.constant 0 : index
    %c0_70 = arith.constant 0 : index
    %137 = vector.load %arg4[%c3_68, %c0_69, %c0_70] : memref<9x12x12xbf16, #tpu.memory_space<vmem>>, vector<1x12x12xbf16>
    %138 = vector.shape_cast %137 : vector<1x12x12xbf16> to vector<12x12xbf16>
    %139 = arith.truncf %136 : vector<12x1024xf32> to vector<12x1024xbf16>
    %cst_71 = arith.constant dense<0.000000e+00> : vector<12x1024xf32>
    %140 = tpu.matmul %138, %139, %cst_71 {dimension_numbers = #tpu.dot_dimension_numbers<[1], [0], [0], [1], [0, 0, 1, 1], [], []>} : vector<12x12xbf16>, vector<12x1024xbf16>, vector<12x1024xf32> -> vector<12x1024xf32>
    %141 = arith.addf %130, %140 : vector<12x1024xf32>
    %c4_72 = arith.constant 4 : index
    %c0_73 = arith.constant 0 : index
    %c0_74 = arith.constant 0 : index
    %142 = vector.load %arg4[%c4_72, %c0_73, %c0_74] : memref<9x12x12xbf16, #tpu.memory_space<vmem>>, vector<1x12x12xbf16>
    %143 = vector.shape_cast %142 : vector<1x12x12xbf16> to vector<12x12xbf16>
    %144 = arith.truncf %98 : vector<12x1024xf32> to vector<12x1024xbf16>
    %cst_75 = arith.constant dense<0.000000e+00> : vector<12x1024xf32>
    %145 = tpu.matmul %143, %144, %cst_75 {dimension_numbers = #tpu.dot_dimension_numbers<[1], [0], [0], [1], [0, 0, 1, 1], [], []>} : vector<12x12xbf16>, vector<12x1024xbf16>, vector<12x1024xf32> -> vector<12x1024xf32>
    %146 = arith.addf %141, %145 : vector<12x1024xf32>
    %147 = vector.extract_strided_slice %98 {offsets = [0, 1], sizes = [12, 1023], strides = [1, 1]} : vector<12x1024xf32> to vector<12x1023xf32>
    %148 = vector.extract_strided_slice %98 {offsets = [0, 0], sizes = [12, 1], strides = [1, 1]} : vector<12x1024xf32> to vector<12x1xf32>
    %149 = tpu.concatenate %147, %148 in 1 : vector<12x1023xf32>, vector<12x1xf32> -> vector<12x1024xf32>
    %c5_76 = arith.constant 5 : index
    %c0_77 = arith.constant 0 : index
    %150 = vector.load %arg6[%c5_76, %c0_77] : memref<9x1024xf32, #tpu.memory_space<vmem>>, vector<1x1024xf32>
    %151 = vector.broadcast %150 : vector<1x1024xf32> to vector<12x1024xf32>
    %152 = arith.mulf %149, %151 : vector<12x1024xf32>
    %c5_78 = arith.constant 5 : index
    %c0_79 = arith.constant 0 : index
    %c0_80 = arith.constant 0 : index
    %153 = vector.load %arg4[%c5_78, %c0_79, %c0_80] : memref<9x12x12xbf16, #tpu.memory_space<vmem>>, vector<1x12x12xbf16>
    %154 = vector.shape_cast %153 : vector<1x12x12xbf16> to vector<12x12xbf16>
    %155 = arith.truncf %152 : vector<12x1024xf32> to vector<12x1024xbf16>
    %cst_81 = arith.constant dense<0.000000e+00> : vector<12x1024xf32>
    %156 = tpu.matmul %154, %155, %cst_81 {dimension_numbers = #tpu.dot_dimension_numbers<[1], [0], [0], [1], [0, 0, 1, 1], [], []>} : vector<12x12xbf16>, vector<12x1024xbf16>, vector<12x1024xf32> -> vector<12x1024xf32>
    %157 = arith.addf %146, %156 : vector<12x1024xf32>
    %158 = vector.extract_strided_slice %98 {offsets = [0, 15], sizes = [12, 1009], strides = [1, 1]} : vector<12x1024xf32> to vector<12x1009xf32>
    %159 = vector.extract_strided_slice %98 {offsets = [0, 0], sizes = [12, 15], strides = [1, 1]} : vector<12x1024xf32> to vector<12x15xf32>
    %160 = tpu.concatenate %158, %159 in 1 : vector<12x1009xf32>, vector<12x15xf32> -> vector<12x1024xf32>
    %c6_82 = arith.constant 6 : index
    %c0_83 = arith.constant 0 : index
    %161 = vector.load %arg6[%c6_82, %c0_83] : memref<9x1024xf32, #tpu.memory_space<vmem>>, vector<1x1024xf32>
    %162 = vector.broadcast %161 : vector<1x1024xf32> to vector<12x1024xf32>
    %163 = arith.mulf %160, %162 : vector<12x1024xf32>
    %c6_84 = arith.constant 6 : index
    %c0_85 = arith.constant 0 : index
    %c0_86 = arith.constant 0 : index
    %164 = vector.load %arg4[%c6_84, %c0_85, %c0_86] : memref<9x12x12xbf16, #tpu.memory_space<vmem>>, vector<1x12x12xbf16>
    %165 = vector.shape_cast %164 : vector<1x12x12xbf16> to vector<12x12xbf16>
    %166 = arith.truncf %163 : vector<12x1024xf32> to vector<12x1024xbf16>
    %cst_87 = arith.constant dense<0.000000e+00> : vector<12x1024xf32>
    %167 = tpu.matmul %165, %166, %cst_87 {dimension_numbers = #tpu.dot_dimension_numbers<[1], [0], [0], [1], [0, 0, 1, 1], [], []>} : vector<12x12xbf16>, vector<12x1024xbf16>, vector<12x1024xf32> -> vector<12x1024xf32>
    %168 = arith.addf %157, %167 : vector<12x1024xf32>
    %169 = vector.extract_strided_slice %98 {offsets = [0, 16], sizes = [12, 1008], strides = [1, 1]} : vector<12x1024xf32> to vector<12x1008xf32>
    %170 = vector.extract_strided_slice %98 {offsets = [0, 0], sizes = [12, 16], strides = [1, 1]} : vector<12x1024xf32> to vector<12x16xf32>
    %171 = tpu.concatenate %169, %170 in 1 : vector<12x1008xf32>, vector<12x16xf32> -> vector<12x1024xf32>
    %c7_88 = arith.constant 7 : index
    %c0_89 = arith.constant 0 : index
    %172 = vector.load %arg6[%c7_88, %c0_89] : memref<9x1024xf32, #tpu.memory_space<vmem>>, vector<1x1024xf32>
    %173 = vector.broadcast %172 : vector<1x1024xf32> to vector<12x1024xf32>
    %174 = arith.mulf %171, %173 : vector<12x1024xf32>
    %c7_90 = arith.constant 7 : index
    %c0_91 = arith.constant 0 : index
    %c0_92 = arith.constant 0 : index
    %175 = vector.load %arg4[%c7_90, %c0_91, %c0_92] : memref<9x12x12xbf16, #tpu.memory_space<vmem>>, vector<1x12x12xbf16>
    %176 = vector.shape_cast %175 : vector<1x12x12xbf16> to vector<12x12xbf16>
    %177 = arith.truncf %174 : vector<12x1024xf32> to vector<12x1024xbf16>
    %cst_93 = arith.constant dense<0.000000e+00> : vector<12x1024xf32>
    %178 = tpu.matmul %176, %177, %cst_93 {dimension_numbers = #tpu.dot_dimension_numbers<[1], [0], [0], [1], [0, 0, 1, 1], [], []>} : vector<12x12xbf16>, vector<12x1024xbf16>, vector<12x1024xf32> -> vector<12x1024xf32>
    %179 = arith.addf %168, %178 : vector<12x1024xf32>
    %180 = vector.extract_strided_slice %98 {offsets = [0, 17], sizes = [12, 1007], strides = [1, 1]} : vector<12x1024xf32> to vector<12x1007xf32>
    %181 = vector.extract_strided_slice %98 {offsets = [0, 0], sizes = [12, 17], strides = [1, 1]} : vector<12x1024xf32> to vector<12x17xf32>
    %182 = tpu.concatenate %180, %181 in 1 : vector<12x1007xf32>, vector<12x17xf32> -> vector<12x1024xf32>
    %c8_94 = arith.constant 8 : index
    %c0_95 = arith.constant 0 : index
    %183 = vector.load %arg6[%c8_94, %c0_95] : memref<9x1024xf32, #tpu.memory_space<vmem>>, vector<1x1024xf32>
    %184 = vector.broadcast %183 : vector<1x1024xf32> to vector<12x1024xf32>
    %185 = arith.mulf %182, %184 : vector<12x1024xf32>
    %c8_96 = arith.constant 8 : index
    %c0_97 = arith.constant 0 : index
    %c0_98 = arith.constant 0 : index
    %186 = vector.load %arg4[%c8_96, %c0_97, %c0_98] : memref<9x12x12xbf16, #tpu.memory_space<vmem>>, vector<1x12x12xbf16>
    %187 = vector.shape_cast %186 : vector<1x12x12xbf16> to vector<12x12xbf16>
    %188 = arith.truncf %185 : vector<12x1024xf32> to vector<12x1024xbf16>
    %cst_99 = arith.constant dense<0.000000e+00> : vector<12x1024xf32>
    %189 = tpu.matmul %187, %188, %cst_99 {dimension_numbers = #tpu.dot_dimension_numbers<[1], [0], [0], [1], [0, 0, 1, 1], [], []>} : vector<12x12xbf16>, vector<12x1024xbf16>, vector<12x1024xf32> -> vector<12x1024xf32>
    %190 = arith.addf %179, %189 : vector<12x1024xf32>
    %c0_100 = arith.constant 0 : index
    %c0_101 = arith.constant 0 : index
    %191 = vector.load %arg5[%c0_100, %c0_101] : memref<12x1xf32, #tpu.memory_space<vmem>>, vector<12x1xf32>
    %192 = vector.broadcast %191 : vector<12x1xf32> to vector<12x1024xf32>
    %193 = arith.addf %190, %192 : vector<12x1024xf32>
    %cst_102 = arith.constant 0.000000e+00 : f32
    %194 = vector.broadcast %cst_102 : f32 to vector<12x1024xf32>
    %195 = arith.maximumf %193, %194 : vector<12x1024xf32>
    %c0_103 = arith.constant 0 : index
    %c0_104 = arith.constant 0 : index
    %196 = vector.load %arg7[%c0_103, %c0_104] : memref<4x1024xf32, #tpu.memory_space<vmem>>, vector<4x1024xf32>
    %197 = vector.extract_strided_slice %195 {offsets = [0, 0], sizes = [4, 1024], strides = [1, 1]} : vector<12x1024xf32> to vector<4x1024xf32>
    %198 = vector.extract_strided_slice %195 {offsets = [4, 0], sizes = [4, 1024], strides = [1, 1]} : vector<12x1024xf32> to vector<4x1024xf32>
    %199 = vector.extract_strided_slice %195 {offsets = [8, 0], sizes = [4, 1024], strides = [1, 1]} : vector<12x1024xf32> to vector<4x1024xf32>
    %200 = arith.mulf %197, %198 : vector<4x1024xf32>
    %cst_105 = arith.constant dense<0.000000e+00> : vector<4x4xf32>
    %201 = tpu.matmul %200, %196, %cst_105 {dimension_numbers = #tpu.dot_dimension_numbers<[1], [1], [0], [0], [0, 0, 1, 0], [], []>} : vector<4x1024xf32>, vector<4x1024xf32>, vector<4x4xf32> -> vector<4x4xf32>
    %cst_106 = arith.constant dense<0.000000e+00> : vector<4xf32>
    %202 = vector.multi_reduction <add>, %201, %cst_106 [0] : vector<4x4xf32> to vector<4xf32>
    %203 = vector.shape_cast %202 : vector<4xf32> to vector<1x4xf32>
    %c256_i32 = arith.constant 256 : i32
    %204 = tpu.dynamic_rotate %198 by %c256_i32 dim 1 : vector<4x1024xf32>, i32 -> vector<4x1024xf32>
    %205 = arith.mulf %197, %204 : vector<4x1024xf32>
    %cst_107 = arith.constant dense<0.000000e+00> : vector<4x4xf32>
    %206 = tpu.matmul %205, %196, %cst_107 {dimension_numbers = #tpu.dot_dimension_numbers<[1], [1], [0], [0], [0, 0, 1, 0], [], []>} : vector<4x1024xf32>, vector<4x1024xf32>, vector<4x4xf32> -> vector<4x4xf32>
    %cst_108 = arith.constant dense<0.000000e+00> : vector<4xf32>
    %207 = vector.multi_reduction <add>, %206, %cst_108 [0] : vector<4x4xf32> to vector<4xf32>
    %208 = vector.shape_cast %207 : vector<4xf32> to vector<1x4xf32>
    %c512_i32 = arith.constant 512 : i32
    %209 = tpu.dynamic_rotate %198 by %c512_i32 dim 1 : vector<4x1024xf32>, i32 -> vector<4x1024xf32>
    %210 = arith.mulf %197, %209 : vector<4x1024xf32>
    %cst_109 = arith.constant dense<0.000000e+00> : vector<4x4xf32>
    %211 = tpu.matmul %210, %196, %cst_109 {dimension_numbers = #tpu.dot_dimension_numbers<[1], [1], [0], [0], [0, 0, 1, 0], [], []>} : vector<4x1024xf32>, vector<4x1024xf32>, vector<4x4xf32> -> vector<4x4xf32>
    %cst_110 = arith.constant dense<0.000000e+00> : vector<4xf32>
    %212 = vector.multi_reduction <add>, %211, %cst_110 [0] : vector<4x4xf32> to vector<4xf32>
    %213 = vector.shape_cast %212 : vector<4xf32> to vector<1x4xf32>
    %c768_i32 = arith.constant 768 : i32
    %214 = tpu.dynamic_rotate %198 by %c768_i32 dim 1 : vector<4x1024xf32>, i32 -> vector<4x1024xf32>
    %215 = arith.mulf %197, %214 : vector<4x1024xf32>
    %cst_111 = arith.constant dense<0.000000e+00> : vector<4x4xf32>
    %216 = tpu.matmul %215, %196, %cst_111 {dimension_numbers = #tpu.dot_dimension_numbers<[1], [1], [0], [0], [0, 0, 1, 0], [], []>} : vector<4x1024xf32>, vector<4x1024xf32>, vector<4x4xf32> -> vector<4x4xf32>
    %cst_112 = arith.constant dense<0.000000e+00> : vector<4xf32>
    %217 = vector.multi_reduction <add>, %216, %cst_112 [0] : vector<4x4xf32> to vector<4xf32>
    %218 = vector.shape_cast %217 : vector<4xf32> to vector<1x4xf32>
    %219 = tpu.concatenate %203, %208, %213, %218 in 0 : vector<1x4xf32>, vector<1x4xf32>, vector<1x4xf32>, vector<1x4xf32> -> vector<4x4xf32>
    %cst_113 = arith.constant dense<0xFF800000> : vector<4xf32>
    %220 = vector.multi_reduction <maximumf>, %219, %cst_113 [0] : vector<4x4xf32> to vector<4xf32>
    %221 = vector.shape_cast %220 : vector<4xf32> to vector<1x4xf32>
    %222 = vector.broadcast %221 : vector<1x4xf32> to vector<4x4xf32>
    %223 = arith.subf %219, %222 : vector<4x4xf32>
    %224 = math.exp %223 : vector<4x4xf32>
    %cst_114 = arith.constant dense<0.000000e+00> : vector<4xf32>
    %225 = vector.multi_reduction <add>, %224, %cst_114 [0] : vector<4x4xf32> to vector<4xf32>
    %226 = vector.shape_cast %225 : vector<4xf32> to vector<1x4xf32>
    %227 = vector.broadcast %226 : vector<1x4xf32> to vector<4x4xf32>
    %228 = arith.divf %224, %227 : vector<4x4xf32>
    %cst_115 = arith.constant dense<0.000000e+00> : vector<4x1024xf32>
    %229 = tpu.matmul %228, %196, %cst_115 {dimension_numbers = #tpu.dot_dimension_numbers<[1], [0], [0], [1], [0, 0, 1, 1], [], []>} : vector<4x4xf32>, vector<4x1024xf32>, vector<4x1024xf32> -> vector<4x1024xf32>
    %c0_116 = arith.constant 0 : index
    %c0_117 = arith.constant 0 : index
    %c0_118 = arith.constant 0 : index
    %230 = vector.load %arg1[%c0_116, %c0_117, %c0_118] : memref<1x4x1024xf32, #tpu.memory_space<vmem>>, vector<1x4x1024xf32>
    %231 = vector.shape_cast %230 : vector<1x4x1024xf32> to vector<4x1024xf32>
    %232 = vector.extract_strided_slice %229 {offsets = [0, 0], sizes = [1, 1024], strides = [1, 1]} : vector<4x1024xf32> to vector<1x1024xf32>
    %233 = vector.broadcast %232 : vector<1x1024xf32> to vector<4x1024xf32>
    %234 = arith.mulf %233, %199 : vector<4x1024xf32>
    %235 = arith.addf %231, %234 : vector<4x1024xf32>
    %c256_i32_119 = arith.constant 256 : i32
    %236 = tpu.dynamic_rotate %199 by %c256_i32_119 dim 1 : vector<4x1024xf32>, i32 -> vector<4x1024xf32>
    %237 = vector.extract_strided_slice %229 {offsets = [1, 0], sizes = [1, 1024], strides = [1, 1]} : vector<4x1024xf32> to vector<1x1024xf32>
    %238 = vector.broadcast %237 : vector<1x1024xf32> to vector<4x1024xf32>
    %239 = arith.mulf %238, %236 : vector<4x1024xf32>
    %240 = arith.addf %235, %239 : vector<4x1024xf32>
    %c512_i32_120 = arith.constant 512 : i32
    %241 = tpu.dynamic_rotate %199 by %c512_i32_120 dim 1 : vector<4x1024xf32>, i32 -> vector<4x1024xf32>
    %242 = vector.extract_strided_slice %229 {offsets = [2, 0], sizes = [1, 1024], strides = [1, 1]} : vector<4x1024xf32> to vector<1x1024xf32>
    %243 = vector.broadcast %242 : vector<1x1024xf32> to vector<4x1024xf32>
    %244 = arith.mulf %243, %241 : vector<4x1024xf32>
    %245 = arith.addf %240, %244 : vector<4x1024xf32>
    %c768_i32_121 = arith.constant 768 : i32
    %246 = tpu.dynamic_rotate %199 by %c768_i32_121 dim 1 : vector<4x1024xf32>, i32 -> vector<4x1024xf32>
    %247 = vector.extract_strided_slice %229 {offsets = [3, 0], sizes = [1, 1024], strides = [1, 1]} : vector<4x1024xf32> to vector<1x1024xf32>
    %248 = vector.broadcast %247 : vector<1x1024xf32> to vector<4x1024xf32>
    %249 = arith.mulf %248, %246 : vector<4x1024xf32>
    %250 = arith.addf %245, %249 : vector<4x1024xf32>
    %c0_122 = arith.constant 0 : index
    %c0_123 = arith.constant 0 : index
    %c0_124 = arith.constant 0 : index
    %251 = vector.load %arg8[%c0_122, %c0_123, %c0_124] : memref<1x4x1024xf32, #tpu.memory_space<vmem>>, vector<1x4x1024xf32>
    %252 = vector.shape_cast %251 : vector<1x4x1024xf32> to vector<4x1024xf32>
    %253 = vector.shape_cast %250 : vector<4x1024xf32> to vector<1x4x1024xf32>
    tpu.vector_store %arg8[%c0_122, %c0_123, %c0_124], %253 {strides = array<i32>} : memref<1x4x1024xf32, #tpu.memory_space<vmem>>, vector<1x4x1024xf32>,
    return
  }
  func.func @transform_0(%arg0: i32) -> (i32, i32, i32) {
    %c0_i32 = arith.constant 0 : i32
    %c0_i32_0 = arith.constant 0 : i32
    %c0_i32_1 = arith.constant 0 : i32
    return %arg0, %c0_i32, %c0_i32_0 : i32, i32, i32
  }
  func.func @transform_1(%arg0: i32) -> (i32, i32, i32) {
    %c0_i32 = arith.constant 0 : i32
    %c0_i32_0 = arith.constant 0 : i32
    %c0_i32_1 = arith.constant 0 : i32
    %c0_i32_2 = arith.constant 0 : i32
    return %c0_i32, %c0_i32_0, %c0_i32_1 : i32, i32, i32
  }
  func.func @transform_2(%arg0: i32) -> (i32, i32) {
    %c0_i32 = arith.constant 0 : i32
    %c0_i32_0 = arith.constant 0 : i32
    %c0_i32_1 = arith.constant 0 : i32
    return %c0_i32, %c0_i32_0 : i32, i32
  }
  func.func @transform_3(%arg0: i32) -> (i32, i32, i32) {
    %c0_i32 = arith.constant 0 : i32
    %c0_i32_0 = arith.constant 0 : i32
    %c0_i32_1 = arith.constant 0 : i32
    %c0_i32_2 = arith.constant 0 : i32
    return %c0_i32, %c0_i32_0, %c0_i32_1 : i32, i32, i32
  }
  func.func @transform_4(%arg0: i32) -> (i32, i32) {
    %c0_i32 = arith.constant 0 : i32
    %c0_i32_0 = arith.constant 0 : i32
    %c0_i32_1 = arith.constant 0 : i32
    return %c0_i32, %c0_i32_0 : i32, i32
  }
  func.func @transform_5(%arg0: i32) -> (i32, i32) {
    %c0_i32 = arith.constant 0 : i32
    %c0_i32_0 = arith.constant 0 : i32
    %c0_i32_1 = arith.constant 0 : i32
    return %c0_i32, %c0_i32_0 : i32, i32
  }
  func.func @transform_6(%arg0: i32) -> (i32, i32) {
    %c0_i32 = arith.constant 0 : i32
    %c0_i32_0 = arith.constant 0 : i32
    %c0_i32_1 = arith.constant 0 : i32
    return %c0_i32, %c0_i32_0 : i32, i32
  }
  func.func @transform_7(%arg0: i32) -> (i32, i32, i32) {
    %c0_i32 = arith.constant 0 : i32
    %c0_i32_0 = arith.constant 0 : i32
    %c0_i32_1 = arith.constant 0 : i32
    return %arg0, %c0_i32, %c0_i32_0 : i32, i32, i32
  }
}

</mosaic_0001>

<llo_original>
// kernel: multi_frame_attention.1
$region0: #{multi_frame_attention.1}
  #allocation0 [shape = 'u32[]', space=smem, size = 0x4, offset = 0x4, fixed_abs, tag = 'smem constant byte address 0x4 - core index']
  #allocation1 [shape = 'u32[72,128]{1,0:T(1,128)}', space=vmem, size = 0x9000, scoped, tag = 'internal scratch']
  %s0 = inlined_call_operand.vmem [shape: f32[2,4,1024], index: 0, kind: input, shape index: {}]
  %s1 = inlined_call_operand.vmem [shape: bf16[9,12,4], index: 1, kind: input, shape index: {}]
  %s2 = inlined_call_operand.vmem [shape: f32[12,1], index: 2, kind: input, shape index: {}]
  %s3 = inlined_call_operand.vmem [shape: bf16[9,12,12], index: 3, kind: input, shape index: {}]
  %s4 = inlined_call_operand.vmem [shape: f32[12,1], index: 4, kind: input, shape index: {}]
  %s5 = inlined_call_operand.vmem [shape: f32[9,1024], index: 5, kind: input, shape index: {}]
  %s6 = inlined_call_operand.vmem [shape: f32[4,1024], index: 6, kind: input, shape index: {}]
  %s7 = inlined_call_operand.vmem [shape: f32[2,4,1024], index: 7, kind: output, shape index: {}]
  %s8 = sld [smem:[#allocation0]]
  $region61: #{multi_frame_attention.1} parent=0
    _
  %s10 = ssub.s32 1, %s8
  %s11 = scalar_select 0, %s10, %s8
  loop: start=0, step=1, limit=4
  $region2: #{multi_frame_attention.1} parent=0 // loop_pre_header
    _
  $region3: #{multi_frame_attention.1} parent=0 // loop_header
    %s13 = sphi 0, %s17
    %p14 = scmp.ge.s32.totalorder %s13, 4
    %s23 = sphi 0, %s25
    %s26 = sphi 0, %s23
    %s27 = sphi 0, %s26
    %s43 = sphi 0, %s27
    %s47 = sphi 0, %s47
    %s49 = sphi 0, %s47
    %s50 = sphi 0, %s49
    %s64 = sphi 0, %s50
    %s68 = sphi 0, %s68
    %s70 = sphi 0, %s68
    %s71 = sphi 0, %s70
    %s85 = sphi 0, %s71
    %s89 = sphi 0, %s89
    %s91 = sphi 0, %s89
    %s92 = sphi 0, %s91
    %s106 = sphi 0, %s92
    %s110 = sphi 0, %s110
    %s112 = sphi 0, %s110
    %s113 = sphi 0, %s112
    %s127 = sphi 0, %s113
    %s131 = sphi 0, %s131
    %s133 = sphi 0, %s131
    %s134 = sphi 0, %s133
    %s148 = sphi 0, %s134
    %s152 = sphi 0, %s152
    %s154 = sphi 0, %s152
    %s155 = sphi 0, %s154
    %s169 = sphi 0, %s155
    %s175 = sphi 0, %s177
    %s178 = sphi 0, %s175
    %s179 = sphi 0, %s178
    %s195 = sphi 0, %s179
  $region4: #{multi_frame_attention.1} parent=0 // loop_header_branch
    %16 = sbr.rel (%p14) target = $region8
  $region5: #{multi_frame_attention.1} parent=0 // loop_body
    %s18 = ssub.s32 %s13, 1
    %s19 = ssub.s32 %s13, 2
    %s20 = sadd.s32 %s13, 1
    %s21 = ssub.s32 %s13, %s20
    %p22 = scmp.eq.s32.totalorder %s21, 0
    %s24 = sadd.s32 %s23, 1
    %s25 = scalar_select %p22, %s23, %s24
    %p28 = pneg %p22
    %p29 = scmp.eq.s32.totalorder %s13, 1
    %p30 = por %p28, %p29
    %p31 = scmp.ne.s32.totalorder %s23, %s26
    %p32 = scmp.eq.s32.totalorder %s13, 0
    %p33 = por %p31, %p32
    %p34 = scmp.ne.s32.totalorder %s23, %s26
    %p35 = scmp.eq.s32.totalorder %s18, 1
    %p36 = por %p34, %p35
    %p37 = scmp.ne.s32.totalorder %s26, %s27
    %p38 = scmp.eq.s32.totalorder %s18, 0
    %p39 = por %p37, %p38
    %p40 = scmp.ne.s32.totalorder %s26, %s27
    %p41 = scmp.eq.s32.totalorder %s19, 1
    %p42 = por %p40, %p41
    %p44 = scmp.ne.s32.totalorder %s27, %s43
    %p45 = scmp.eq.s32.totalorder %s19, 0
    %p46 = por %p44, %p45
    %s48 = sadd.s32 %s47, 1
    %p51 = scmp.eq.s32.totalorder %s13, 1
    %p52 = scmp.ne.s32.totalorder %s47, %s49
    %p53 = scmp.eq.s32.totalorder %s13, 0
    %p54 = por %p52, %p53
    %p55 = scmp.ne.s32.totalorder %s47, %s49
    %p56 = scmp.eq.s32.totalorder %s18, 1
    %p57 = por %p55, %p56
    %p58 = scmp.ne.s32.totalorder %s49, %s50
    %p59 = scmp.eq.s32.totalorder %s18, 0
    %p60 = por %p58, %p59
    %p61 = scmp.ne.s32.totalorder %s49, %s50
    %p62 = scmp.eq.s32.totalorder %s19, 1
    %p63 = por %p61, %p62
    %p65 = scmp.ne.s32.totalorder %s50, %s64
    %p66 = scmp.eq.s32.totalorder %s19, 0
    %p67 = por %p65, %p66
    %s69 = sadd.s32 %s68, 1
    %p72 = scmp.eq.s32.totalorder %s13, 1
    %p73 = scmp.ne.s32.totalorder %s68, %s70
    %p74 = scmp.eq.s32.totalorder %s13, 0
    %p75 = por %p73, %p74
    %p76 = scmp.ne.s32.totalorder %s68, %s70
    %p77 = scmp.eq.s32.totalorder %s18, 1
    %p78 = por %p76, %p77
    %p79 = scmp.ne.s32.totalorder %s70, %s71
    %p80 = scmp.eq.s32.totalorder %s18, 0
    %p81 = por %p79, %p80
    %p82 = scmp.ne.s32.totalorder %s70, %s71
    %p83 = scmp.eq.s32.totalorder %s19, 1
    %p84 = por %p82, %p83
    %p86 = scmp.ne.s32.totalorder %s71, %s85
    %p87 = scmp.eq.s32.totalorder %s19, 0
    %p88 = por %p86, %p87
    %s90 = sadd.s32 %s89, 1
    %p93 = scmp.eq.s32.totalorder %s13, 1
    %p94 = scmp.ne.s32.totalorder %s89, %s91
    %p95 = scmp.eq.s32.totalorder %s13, 0
    %p96 = por %p94, %p95
    %p97 = scmp.ne.s32.totalorder %s89, %s91
    %p98 = scmp.eq.s32.totalorder %s18, 1
    %p99 = por %p97, %p98
    %p100 = scmp.ne.s32.totalorder %s91, %s92
    %p101 = scmp.eq.s32.totalorder %s18, 0
    %p102 = por %p100, %p101
    %p103 = scmp.ne.s32.totalorder %s91, %s92
    %p104 = scmp.eq.s32.totalorder %s19, 1
    %p105 = por %p103, %p104
    %p107 = scmp.ne.s32.totalorder %s92, %s106
    %p108 = scmp.eq.s32.totalorder %s19, 0
    %p109 = por %p107, %p108
    %s111 = sadd.s32 %s110, 1
    %p114 = scmp.eq.s32.totalorder %s13, 1
    %p115 = scmp.ne.s32.totalorder %s110, %s112
    %p116 = scmp.eq.s32.totalorder %s13, 0
    %p117 = por %p115, %p116
    %p118 = scmp.ne.s32.totalorder %s110, %s112
    %p119 = scmp.eq.s32.totalorder %s18, 1
    %p120 = por %p118, %p119
    %p121 = scmp.ne.s32.totalorder %s112, %s113
    %p122 = scmp.eq.s32.totalorder %s18, 0
    %p123 = por %p121, %p122
    %p124 = scmp.ne.s32.totalorder %s112, %s113
    %p125 = scmp.eq.s32.totalorder %s19, 1
    %p126 = por %p124, %p125
    %p128 = scmp.ne.s32.totalorder %s113, %s127
    %p129 = scmp.eq.s32.totalorder %s19, 0
    %p130 = por %p128, %p129
    %s132 = sadd.s32 %s131, 1
    %p135 = scmp.eq.s32.totalorder %s13, 1
    %p136 = scmp.ne.s32.totalorder %s131, %s133
    %p137 = scmp.eq.s32.totalorder %s13, 0
    %p138 = por %p136, %p137
    %p139 = scmp.ne.s32.totalorder %s131, %s133
    %p140 = scmp.eq.s32.totalorder %s18, 1
    %p141 = por %p139, %p140
    %p142 = scmp.ne.s32.totalorder %s133, %s134
    %p143 = scmp.eq.s32.totalorder %s18, 0
    %p144 = por %p142, %p143
    %p145 = scmp.ne.s32.totalorder %s133, %s134
    %p146 = scmp.eq.s32.totalorder %s19, 1
    %p147 = por %p145, %p146
    %p149 = scmp.ne.s32.totalorder %s134, %s148
    %p150 = scmp.eq.s32.totalorder %s19, 0
    %p151 = por %p149, %p150
    %s153 = sadd.s32 %s152, 1
    %p156 = scmp.eq.s32.totalorder %s13, 1
    %p157 = scmp.ne.s32.totalorder %s152, %s154
    %p158 = scmp.eq.s32.totalorder %s13, 0
    %p159 = por %p157, %p158
    %p160 = scmp.ne.s32.totalorder %s152, %s154
    %p161 = scmp.eq.s32.totalorder %s18, 1
    %p162 = por %p160, %p161
    %p163 = scmp.ne.s32.totalorder %s154, %s155
    %p164 = scmp.eq.s32.totalorder %s18, 0
    %p165 = por %p163, %p164
    %p166 = scmp.ne.s32.totalorder %s154, %s155
    %p167 = scmp.eq.s32.totalorder %s19, 1
    %p168 = por %p166, %p167
    %p170 = scmp.ne.s32.totalorder %s155, %s169
    %p171 = scmp.eq.s32.totalorder %s19, 0
    %p172 = por %p170, %p171
    %s173 = ssub.s32 %s13, %s20
    %p174 = scmp.eq.s32.totalorder %s173, 0
    %s176 = sadd.s32 %s175, 1
    %s177 = scalar_select %p174, %s175, %s176
    %p180 = pneg %p174
    %p181 = scmp.eq.s32.totalorder %s13, 1
    %p182 = por %p180, %p181
    %p183 = scmp.ne.s32.totalorder %s175, %s178
    %p184 = scmp.eq.s32.totalorder %s13, 0
    %p185 = por %p183, %p184
    %p186 = scmp.ne.s32.totalorder %s175, %s178
    %p187 = scmp.eq.s32.totalorder %s18, 1
    %p188 = por %p186, %p187
    %p189 = scmp.ne.s32.totalorder %s178, %s179
    %p190 = scmp.eq.s32.totalorder %s18, 0
    %p191 = por %p189, %p190
    %p192 = scmp.ne.s32.totalorder %s178, %s179
    %p193 = scmp.eq.s32.totalorder %s19, 1
    %p194 = por %p192, %p193
    %p196 = scmp.ne.s32.totalorder %s179, %s195
    %p197 = scmp.eq.s32.totalorder %s19, 0
    %p198 = por %p196, %p197
    %p199 = scmp.le.s32.totalorder 1, %s13
    %p200 = scmp.lt.s32.totalorder %s13, 3
    %p201 = pnand %p199, %p200
    %p202 = pneg %p201
    // Predicated region
    $region9: #{multi_frame_attention.1} parent=5 // pred_check
      _
    $region10: #{multi_frame_attention.1} parent=5 // pred_check_branch
      %204 = sbr.rel (%p201) target = $region12
    $region11: #{multi_frame_attention.1} parent=5 // pred_region
      %s205 = ssub.s32 %s13, 1
      // Predicated region
      $region13: #{multi_frame_attention.1} parent=11 // pred_check
        %p206 = pneg %p60
      $region14: #{multi_frame_attention.1} parent=11 // pred_check_branch
        %208 = sbr.rel (%p206) target = $region16
      $region15: #{multi_frame_attention.1} parent=11 // pred_region
        _
      $region16: #{multi_frame_attention.1} parent=11 // pred_fallthru
        _
      // Predicated region
      $region17: #{multi_frame_attention.1} parent=11 // pred_check
        %p209 = pneg %p81
      $region18: #{multi_frame_attention.1} parent=11 // pred_check_branch
        %211 = sbr.rel (%p209) target = $region20
      $region19: #{multi_frame_attention.1} parent=11 // pred_region
        _
      $region20: #{multi_frame_attention.1} parent=11 // pred_fallthru
        _
      // Predicated region
      $region21: #{multi_frame_attention.1} parent=11 // pred_check
        %p212 = pneg %p102
      $region22: #{multi_frame_attention.1} parent=11 // pred_check_branch
        %214 = sbr.rel (%p212) target = $region24
      $region23: #{multi_frame_attention.1} parent=11 // pred_region
        _
      $region24: #{multi_frame_attention.1} parent=11 // pred_fallthru
        _
      // Predicated region
      $region25: #{multi_frame_attention.1} parent=11 // pred_check
        %p215 = pneg %p123
      $region26: #{multi_frame_attention.1} parent=11 // pred_check_branch
        %217 = sbr.rel (%p215) target = $region28
      $region27: #{multi_frame_attention.1} parent=11 // pred_region
        _
      $region28: #{multi_frame_attention.1} parent=11 // pred_fallthru
        _
      // Predicated region
      $region29: #{multi_frame_attention.1} parent=11 // pred_check
        %p218 = pneg %p144
      $region30: #{multi_frame_attention.1} parent=11 // pred_check_branch
        %220 = sbr.rel (%p218) target = $region32
      $region31: #{multi_frame_attention.1} parent=11 // pred_region
        _
      $region32: #{multi_frame_attention.1} parent=11 // pred_fallthru
        _
      // Predicated region
      $region33: #{multi_frame_attention.1} parent=11 // pred_check
        %p221 = pneg %p165
      $region34: #{multi_frame_attention.1} parent=11 // pred_check_branch
        %223 = sbr.rel (%p221) target = $region36
      $region35: #{multi_frame_attention.1} parent=11 // pred_region
        _
      $region36: #{multi_frame_attention.1} parent=11 // pred_fallthru
        _
    $region12: #{multi_frame_attention.1} parent=5 // pred_fallthru
      _
    %p224 = scmp.lt.s32.totalorder %s13, 2
    // Predicated region
    $region37: #{multi_frame_attention.1} parent=5 // pred_check
      %p225 = pneg %p224
    $region38: #{multi_frame_attention.1} parent=5 // pred_check_branch
      %227 = sbr.rel (%p225) target = $region40
    $region39: #{multi_frame_attention.1} parent=5 // pred_region
      // Predicated region
      $region41: #{multi_frame_attention.1} parent=39 // pred_check
        %p228 = pneg %p33
      $region42: #{multi_frame_attention.1} parent=39 // pred_check_branch
        %230 = sbr.rel (%p228) target = $region44
      $region43: #{multi_frame_attention.1} parent=39 // pred_region
        %p231 = scmp.lt.s32.totalorder %s13, 1
        %s232 = scalar_select %p231, %s13, 1
        %s233 = smul.addr %s232, 8
        %s234 = smul.addr %s233, 4
        %s235 = scalar_lea.vmem %s0, %s234
      $region44: #{multi_frame_attention.1} parent=39 // pred_fallthru
        _
    $region40: #{multi_frame_attention.1} parent=5 // pred_fallthru
      _
    %p236 = scmp.le.s32.totalorder 1, %s13
    %p237 = scmp.lt.s32.totalorder %s13, 3
    %p238 = pnand %p236, %p237
    %p239 = pneg %p238
    // Predicated region
    $region45: #{multi_frame_attention.1} parent=5 // pred_check
      _
    $region46: #{multi_frame_attention.1} parent=5 // pred_check_branch
      %241 = sbr.rel (%p238) target = $region48
    $region47: #{multi_frame_attention.1} parent=5 // pred_region
      %s242 = ssub.s32 %s13, 1
      %p243 = scmp.lt.s32.totalorder %s18, 1
      %s244 = scalar_select %p243, %s18, 1
      %s245 = smul.addr %s244, 8
      %s246 = smul.addr %s245, 4
      %s247 = scalar_lea.vmem %s0, %s246
      %p248 = pneg %p39
      %p249 = pneg %p36
      %p250 = pneg %p60
      %p251 = pneg %p57
      %p252 = pneg %p81
      %p253 = pneg %p78
      %p254 = pneg %p102
      %p255 = pneg %p99
      %p256 = pneg %p123
      %p257 = pneg %p120
      %p258 = pneg %p144
      %p259 = pneg %p141
      %p260 = pneg %p165
      %p261 = pneg %p162
      %p262 = pneg %p191
      %p263 = pneg %p188
      %p264 = scmp.lt.s32.totalorder %s18, 1
      %s265 = scalar_select %p264, %s18, 1
      %s266 = smul.addr %s265, 8
      %s267 = smul.addr %s266, 4
      %s268 = scalar_lea.vmem %s7, %s267
      %p269 = scmp.lt.s32.totalorder %s18, 1
      %s270 = scalar_select %p269, %s18, 1
      %s271 = smul.addr %s270, 8
      %s272 = smul.addr %s271, 4
      %s273 = scalar_lea.vmem %s0, %s272
      %p274 = scmp.lt.s32.totalorder %s18, 1
      %s275 = scalar_select %p274, %s18, 1
      %s276 = smul.addr %s275, 8
      %s277 = smul.addr %s276, 4
      %s278 = scalar_lea.vmem %s7, %s277
      %v280 = vld [vmem:[%s273] sm:$0xff]
      %v281 = vld [vmem:[%s273 + $0x8] sm:$0xff]
      %v282 = vld [vmem:[%s273 + $0x10] sm:$0xff]
      %v283 = vld [vmem:[%s273 + $0x18] sm:$0xff]
      %285 = vst [vmem:[#allocation1] ss:$2 sm:$0xff] %v283
      %v286 = vld.sshfl [vmem:[#allocation1 + $0x8] sm:$0xff pattern:$0x75316420]
      %287 = vrot.lane.b32.xlu0 %v286, 17
      %v288 = vpop.permute.xlu0 %287
      %293 = vst [vmem:[#allocation1] ss:$2 sm:$0xff] %v280
      %s294 = scalar_lea.vmem [#allocation1], 16
      %295 = vst [vmem:[%s294] ss:$2 sm:$0xff] %v281
      %s296 = scalar_lea.vmem [#allocation1], 32
      %297 = vst [vmem:[%s296] ss:$2 sm:$0xff] %v282
      %s298 = scalar_lea.vmem [#allocation1], 48
      %299 = vst [vmem:[%s298] ss:$2 sm:$0xff] %v283
      %v300 = vld.sshfl [vmem:[#allocation1] sm:$0xff pattern:$0x75316420]
      %v301 = vld.sshfl [vmem:[#allocation1 + $0x8] sm:$0xff pattern:$0x75316420]
      %v302 = vld.sshfl [vmem:[#allocation1 + $0x10] sm:$0xff pattern:$0x75316420]
      %v303 = vld.sshfl [vmem:[#allocation1 + $0x18] sm:$0xff pattern:$0x75316420]
      %v304 = vld.sshfl [vmem:[#allocation1 + $0x20] sm:$0xff pattern:$0x75316420]
      %v305 = vld.sshfl [vmem:[#allocation1 + $0x28] sm:$0xff pattern:$0x75316420]
      %v306 = vld.sshfl [vmem:[#allocation1 + $0x30] sm:$0xff pattern:$0x75316420]
      %v307 = vld.sshfl [vmem:[#allocation1 + $0x38] sm:$0xff pattern:$0x75316420]
      %308 = vrot.lane.b32.xlu0 %v300, 17
      %v309 = vpop.permute.xlu0 %308
      %310 = vrot.lane.b32.xlu0 %v301, 17
      %v311 = vpop.permute.xlu0 %310
      %312 = vrot.lane.b32.xlu0 %v302, 17
      %v313 = vpop.permute.xlu0 %312
      %314 = vrot.lane.b32.xlu0 %v303, 17
      %v315 = vpop.permute.xlu0 %314
      %316 = vrot.lane.b32.xlu0 %v304, 17
      %v317 = vpop.permute.xlu0 %316
      %318 = vrot.lane.b32.xlu0 %v305, 17
      %v319 = vpop.permute.xlu0 %318
      %320 = vrot.lane.b32.xlu0 %v306, 17
      %v321 = vpop.permute.xlu0 %320
      %322 = vrot.lane.b32.xlu0 %v307, 17
      %v323 = vpop.permute.xlu0 %322
      %vm324 = vcmask 138240
      %v325 = vsel %vm324, %v309, %v311
      %v326 = vsel %vm324, %v311, %v313
      %v327 = vsel %vm324, %v313, %v315
      %v328 = vsel %vm324, %v315, %v317
      %v329 = vsel %vm324, %v317, %v319
      %v330 = vsel %vm324, %v319, %v321
      %v331 = vsel %vm324, %v321, %v323
      %v340 = vsel %vm324, %v288, %v309
      %v341 = vld [vmem:[%s5] ss:$8 sm:$0xf]
      %v342 = vld [vmem:[%s5] ss:$8 sm:$0xf0]
      %v343 = vor.u32 %v341, %v342
      %v345 = vperm.slane %v343, 0
      %v346 = vperm.slane %v343, 1
      %v347 = vperm.slane %v343, 2
      %v348 = vperm.slane %v343, 3
      %v349 = vperm.slane %v343, 4
      %v350 = vperm.slane %v343, 5
      %v351 = vperm.slane %v343, 6
      %v352 = vperm.slane %v343, 7
      %v361 = vmul.f32 %v340, %v345
      %v362 = vmul.f32 %v325, %v346
      %v363 = vmul.f32 %v326, %v347
      %v364 = vmul.f32 %v327, %v348
      %v365 = vmul.f32 %v328, %v349
      %v366 = vmul.f32 %v329, %v350
      %v367 = vmul.f32 %v330, %v351
      %v368 = vmul.f32 %v331, %v352
      %v369 = vld [vmem:[%s1] sm:$0xf]
      %v370 = vld [vmem:[%s1 + $0x4] sm:$0x3]
      %v371 = vpack.c.bf16 %v361, %v361
      %v372 = vpack.c.bf16 %v362, %v362
      %v373 = vpack.c.bf16 %v363, %v363
      %v374 = vpack.c.bf16 %v364, %v364
      %v375 = vpack.c.bf16 %v365, %v365
      %v376 = vpack.c.bf16 %v366, %v366
      %v377 = vpack.c.bf16 %v367, %v367
      %v378 = vpack.c.bf16 %v368, %v368
      %379 = vst [vmem:[#allocation1] ss:$2 sm:$0xff] %v283
      %v380 = vld.sshfl [vmem:[#allocation1 + $0x8] sm:$0xff pattern:$0x75316420]
      %381 = vrot.lane.b32.xlu0 %v380, 16
      %v382 = vpop.permute.xlu0 %381
      %384 = vst [vmem:[#allocation1] ss:$2 sm:$0xff] %v280
      %s385 = scalar_lea.vmem [#allocation1], 16
      %386 = vst [vmem:[%s385] ss:$2 sm:$0xff] %v281
      %s387 = scalar_lea.vmem [#allocation1], 32
      %388 = vst [vmem:[%s387] ss:$2 sm:$0xff] %v282
      %s389 = scalar_lea.vmem [#allocation1], 48
      %390 = vst [vmem:[%s389] ss:$2 sm:$0xff] %v283
      %v391 = vld.sshfl [vmem:[#allocation1] sm:$0xff pattern:$0x75316420]
      %v392 = vld.sshfl [vmem:[#allocation1 + $0x8] sm:$0xff pattern:$0x75316420]
      %v393 = vld.sshfl [vmem:[#allocation1 + $0x10] sm:$0xff pattern:$0x75316420]
      %v394 = vld.sshfl [vmem:[#allocation1 + $0x18] sm:$0xff pattern:$0x75316420]
      %v395 = vld.sshfl [vmem:[#allocation1 + $0x20] sm:$0xff pattern:$0x75316420]
      %v396 = vld.sshfl [vmem:[#allocation1 + $0x28] sm:$0xff pattern:$0x75316420]
      %v397 = vld.sshfl [vmem:[#allocation1 + $0x30] sm:$0xff pattern:$0x75316420]
      %v398 = vld.sshfl [vmem:[#allocation1 + $0x38] sm:$0xff pattern:$0x75316420]
      %399 = vrot.lane.b32.xlu0 %v391, 16
      %v400 = vpop.permute.xlu0 %399
      %401 = vrot.lane.b32.xlu0 %v392, 16
      %v402 = vpop.permute.xlu0 %401
      %403 = vrot.lane.b32.xlu0 %v393, 16
      %v404 = vpop.permute.xlu0 %403
      %405 = vrot.lane.b32.xlu0 %v394, 16
      %v406 = vpop.permute.xlu0 %405
      %407 = vrot.lane.b32.xlu0 %v395, 16
      %v408 = vpop.permute.xlu0 %407
      %409 = vrot.lane.b32.xlu0 %v396, 16
      %v410 = vpop.permute.xlu0 %409
      %411 = vrot.lane.b32.xlu0 %v397, 16
      %v412 = vpop.permute.xlu0 %411
      %413 = vrot.lane.b32.xlu0 %v398, 16
      %v414 = vpop.permute.xlu0 %413
      %vm415 = vcmask 130048
      %v416 = vsel %vm415, %v400, %v402
      %v417 = vsel %vm415, %v402, %v404
      %v418 = vsel %vm415, %v404, %v406
      %v419 = vsel %vm415, %v406, %v408
      %v420 = vsel %vm415, %v408, %v410
      %v421 = vsel %vm415, %v410, %v412
      %v422 = vsel %vm415, %v412, %v414
      %v431 = vsel %vm415, %v382, %v400
      %s432 = scalar_lea.vmem %s5, 1
      %v433 = vld [vmem:[%s432] ss:$8 sm:$0xf]
      %v434 = vld [vmem:[%s432] ss:$8 sm:$0xf0]
      %v435 = vor.u32 %v433, %v434
      %v437 = vperm.slane %v435, 0
      %v438 = vperm.slane %v435, 1
      %v439 = vperm.slane %v435, 2
      %v440 = vperm.slane %v435, 3
      %v441 = vperm.slane %v435, 4
      %v442 = vperm.slane %v435, 5
      %v443 = vperm.slane %v435, 6
      %v444 = vperm.slane %v435, 7
      %v453 = vmul.f32 %v431, %v437
      %v454 = vmul.f32 %v416, %v438
      %v455 = vmul.f32 %v417, %v439
      %v456 = vmul.f32 %v418, %v440
      %v457 = vmul.f32 %v419, %v441
      %v458 = vmul.f32 %v420, %v442
      %v459 = vmul.f32 %v421, %v443
      %v460 = vmul.f32 %v422, %v444
      %s461 = scalar_lea.vmem %s1, 8
      %v462 = vld [vmem:[%s461] sm:$0xf]
      %v463 = vld [vmem:[%s461 + $0x4] sm:$0x3]
      %v464 = vpack.c.bf16 %v453, %v453
      %v465 = vpack.c.bf16 %v454, %v454
      %v466 = vpack.c.bf16 %v455, %v455
      %v467 = vpack.c.bf16 %v456, %v456
      %v468 = vpack.c.bf16 %v457, %v457
      %v469 = vpack.c.bf16 %v458, %v458
      %v470 = vpack.c.bf16 %v459, %v459
      %v471 = vpack.c.bf16 %v460, %v460
      %v474 = vunpack.c.l.b16 %v462
      %v475 = vunpack.c.l.b16 %v463
      %v476 = vpack.c.b16 %v475, %v474
      %vm477 = vcmask 31744
      %v479 = vsel %vm477, %v476, 0
      %vm481 = vcmask 1041408
      %v483 = vsel %vm481, %v464, 0
      %v486 = vsel %vm481, %v465, 0
      %v489 = vsel %vm481, %v466, 0
      %v492 = vsel %vm481, %v467, 0
      %v495 = vsel %vm481, %v468, 0
      %v498 = vsel %vm481, %v469, 0
      %v501 = vsel %vm481, %v470, 0
      %v504 = vsel %vm481, %v471, 0
      %506 = vmatpush.bf16.msra.mxu0 0
      %507 = vmatpush.bf16.msra.mxu0 0
      %508 = vmatpush.bf16.msra.mxu0 0
      %509 = vmatpush.bf16.msra.mxu0 0
      %510 = vmatpush.bf16.msra.mxu0 0
      %511 = vmatpush.bf16.msra.mxu0 0
      %512 = vmatpush.bf16.msra.mxu0 0
      %513 = vmatpush.bf16.msra.mxu0 %v483
      %514 = vmatmul.bf16.gmra.mxu0 %v479
      %v515 = vpop.f32.mrf.mxu0
      %v516 = vadd.f32 0.0, %v515
      %v517 = vpop.f32.mrf.mxu0
      %v518 = vadd.f32 0.0, %v517
      %519 = vdwg.mxu0
      %520 = vmatpush.bf16.msra.mxu0 0
      %521 = vmatpush.bf16.msra.mxu0 0
      %522 = vmatpush.bf16.msra.mxu0 0
      %523 = vmatpush.bf16.msra.mxu0 0
      %524 = vmatpush.bf16.msra.mxu0 0
      %525 = vmatpush.bf16.msra.mxu0 0
      %526 = vmatpush.bf16.msra.mxu0 0
      %527 = vmatpush.bf16.msra.mxu0 %v486
      %528 = vmatmul.bf16.gmra.mxu0 %v479
      %v529 = vpop.f32.mrf.mxu0
      %v530 = vadd.f32 0.0, %v529
      %v531 = vpop.f32.mrf.mxu0
      %v532 = vadd.f32 0.0, %v531
      %533 = vdwg.mxu0
      %534 = vmatpush.bf16.msra.mxu0 0
      %535 = vmatpush.bf16.msra.mxu0 0
      %536 = vmatpush.bf16.msra.mxu0 0
      %537 = vmatpush.bf16.msra.mxu0 0
      %538 = vmatpush.bf16.msra.mxu0 0
      %539 = vmatpush.bf16.msra.mxu0 0
      %540 = vmatpush.bf16.msra.mxu0 0
      %541 = vmatpush.bf16.msra.mxu0 %v489
      %542 = vmatmul.bf16.gmra.mxu0 %v479
      %v543 = vpop.f32.mrf.mxu0
      %v544 = vadd.f32 0.0, %v543
      %v545 = vpop.f32.mrf.mxu0
      %v546 = vadd.f32 0.0, %v545
      %547 = vdwg.mxu0
      %548 = vmatpush.bf16.msra.mxu0 0
      %549 = vmatpush.bf16.msra.mxu0 0
      %550 = vmatpush.bf16.msra.mxu0 0
      %551 = vmatpush.bf16.msra.mxu0 0
      %552 = vmatpush.bf16.msra.mxu0 0
      %553 = vmatpush.bf16.msra.mxu0 0
      %554 = vmatpush.bf16.msra.mxu0 0
      %555 = vmatpush.bf16.msra.mxu0 %v492
      %556 = vmatmul.bf16.gmra.mxu0 %v479
      %v557 = vpop.f32.mrf.mxu0
      %v558 = vadd.f32 0.0, %v557
      %v559 = vpop.f32.mrf.mxu0
      %v560 = vadd.f32 0.0, %v559
      %561 = vdwg.mxu0
      %562 = vmatpush.bf16.msra.mxu0 0
      %563 = vmatpush.bf16.msra.mxu0 0
      %564 = vmatpush.bf16.msra.mxu0 0
      %565 = vmatpush.bf16.msra.mxu0 0
      %566 = vmatpush.bf16.msra.mxu0 0
      %567 = vmatpush.bf16.msra.mxu0 0
      %568 = vmatpush.bf16.msra.mxu0 0
      %569 = vmatpush.bf16.msra.mxu0 %v495
      %570 = vmatmul.bf16.gmra.mxu0 %v479
      %v571 = vpop.f32.mrf.mxu0
      %v572 = vadd.f32 0.0, %v571
      %v573 = vpop.f32.mrf.mxu0
      %v574 = vadd.f32 0.0, %v573
      %575 = vdwg.mxu0
      %576 = vmatpush.bf16.msra.mxu0 0
      %577 = vmatpush.bf16.msra.mxu0 0
      %578 = vmatpush.bf16.msra.mxu0 0
      %579 = vmatpush.bf16.msra.mxu0 0
      %580 = vmatpush.bf16.msra.mxu0 0
      %581 = vmatpush.bf16.msra.mxu0 0
      %582 = vmatpush.bf16.msra.mxu0 0
      %583 = vmatpush.bf16.msra.mxu0 %v498
      %584 = vmatmul.bf16.gmra.mxu0 %v479
      %v585 = vpop.f32.mrf.mxu0
      %v586 = vadd.f32 0.0, %v585
      %v587 = vpop.f32.mrf.mxu0
      %v588 = vadd.f32 0.0, %v587
      %589 = vdwg.mxu0
      %590 = vmatpush.bf16.msra.mxu0 0
      %591 = vmatpush.bf16.msra.mxu0 0
      %592 = vmatpush.bf16.msra.mxu0 0
      %593 = vmatpush.bf16.msra.mxu0 0
      %594 = vmatpush.bf16.msra.mxu0 0
      %595 = vmatpush.bf16.msra.mxu0 0
      %596 = vmatpush.bf16.msra.mxu0 0
      %597 = vmatpush.bf16.msra.mxu0 %v501
      %598 = vmatmul.bf16.gmra.mxu0 %v479
      %v599 = vpop.f32.mrf.mxu0
      %v600 = vadd.f32 0.0, %v599
      %v601 = vpop.f32.mrf.mxu0
      %v602 = vadd.f32 0.0, %v601
      %603 = vdwg.mxu0
      %604 = vmatpush.bf16.msra.mxu0 0
      %605 = vmatpush.bf16.msra.mxu0 0
      %606 = vmatpush.bf16.msra.mxu0 0
      %607 = vmatpush.bf16.msra.mxu0 0
      %608 = vmatpush.bf16.msra.mxu0 0
      %609 = vmatpush.bf16.msra.mxu0 0
      %610 = vmatpush.bf16.msra.mxu0 0
      %611 = vmatpush.bf16.msra.mxu0 %v504
      %612 = vmatmul.bf16.gmra.mxu0 %v479
      %v613 = vpop.f32.mrf.mxu0
      %v614 = vadd.f32 0.0, %v613
      %v615 = vpop.f32.mrf.mxu0
      %v616 = vadd.f32 0.0, %v615
      %617 = vdwg.mxu0
      %v620 = vunpack.c.l.b16 %v369
      %v621 = vunpack.c.l.b16 %v370
      %v622 = vpack.c.b16 %v621, %v620
      %v624 = vsel %vm477, %v622, 0
      %v627 = vsel %vm481, %v371, 0
      %v630 = vsel %vm481, %v372, 0
      %v633 = vsel %vm481, %v373, 0
      %v636 = vsel %vm481, %v374, 0
      %v639 = vsel %vm481, %v375, 0
      %v642 = vsel %vm481, %v376, 0
      %v645 = vsel %vm481, %v377, 0
      %v648 = vsel %vm481, %v378, 0
      %650 = vmatpush.bf16.msra.mxu0 0
      %651 = vmatpush.bf16.msra.mxu0 0
      %652 = vmatpush.bf16.msra.mxu0 0
      %653 = vmatpush.bf16.msra.mxu0 0
      %654 = vmatpush.bf16.msra.mxu0 0
      %655 = vmatpush.bf16.msra.mxu0 0
      %656 = vmatpush.bf16.msra.mxu0 0
      %657 = vmatpush.bf16.msra.mxu0 %v627
      %658 = vmatmul.bf16.gmra.mxu0 %v624
      %v659 = vpop.f32.mrf.mxu0
      %v660 = vadd.f32 %v516, %v659
      %v661 = vpop.f32.mrf.mxu0
      %v662 = vadd.f32 %v518, %v661
      %663 = vdwg.mxu0
      %664 = vmatpush.bf16.msra.mxu0 0
      %665 = vmatpush.bf16.msra.mxu0 0
      %666 = vmatpush.bf16.msra.mxu0 0
      %667 = vmatpush.bf16.msra.mxu0 0
      %668 = vmatpush.bf16.msra.mxu0 0
      %669 = vmatpush.bf16.msra.mxu0 0
      %670 = vmatpush.bf16.msra.mxu0 0
      %671 = vmatpush.bf16.msra.mxu0 %v630
      %672 = vmatmul.bf16.gmra.mxu0 %v624
      %v673 = vpop.f32.mrf.mxu0
      %v674 = vadd.f32 %v530, %v673
      %v675 = vpop.f32.mrf.mxu0
      %v676 = vadd.f32 %v532, %v675
      %677 = vdwg.mxu0
      %678 = vmatpush.bf16.msra.mxu0 0
      %679 = vmatpush.bf16.msra.mxu0 0
      %680 = vmatpush.bf16.msra.mxu0 0
      %681 = vmatpush.bf16.msra.mxu0 0
      %682 = vmatpush.bf16.msra.mxu0 0
      %683 = vmatpush.bf16.msra.mxu0 0
      %684 = vmatpush.bf16.msra.mxu0 0
      %685 = vmatpush.bf16.msra.mxu0 %v633
      %686 = vmatmul.bf16.gmra.mxu0 %v624
      %v687 = vpop.f32.mrf.mxu0
      %v688 = vadd.f32 %v544, %v687
      %v689 = vpop.f32.mrf.mxu0
      %v690 = vadd.f32 %v546, %v689
      %691 = vdwg.mxu0
      %692 = vmatpush.bf16.msra.mxu0 0
      %693 = vmatpush.bf16.msra.mxu0 0
      %694 = vmatpush.bf16.msra.mxu0 0
      %695 = vmatpush.bf16.msra.mxu0 0
      %696 = vmatpush.bf16.msra.mxu0 0
      %697 = vmatpush.bf16.msra.mxu0 0
      %698 = vmatpush.bf16.msra.mxu0 0
      %699 = vmatpush.bf16.msra.mxu0 %v636
      %700 = vmatmul.bf16.gmra.mxu0 %v624
      %v701 = vpop.f32.mrf.mxu0
      %v702 = vadd.f32 %v558, %v701
      %v703 = vpop.f32.mrf.mxu0
      %v704 = vadd.f32 %v560, %v703
      %705 = vdwg.mxu0
      %706 = vmatpush.bf16.msra.mxu0 0
      %707 = vmatpush.bf16.msra.mxu0 0
      %708 = vmatpush.bf16.msra.mxu0 0
      %709 = vmatpush.bf16.msra.mxu0 0
      %710 = vmatpush.bf16.msra.mxu0 0
      %711 = vmatpush.bf16.msra.mxu0 0
      %712 = vmatpush.bf16.msra.mxu0 0
      %713 = vmatpush.bf16.msra.mxu0 %v639
      %714 = vmatmul.bf16.gmra.mxu0 %v624
      %v715 = vpop.f32.mrf.mxu0
      %v716 = vadd.f32 %v572, %v715
      %v717 = vpop.f32.mrf.mxu0
      %v718 = vadd.f32 %v574, %v717
      %719 = vdwg.mxu0
      %720 = vmatpush.bf16.msra.mxu0 0
      %721 = vmatpush.bf16.msra.mxu0 0
      %722 = vmatpush.bf16.msra.mxu0 0
      %723 = vmatpush.bf16.msra.mxu0 0
      %724 = vmatpush.bf16.msra.mxu0 0
      %725 = vmatpush.bf16.msra.mxu0 0
      %726 = vmatpush.bf16.msra.mxu0 0
      %727 = vmatpush.bf16.msra.mxu0 %v642
      %728 = vmatmul.bf16.gmra.mxu0 %v624
      %v729 = vpop.f32.mrf.mxu0
      %v730 = vadd.f32 %v586, %v729
      %v731 = vpop.f32.mrf.mxu0
      %v732 = vadd.f32 %v588, %v731
      %733 = vdwg.mxu0
      %734 = vmatpush.bf16.msra.mxu0 0
      %735 = vmatpush.bf16.msra.mxu0 0
      %736 = vmatpush.bf16.msra.mxu0 0
      %737 = vmatpush.bf16.msra.mxu0 0
      %738 = vmatpush.bf16.msra.mxu0 0
      %739 = vmatpush.bf16.msra.mxu0 0
      %740 = vmatpush.bf16.msra.mxu0 0
      %741 = vmatpush.bf16.msra.mxu0 %v645
      %742 = vmatmul.bf16.gmra.mxu0 %v624
      %v743 = vpop.f32.mrf.mxu0
      %v744 = vadd.f32 %v600, %v743
      %v745 = vpop.f32.mrf.mxu0
      %v746 = vadd.f32 %v602, %v745
      %747 = vdwg.mxu0
      %748 = vmatpush.bf16.msra.mxu0 0
      %749 = vmatpush.bf16.msra.mxu0 0
      %750 = vmatpush.bf16.msra.mxu0 0
      %751 = vmatpush.bf16.msra.mxu0 0
      %752 = vmatpush.bf16.msra.mxu0 0
      %753 = vmatpush.bf16.msra.mxu0 0
      %754 = vmatpush.bf16.msra.mxu0 0
      %755 = vmatpush.bf16.msra.mxu0 %v648
      %756 = vmatmul.bf16.gmra.mxu0 %v624
      %v757 = vpop.f32.mrf.mxu0
      %v758 = vadd.f32 %v614, %v757
      %v759 = vpop.f32.mrf.mxu0
      %v760 = vadd.f32 %v616, %v759
      %761 = vdwg.mxu0
      %762 = vst [vmem:[#allocation1] ss:$2 sm:$0xff] %v283
      %v763 = vld.sshfl [vmem:[#allocation1 + $0x8] sm:$0xff pattern:$0x75316420]
      %764 = vrot.lane.b32.xlu0 %v763, 15
      %v765 = vpop.permute.xlu0 %764
      %767 = vst [vmem:[#allocation1] ss:$2 sm:$0xff] %v280
      %s768 = scalar_lea.vmem [#allocation1], 16
      %769 = vst [vmem:[%s768] ss:$2 sm:$0xff] %v281
      %s770 = scalar_lea.vmem [#allocation1], 32
      %771 = vst [vmem:[%s770] ss:$2 sm:$0xff] %v282
      %s772 = scalar_lea.vmem [#allocation1], 48
      %773 = vst [vmem:[%s772] ss:$2 sm:$0xff] %v283
      %v774 = vld.sshfl [vmem:[#allocation1] sm:$0xff pattern:$0x75316420]
      %v775 = vld.sshfl [vmem:[#allocation1 + $0x8] sm:$0xff pattern:$0x75316420]
      %v776 = vld.sshfl [vmem:[#allocation1 + $0x10] sm:$0xff pattern:$0x75316420]
      %v777 = vld.sshfl [vmem:[#allocation1 + $0x18] sm:$0xff pattern:$0x75316420]
      %v778 = vld.sshfl [vmem:[#allocation1 + $0x20] sm:$0xff pattern:$0x75316420]
      %v779 = vld.sshfl [vmem:[#allocation1 + $0x28] sm:$0xff pattern:$0x75316420]
      %v780 = vld.sshfl [vmem:[#allocation1 + $0x30] sm:$0xff pattern:$0x75316420]
      %v781 = vld.sshfl [vmem:[#allocation1 + $0x38] sm:$0xff pattern:$0x75316420]
      %782 = vrot.lane.b32.xlu0 %v774, 15
      %v783 = vpop.permute.xlu0 %782
      %784 = vrot.lane.b32.xlu0 %v775, 15
      %v785 = vpop.permute.xlu0 %784
      %786 = vrot.lane.b32.xlu0 %v776, 15
      %v787 = vpop.permute.xlu0 %786
      %788 = vrot.lane.b32.xlu0 %v777, 15
      %v789 = vpop.permute.xlu0 %788
      %790 = vrot.lane.b32.xlu0 %v778, 15
      %v791 = vpop.permute.xlu0 %790
      %792 = vrot.lane.b32.xlu0 %v779, 15
      %v793 = vpop.permute.xlu0 %792
      %794 = vrot.lane.b32.xlu0 %v780, 15
      %v795 = vpop.permute.xlu0 %794
      %796 = vrot.lane.b32.xlu0 %v781, 15
      %v797 = vpop.permute.xlu0 %796
      %vm798 = vcmask 121856
      %v799 = vsel %vm798, %v783, %v785
      %v800 = vsel %vm798, %v785, %v787
      %v801 = vsel %vm798, %v787, %v789
      %v802 = vsel %vm798, %v789, %v791
      %v803 = vsel %vm798, %v791, %v793
      %v804 = vsel %vm798, %v793, %v795
      %v805 = vsel %vm798, %v795, %v797
      %v814 = vsel %vm798, %v765, %v783
      %s815 = scalar_lea.vmem %s5, 2
      %v816 = vld [vmem:[%s815] ss:$8 sm:$0xf]
      %v817 = vld [vmem:[%s815] ss:$8 sm:$0xf0]
      %v818 = vor.u32 %v816, %v817
      %v820 = vperm.slane %v818, 0
      %v821 = vperm.slane %v818, 1
      %v822 = vperm.slane %v818, 2
      %v823 = vperm.slane %v818, 3
      %v824 = vperm.slane %v818, 4
      %v825 = vperm.slane %v818, 5
      %v826 = vperm.slane %v818, 6
      %v827 = vperm.slane %v818, 7
      %v836 = vmul.f32 %v814, %v820
      %v837 = vmul.f32 %v799, %v821
      %v838 = vmul.f32 %v800, %v822
      %v839 = vmul.f32 %v801, %v823
      %v840 = vmul.f32 %v802, %v824
      %v841 = vmul.f32 %v803, %v825
      %v842 = vmul.f32 %v804, %v826
      %v843 = vmul.f32 %v805, %v827
      %s844 = scalar_lea.vmem %s1, 16
      %v845 = vld [vmem:[%s844] sm:$0xf]
      %v846 = vld [vmem:[%s844 + $0x4] sm:$0x3]
      %v847 = vpack.c.bf16 %v836, %v836
      %v848 = vpack.c.bf16 %v837, %v837
      %v849 = vpack.c.bf16 %v838, %v838
      %v850 = vpack.c.bf16 %v839, %v839
      %v851 = vpack.c.bf16 %v840, %v840
      %v852 = vpack.c.bf16 %v841, %v841
      %v853 = vpack.c.bf16 %v842, %v842
      %v854 = vpack.c.bf16 %v843, %v843
      %v857 = vunpack.c.l.b16 %v845
      %v858 = vunpack.c.l.b16 %v846
      %v859 = vpack.c.b16 %v858, %v857
      %v861 = vsel %vm477, %v859, 0
      %v864 = vsel %vm481, %v847, 0
      %v867 = vsel %vm481, %v848, 0
      %v870 = vsel %vm481, %v849, 0
      %v873 = vsel %vm481, %v850, 0
      %v876 = vsel %vm481, %v851, 0
      %v879 = vsel %vm481, %v852, 0
      %v882 = vsel %vm481, %v853, 0
      %v885 = vsel %vm481, %v854, 0
      %887 = vmatpush.bf16.msra.mxu0 0
      %888 = vmatpush.bf16.msra.mxu0 0
      %889 = vmatpush.bf16.msra.mxu0 0
      %890 = vmatpush.bf16.msra.mxu0 0
      %891 = vmatpush.bf16.msra.mxu0 0
      %892 = vmatpush.bf16.msra.mxu0 0
      %893 = vmatpush.bf16.msra.mxu0 0
      %894 = vmatpush.bf16.msra.mxu0 %v864
      %895 = vmatmul.bf16.gmra.mxu0 %v861
      %v896 = vpop.f32.mrf.mxu0
      %v897 = vadd.f32 0.0, %v896
      %v898 = vpop.f32.mrf.mxu0
      %v899 = vadd.f32 0.0, %v898
      %900 = vdwg.mxu0
      %901 = vmatpush.bf16.msra.mxu0 0
      %902 = vmatpush.bf16.msra.mxu0 0
      %903 = vmatpush.bf16.msra.mxu0 0
      %904 = vmatpush.bf16.msra.mxu0 0
      %905 = vmatpush.bf16.msra.mxu0 0
      %906 = vmatpush.bf16.msra.mxu0 0
      %907 = vmatpush.bf16.msra.mxu0 0
      %908 = vmatpush.bf16.msra.mxu0 %v867
      %909 = vmatmul.bf16.gmra.mxu0 %v861
      %v910 = vpop.f32.mrf.mxu0
      %v911 = vadd.f32 0.0, %v910
      %v912 = vpop.f32.mrf.mxu0
      %v913 = vadd.f32 0.0, %v912
      %914 = vdwg.mxu0
      %915 = vmatpush.bf16.msra.mxu0 0
      %916 = vmatpush.bf16.msra.mxu0 0
      %917 = vmatpush.bf16.msra.mxu0 0
      %918 = vmatpush.bf16.msra.mxu0 0
      %919 = vmatpush.bf16.msra.mxu0 0
      %920 = vmatpush.bf16.msra.mxu0 0
      %921 = vmatpush.bf16.msra.mxu0 0
      %922 = vmatpush.bf16.msra.mxu0 %v870
      %923 = vmatmul.bf16.gmra.mxu0 %v861
      %v924 = vpop.f32.mrf.mxu0
      %v925 = vadd.f32 0.0, %v924
      %v926 = vpop.f32.mrf.mxu0
      %v927 = vadd.f32 0.0, %v926
      %928 = vdwg.mxu0
      %929 = vmatpush.bf16.msra.mxu0 0
      %930 = vmatpush.bf16.msra.mxu0 0
      %931 = vmatpush.bf16.msra.mxu0 0
      %932 = vmatpush.bf16.msra.mxu0 0
      %933 = vmatpush.bf16.msra.mxu0 0
      %934 = vmatpush.bf16.msra.mxu0 0
      %935 = vmatpush.bf16.msra.mxu0 0
      %936 = vmatpush.bf16.msra.mxu0 %v873
      %937 = vmatmul.bf16.gmra.mxu0 %v861
      %v938 = vpop.f32.mrf.mxu0
      %v939 = vadd.f32 0.0, %v938
      %v940 = vpop.f32.mrf.mxu0
      %v941 = vadd.f32 0.0, %v940
      %942 = vdwg.mxu0
      %943 = vmatpush.bf16.msra.mxu0 0
      %944 = vmatpush.bf16.msra.mxu0 0
      %945 = vmatpush.bf16.msra.mxu0 0
      %946 = vmatpush.bf16.msra.mxu0 0
      %947 = vmatpush.bf16.msra.mxu0 0
      %948 = vmatpush.bf16.msra.mxu0 0
      %949 = vmatpush.bf16.msra.mxu0 0
      %950 = vmatpush.bf16.msra.mxu0 %v876
      %951 = vmatmul.bf16.gmra.mxu0 %v861
      %v952 = vpop.f32.mrf.mxu0
      %v953 = vadd.f32 0.0, %v952
      %v954 = vpop.f32.mrf.mxu0
      %v955 = vadd.f32 0.0, %v954
      %956 = vdwg.mxu0
      %957 = vmatpush.bf16.msra.mxu0 0
      %958 = vmatpush.bf16.msra.mxu0 0
      %959 = vmatpush.bf16.msra.mxu0 0
      %960 = vmatpush.bf16.msra.mxu0 0
      %961 = vmatpush.bf16.msra.mxu0 0
      %962 = vmatpush.bf16.msra.mxu0 0
      %963 = vmatpush.bf16.msra.mxu0 0
      %964 = vmatpush.bf16.msra.mxu0 %v879
      %965 = vmatmul.bf16.gmra.mxu0 %v861
      %v966 = vpop.f32.mrf.mxu0
      %v967 = vadd.f32 0.0, %v966
      %v968 = vpop.f32.mrf.mxu0
      %v969 = vadd.f32 0.0, %v968
      %970 = vdwg.mxu0
      %971 = vmatpush.bf16.msra.mxu0 0
      %972 = vmatpush.bf16.msra.mxu0 0
      %973 = vmatpush.bf16.msra.mxu0 0
      %974 = vmatpush.bf16.msra.mxu0 0
      %975 = vmatpush.bf16.msra.mxu0 0
      %976 = vmatpush.bf16.msra.mxu0 0
      %977 = vmatpush.bf16.msra.mxu0 0
      %978 = vmatpush.bf16.msra.mxu0 %v882
      %979 = vmatmul.bf16.gmra.mxu0 %v861
      %v980 = vpop.f32.mrf.mxu0
      %v981 = vadd.f32 0.0, %v980
      %v982 = vpop.f32.mrf.mxu0
      %v983 = vadd.f32 0.0, %v982
      %984 = vdwg.mxu0
      %985 = vmatpush.bf16.msra.mxu0 0
      %986 = vmatpush.bf16.msra.mxu0 0
      %987 = vmatpush.bf16.msra.mxu0 0
      %988 = vmatpush.bf16.msra.mxu0 0
      %989 = vmatpush.bf16.msra.mxu0 0
      %990 = vmatpush.bf16.msra.mxu0 0
      %991 = vmatpush.bf16.msra.mxu0 0
      %992 = vmatpush.bf16.msra.mxu0 %v885
      %993 = vmatmul.bf16.gmra.mxu0 %v861
      %v994 = vpop.f32.mrf.mxu0
      %v995 = vadd.f32 0.0, %v994
      %v996 = vpop.f32.mrf.mxu0
      %v997 = vadd.f32 0.0, %v996
      %998 = vdwg.mxu0
      %v999 = vadd.f32 %v660, %v897
      %v1000 = vadd.f32 %v674, %v911
      %v1001 = vadd.f32 %v688, %v925
      %v1002 = vadd.f32 %v702, %v939
      %v1003 = vadd.f32 %v716, %v953
      %v1004 = vadd.f32 %v730, %v967
      %v1005 = vadd.f32 %v744, %v981
      %v1006 = vadd.f32 %v758, %v995
      %v1007 = vadd.f32 %v662, %v899
      %v1008 = vadd.f32 %v676, %v913
      %v1009 = vadd.f32 %v690, %v927
      %v1010 = vadd.f32 %v704, %v941
      %v1011 = vadd.f32 %v718, %v955
      %v1012 = vadd.f32 %v732, %v969
      %v1013 = vadd.f32 %v746, %v983
      %v1014 = vadd.f32 %v760, %v997
      %1015 = vst [vmem:[#allocation1] ss:$2 sm:$0xff] %v283
      %v1016 = vld.sshfl [vmem:[#allocation1 + $0x8] sm:$0xff pattern:$0x75316420]
      %1017 = vrot.lane.b32.xlu0 %v1016, 1
      %v1018 = vpop.permute.xlu0 %1017
      %1020 = vst [vmem:[#allocation1] ss:$2 sm:$0xff] %v280
      %s1021 = scalar_lea.vmem [#allocation1], 16
      %1022 = vst [vmem:[%s1021] ss:$2 sm:$0xff] %v281
      %s1023 = scalar_lea.vmem [#allocation1], 32
      %1024 = vst [vmem:[%s1023] ss:$2 sm:$0xff] %v282
      %s1025 = scalar_lea.vmem [#allocation1], 48
      %1026 = vst [vmem:[%s1025] ss:$2 sm:$0xff] %v283
      %v1027 = vld.sshfl [vmem:[#allocation1] sm:$0xff pattern:$0x75316420]
      %v1028 = vld.sshfl [vmem:[#allocation1 + $0x8] sm:$0xff pattern:$0x75316420]
      %v1029 = vld.sshfl [vmem:[#allocation1 + $0x10] sm:$0xff pattern:$0x75316420]
      %v1030 = vld.sshfl [vmem:[#allocation1 + $0x18] sm:$0xff pattern:$0x75316420]
      %v1031 = vld.sshfl [vmem:[#allocation1 + $0x20] sm:$0xff pattern:$0x75316420]
      %v1032 = vld.sshfl [vmem:[#allocation1 + $0x28] sm:$0xff pattern:$0x75316420]
      %v1033 = vld.sshfl [vmem:[#allocation1 + $0x30] sm:$0xff pattern:$0x75316420]
      %v1034 = vld.sshfl [vmem:[#allocation1 + $0x38] sm:$0xff pattern:$0x75316420]
      %1035 = vrot.lane.b32.xlu0 %v1027, 1
      %v1036 = vpop.permute.xlu0 %1035
      %1037 = vrot.lane.b32.xlu0 %v1028, 1
      %v1038 = vpop.permute.xlu0 %1037
      %1039 = vrot.lane.b32.xlu0 %v1029, 1
      %v1040 = vpop.permute.xlu0 %1039
      %1041 = vrot.lane.b32.xlu0 %v1030, 1
      %v1042 = vpop.permute.xlu0 %1041
      %1043 = vrot.lane.b32.xlu0 %v1031, 1
      %v1044 = vpop.permute.xlu0 %1043
      %1045 = vrot.lane.b32.xlu0 %v1032, 1
      %v1046 = vpop.permute.xlu0 %1045
      %1047 = vrot.lane.b32.xlu0 %v1033, 1
      %v1048 = vpop.permute.xlu0 %1047
      %1049 = vrot.lane.b32.xlu0 %v1034, 1
      %v1050 = vpop.permute.xlu0 %1049
      %vm1051 = vcmask 7168
      %v1052 = vsel %vm1051, %v1036, %v1038
      %v1053 = vsel %vm1051, %v1038, %v1040
      %v1054 = vsel %vm1051, %v1040, %v1042
      %v1055 = vsel %vm1051, %v1042, %v1044
      %v1056 = vsel %vm1051, %v1044, %v1046
      %v1057 = vsel %vm1051, %v1046, %v1048
      %v1058 = vsel %vm1051, %v1048, %v1050
      %v1067 = vsel %vm1051, %v1018, %v1036
      %s1068 = scalar_lea.vmem %s5, 3
      %v1069 = vld [vmem:[%s1068] ss:$8 sm:$0xf]
      %v1070 = vld [vmem:[%s1068] ss:$8 sm:$0xf0]
      %v1071 = vor.u32 %v1069, %v1070
      %v1073 = vperm.slane %v1071, 0
      %v1074 = vperm.slane %v1071, 1
      %v1075 = vperm.slane %v1071, 2
      %v1076 = vperm.slane %v1071, 3
      %v1077 = vperm.slane %v1071, 4
      %v1078 = vperm.slane %v1071, 5
      %v1079 = vperm.slane %v1071, 6
      %v1080 = vperm.slane %v1071, 7
      %v1089 = vmul.f32 %v1067, %v1073
      %v1090 = vmul.f32 %v1052, %v1074
      %v1091 = vmul.f32 %v1053, %v1075
      %v1092 = vmul.f32 %v1054, %v1076
      %v1093 = vmul.f32 %v1055, %v1077
      %v1094 = vmul.f32 %v1056, %v1078
      %v1095 = vmul.f32 %v1057, %v1079
      %v1096 = vmul.f32 %v1058, %v1080
      %s1097 = scalar_lea.vmem %s1, 24
      %v1098 = vld [vmem:[%s1097] sm:$0xf]
      %v1099 = vld [vmem:[%s1097 + $0x4] sm:$0x3]
      %v1100 = vpack.c.bf16 %v1089, %v1089
      %v1101 = vpack.c.bf16 %v1090, %v1090
      %v1102 = vpack.c.bf16 %v1091, %v1091
      %v1103 = vpack.c.bf16 %v1092, %v1092
      %v1104 = vpack.c.bf16 %v1093, %v1093
      %v1105 = vpack.c.bf16 %v1094, %v1094
      %v1106 = vpack.c.bf16 %v1095, %v1095
      %v1107 = vpack.c.bf16 %v1096, %v1096
      %v1110 = vunpack.c.l.b16 %v1098
      %v1111 = vunpack.c.l.b16 %v1099
      %v1112 = vpack.c.b16 %v1111, %v1110
      %v1114 = vsel %vm477, %v1112, 0
      %v1117 = vsel %vm481, %v1100, 0
      %v1120 = vsel %vm481, %v1101, 0
      %v1123 = vsel %vm481, %v1102, 0
      %v1126 = vsel %vm481, %v1103, 0
      %v1129 = vsel %vm481, %v1104, 0
      %v1132 = vsel %vm481, %v1105, 0
      %v1135 = vsel %vm481, %v1106, 0
      %v1138 = vsel %vm481, %v1107, 0
      %1140 = vmatpush.bf16.msra.mxu0 0
      %1141 = vmatpush.bf16.msra.mxu0 0
      %1142 = vmatpush.bf16.msra.mxu0 0
      %1143 = vmatpush.bf16.msra.mxu0 0
      %1144 = vmatpush.bf16.msra.mxu0 0
      %1145 = vmatpush.bf16.msra.mxu0 0
      %1146 = vmatpush.bf16.msra.mxu0 0
      %1147 = vmatpush.bf16.msra.mxu0 %v1117
      %1148 = vmatmul.bf16.gmra.mxu0 %v1114
      %v1149 = vpop.f32.mrf.mxu0
      %v1150 = vadd.f32 0.0, %v1149
      %v1151 = vpop.f32.mrf.mxu0
      %v1152 = vadd.f32 0.0, %v1151
      %1153 = vdwg.mxu0
      %1154 = vmatpush.bf16.msra.mxu0 0
      %1155 = vmatpush.bf16.msra.mxu0 0
      %1156 = vmatpush.bf16.msra.mxu0 0
      %1157 = vmatpush.bf16.msra.mxu0 0
      %1158 = vmatpush.bf16.msra.mxu0 0
      %1159 = vmatpush.bf16.msra.mxu0 0
      %1160 = vmatpush.bf16.msra.mxu0 0
      %1161 = vmatpush.bf16.msra.mxu0 %v1120
      %1162 = vmatmul.bf16.gmra.mxu0 %v1114
      %v1163 = vpop.f32.mrf.mxu0
      %v1164 = vadd.f32 0.0, %v1163
      %v1165 = vpop.f32.mrf.mxu0
      %v1166 = vadd.f32 0.0, %v1165
      %1167 = vdwg.mxu0
      %1168 = vmatpush.bf16.msra.mxu0 0
      %1169 = vmatpush.bf16.msra.mxu0 0
      %1170 = vmatpush.bf16.msra.mxu0 0
      %1171 = vmatpush.bf16.msra.mxu0 0
      %1172 = vmatpush.bf16.msra.mxu0 0
      %1173 = vmatpush.bf16.msra.mxu0 0
      %1174 = vmatpush.bf16.msra.mxu0 0
      %1175 = vmatpush.bf16.msra.mxu0 %v1123
      %1176 = vmatmul.bf16.gmra.mxu0 %v1114
      %v1177 = vpop.f32.mrf.mxu0
      %v1178 = vadd.f32 0.0, %v1177
      %v1179 = vpop.f32.mrf.mxu0
      %v1180 = vadd.f32 0.0, %v1179
      %1181 = vdwg.mxu0
      %1182 = vmatpush.bf16.msra.mxu0 0
      %1183 = vmatpush.bf16.msra.mxu0 0
      %1184 = vmatpush.bf16.msra.mxu0 0
      %1185 = vmatpush.bf16.msra.mxu0 0
      %1186 = vmatpush.bf16.msra.mxu0 0
      %1187 = vmatpush.bf16.msra.mxu0 0
      %1188 = vmatpush.bf16.msra.mxu0 0
      %1189 = vmatpush.bf16.msra.mxu0 %v1126
      %1190 = vmatmul.bf16.gmra.mxu0 %v1114
      %v1191 = vpop.f32.mrf.mxu0
      %v1192 = vadd.f32 0.0, %v1191
      %v1193 = vpop.f32.mrf.mxu0
      %v1194 = vadd.f32 0.0, %v1193
      %1195 = vdwg.mxu0
      %1196 = vmatpush.bf16.msra.mxu0 0
      %1197 = vmatpush.bf16.msra.mxu0 0
      %1198 = vmatpush.bf16.msra.mxu0 0
      %1199 = vmatpush.bf16.msra.mxu0 0
      %1200 = vmatpush.bf16.msra.mxu0 0
      %1201 = vmatpush.bf16.msra.mxu0 0
      %1202 = vmatpush.bf16.msra.mxu0 0
      %1203 = vmatpush.bf16.msra.mxu0 %v1129
      %1204 = vmatmul.bf16.gmra.mxu0 %v1114
      %v1205 = vpop.f32.mrf.mxu0
      %v1206 = vadd.f32 0.0, %v1205
      %v1207 = vpop.f32.mrf.mxu0
      %v1208 = vadd.f32 0.0, %v1207
      %1209 = vdwg.mxu0
      %1210 = vmatpush.bf16.msra.mxu0 0
      %1211 = vmatpush.bf16.msra.mxu0 0
      %1212 = vmatpush.bf16.msra.mxu0 0
      %1213 = vmatpush.bf16.msra.mxu0 0
      %1214 = vmatpush.bf16.msra.mxu0 0
      %1215 = vmatpush.bf16.msra.mxu0 0
      %1216 = vmatpush.bf16.msra.mxu0 0
      %1217 = vmatpush.bf16.msra.mxu0 %v1132
      %1218 = vmatmul.bf16.gmra.mxu0 %v1114
      %v1219 = vpop.f32.mrf.mxu0
      %v1220 = vadd.f32 0.0, %v1219
      %v1221 = vpop.f32.mrf.mxu0
      %v1222 = vadd.f32 0.0, %v1221
      %1223 = vdwg.mxu0
      %1224 = vmatpush.bf16.msra.mxu0 0
      %1225 = vmatpush.bf16.msra.mxu0 0
      %1226 = vmatpush.bf16.msra.mxu0 0
      %1227 = vmatpush.bf16.msra.mxu0 0
      %1228 = vmatpush.bf16.msra.mxu0 0
      %1229 = vmatpush.bf16.msra.mxu0 0
      %1230 = vmatpush.bf16.msra.mxu0 0
      %1231 = vmatpush.bf16.msra.mxu0 %v1135
      %1232 = vmatmul.bf16.gmra.mxu0 %v1114
      %v1233 = vpop.f32.mrf.mxu0
      %v1234 = vadd.f32 0.0, %v1233
      %v1235 = vpop.f32.mrf.mxu0
      %v1236 = vadd.f32 0.0, %v1235
      %1237 = vdwg.mxu0
      %1238 = vmatpush.bf16.msra.mxu0 0
      %1239 = vmatpush.bf16.msra.mxu0 0
      %1240 = vmatpush.bf16.msra.mxu0 0
      %1241 = vmatpush.bf16.msra.mxu0 0
      %1242 = vmatpush.bf16.msra.mxu0 0
      %1243 = vmatpush.bf16.msra.mxu0 0
      %1244 = vmatpush.bf16.msra.mxu0 0
      %1245 = vmatpush.bf16.msra.mxu0 %v1138
      %1246 = vmatmul.bf16.gmra.mxu0 %v1114
      %v1247 = vpop.f32.mrf.mxu0
      %v1248 = vadd.f32 0.0, %v1247
      %v1249 = vpop.f32.mrf.mxu0
      %v1250 = vadd.f32 0.0, %v1249
      %1251 = vdwg.mxu0
      %v1252 = vadd.f32 %v999, %v1150
      %v1253 = vadd.f32 %v1000, %v1164
      %v1254 = vadd.f32 %v1001, %v1178
      %v1255 = vadd.f32 %v1002, %v1192
      %v1256 = vadd.f32 %v1003, %v1206
      %v1257 = vadd.f32 %v1004, %v1220
      %v1258 = vadd.f32 %v1005, %v1234
      %v1259 = vadd.f32 %v1006, %v1248
      %v1260 = vadd.f32 %v1007, %v1152
      %v1261 = vadd.f32 %v1008, %v1166
      %v1262 = vadd.f32 %v1009, %v1180
      %v1263 = vadd.f32 %v1010, %v1194
      %v1264 = vadd.f32 %v1011, %v1208
      %v1265 = vadd.f32 %v1012, %v1222
      %v1266 = vadd.f32 %v1013, %v1236
      %v1267 = vadd.f32 %v1014, %v1250
      %s1268 = scalar_lea.vmem %s1, 32
      %v1269 = vld [vmem:[%s1268] sm:$0xf]
      %v1270 = vld [vmem:[%s1268 + $0x4] sm:$0x3]
      %1271 = vst [vmem:[#allocation1] ss:$2 sm:$0xff] %v280
      %s1272 = scalar_lea.vmem [#allocation1], 16
      %1273 = vst [vmem:[%s1272] ss:$2 sm:$0xff] %v281
      %s1274 = scalar_lea.vmem [#allocation1], 32
      %1275 = vst [vmem:[%s1274] ss:$2 sm:$0xff] %v282
      %s1276 = scalar_lea.vmem [#allocation1], 48
      %1277 = vst [vmem:[%s1276] ss:$2 sm:$0xff] %v283
      %v1278 = vld.sshfl [vmem:[#allocation1] sm:$0xff pattern:$0x75316420]
      %v1279 = vld.sshfl [vmem:[#allocation1 + $0x8] sm:$0xff pattern:$0x75316420]
      %v1280 = vld.sshfl [vmem:[#allocation1 + $0x10] sm:$0xff pattern:$0x75316420]
      %v1281 = vld.sshfl [vmem:[#allocation1 + $0x18] sm:$0xff pattern:$0x75316420]
      %v1282 = vld.sshfl [vmem:[#allocation1 + $0x20] sm:$0xff pattern:$0x75316420]
      %v1283 = vld.sshfl [vmem:[#allocation1 + $0x28] sm:$0xff pattern:$0x75316420]
      %v1284 = vld.sshfl [vmem:[#allocation1 + $0x30] sm:$0xff pattern:$0x75316420]
      %v1285 = vld.sshfl [vmem:[#allocation1 + $0x38] sm:$0xff pattern:$0x75316420]
      %v1294 = vpack.c.bf16 %v1278, %v1278
      %v1295 = vpack.c.bf16 %v1279, %v1279
      %v1296 = vpack.c.bf16 %v1280, %v1280
      %v1297 = vpack.c.bf16 %v1281, %v1281
      %v1298 = vpack.c.bf16 %v1282, %v1282
      %v1299 = vpack.c.bf16 %v1283, %v1283
      %v1300 = vpack.c.bf16 %v1284, %v1284
      %v1301 = vpack.c.bf16 %v1285, %v1285
      %v1304 = vunpack.c.l.b16 %v1269
      %v1305 = vunpack.c.l.b16 %v1270
      %v1306 = vpack.c.b16 %v1305, %v1304
      %v1308 = vsel %vm477, %v1306, 0
      %v1311 = vsel %vm481, %v1294, 0
      %v1314 = vsel %vm481, %v1295, 0
      %v1317 = vsel %vm481, %v1296, 0
      %v1320 = vsel %vm481, %v1297, 0
      %v1323 = vsel %vm481, %v1298, 0
      %v1326 = vsel %vm481, %v1299, 0
      %v1329 = vsel %vm481, %v1300, 0
      %v1332 = vsel %vm481, %v1301, 0
      %1334 = vmatpush.bf16.msra.mxu0 0
      %1335 = vmatpush.bf16.msra.mxu0 0
      %1336 = vmatpush.bf16.msra.mxu0 0
      %1337 = vmatpush.bf16.msra.mxu0 0
      %1338 = vmatpush.bf16.msra.mxu0 0
      %1339 = vmatpush.bf16.msra.mxu0 0
      %1340 = vmatpush.bf16.msra.mxu0 0
      %1341 = vmatpush.bf16.msra.mxu0 %v1311
      %1342 = vmatmul.bf16.gmra.mxu0 %v1308
      %v1343 = vpop.f32.mrf.mxu0
      %v1344 = vadd.f32 0.0, %v1343
      %v1345 = vpop.f32.mrf.mxu0
      %v1346 = vadd.f32 0.0, %v1345
      %1347 = vdwg.mxu0
      %1348 = vmatpush.bf16.msra.mxu0 0
      %1349 = vmatpush.bf16.msra.mxu0 0
      %1350 = vmatpush.bf16.msra.mxu0 0
      %1351 = vmatpush.bf16.msra.mxu0 0
      %1352 = vmatpush.bf16.msra.mxu0 0
      %1353 = vmatpush.bf16.msra.mxu0 0
      %1354 = vmatpush.bf16.msra.mxu0 0
      %1355 = vmatpush.bf16.msra.mxu0 %v1314
      %1356 = vmatmul.bf16.gmra.mxu0 %v1308
      %v1357 = vpop.f32.mrf.mxu0
      %v1358 = vadd.f32 0.0, %v1357
      %v1359 = vpop.f32.mrf.mxu0
      %v1360 = vadd.f32 0.0, %v1359
      %1361 = vdwg.mxu0
      %1362 = vmatpush.bf16.msra.mxu0 0
      %1363 = vmatpush.bf16.msra.mxu0 0
      %1364 = vmatpush.bf16.msra.mxu0 0
      %1365 = vmatpush.bf16.msra.mxu0 0
      %1366 = vmatpush.bf16.msra.mxu0 0
      %1367 = vmatpush.bf16.msra.mxu0 0
      %1368 = vmatpush.bf16.msra.mxu0 0
      %1369 = vmatpush.bf16.msra.mxu0 %v1317
      %1370 = vmatmul.bf16.gmra.mxu0 %v1308
      %v1371 = vpop.f32.mrf.mxu0
      %v1372 = vadd.f32 0.0, %v1371
      %v1373 = vpop.f32.mrf.mxu0
      %v1374 = vadd.f32 0.0, %v1373
      %1375 = vdwg.mxu0
      %1376 = vmatpush.bf16.msra.mxu0 0
      %1377 = vmatpush.bf16.msra.mxu0 0
      %1378 = vmatpush.bf16.msra.mxu0 0
      %1379 = vmatpush.bf16.msra.mxu0 0
      %1380 = vmatpush.bf16.msra.mxu0 0
      %1381 = vmatpush.bf16.msra.mxu0 0
      %1382 = vmatpush.bf16.msra.mxu0 0
      %1383 = vmatpush.bf16.msra.mxu0 %v1320
      %1384 = vmatmul.bf16.gmra.mxu0 %v1308
      %v1385 = vpop.f32.mrf.mxu0
      %v1386 = vadd.f32 0.0, %v1385
      %v1387 = vpop.f32.mrf.mxu0
      %v1388 = vadd.f32 0.0, %v1387
      %1389 = vdwg.mxu0
      %1390 = vmatpush.bf16.msra.mxu0 0
      %1391 = vmatpush.bf16.msra.mxu0 0
      %1392 = vmatpush.bf16.msra.mxu0 0
      %1393 = vmatpush.bf16.msra.mxu0 0
      %1394 = vmatpush.bf16.msra.mxu0 0
      %1395 = vmatpush.bf16.msra.mxu0 0
      %1396 = vmatpush.bf16.msra.mxu0 0
      %1397 = vmatpush.bf16.msra.mxu0 %v1323
      %1398 = vmatmul.bf16.gmra.mxu0 %v1308
      %v1399 = vpop.f32.mrf.mxu0
      %v1400 = vadd.f32 0.0, %v1399
      %v1401 = vpop.f32.mrf.mxu0
      %v1402 = vadd.f32 0.0, %v1401
      %1403 = vdwg.mxu0
      %1404 = vmatpush.bf16.msra.mxu0 0
      %1405 = vmatpush.bf16.msra.mxu0 0
      %1406 = vmatpush.bf16.msra.mxu0 0
      %1407 = vmatpush.bf16.msra.mxu0 0
      %1408 = vmatpush.bf16.msra.mxu0 0
      %1409 = vmatpush.bf16.msra.mxu0 0
      %1410 = vmatpush.bf16.msra.mxu0 0
      %1411 = vmatpush.bf16.msra.mxu0 %v1326
      %1412 = vmatmul.bf16.gmra.mxu0 %v1308
      %v1413 = vpop.f32.mrf.mxu0
      %v1414 = vadd.f32 0.0, %v1413
      %v1415 = vpop.f32.mrf.mxu0
      %v1416 = vadd.f32 0.0, %v1415
      %1417 = vdwg.mxu0
      %1418 = vmatpush.bf16.msra.mxu0 0
      %1419 = vmatpush.bf16.msra.mxu0 0
      %1420 = vmatpush.bf16.msra.mxu0 0
      %1421 = vmatpush.bf16.msra.mxu0 0
      %1422 = vmatpush.bf16.msra.mxu0 0
      %1423 = vmatpush.bf16.msra.mxu0 0
      %1424 = vmatpush.bf16.msra.mxu0 0
      %1425 = vmatpush.bf16.msra.mxu0 %v1329
      %1426 = vmatmul.bf16.gmra.mxu0 %v1308
      %v1427 = vpop.f32.mrf.mxu0
      %v1428 = vadd.f32 0.0, %v1427
      %v1429 = vpop.f32.mrf.mxu0
      %v1430 = vadd.f32 0.0, %v1429
      %1431 = vdwg.mxu0
      %1432 = vmatpush.bf16.msra.mxu0 0
      %1433 = vmatpush.bf16.msra.mxu0 0
      %1434 = vmatpush.bf16.msra.mxu0 0
      %1435 = vmatpush.bf16.msra.mxu0 0
      %1436 = vmatpush.bf16.msra.mxu0 0
      %1437 = vmatpush.bf16.msra.mxu0 0
      %1438 = vmatpush.bf16.msra.mxu0 0
      %1439 = vmatpush.bf16.msra.mxu0 %v1332
      %1440 = vmatmul.bf16.gmra.mxu0 %v1308
      %v1441 = vpop.f32.mrf.mxu0
      %v1442 = vadd.f32 0.0, %v1441
      %v1443 = vpop.f32.mrf.mxu0
      %v1444 = vadd.f32 0.0, %v1443
      %1445 = vdwg.mxu0
      %v1446 = vadd.f32 %v1252, %v1344
      %v1447 = vadd.f32 %v1253, %v1358
      %v1448 = vadd.f32 %v1254, %v1372
      %v1449 = vadd.f32 %v1255, %v1386
      %v1450 = vadd.f32 %v1256, %v1400
      %v1451 = vadd.f32 %v1257, %v1414
      %v1452 = vadd.f32 %v1258, %v1428
      %v1453 = vadd.f32 %v1259, %v1442
      %v1454 = vadd.f32 %v1260, %v1346
      %v1455 = vadd.f32 %v1261, %v1360
      %v1456 = vadd.f32 %v1262, %v1374
      %v1457 = vadd.f32 %v1263, %v1388
      %v1458 = vadd.f32 %v1264, %v1402
      %v1459 = vadd.f32 %v1265, %v1416
      %v1460 = vadd.f32 %v1266, %v1430
      %v1461 = vadd.f32 %v1267, %v1444
      %1462 = vst [vmem:[#allocation1] ss:$2 sm:$0xff] %v280
      %s1463 = scalar_lea.vmem [#allocation1], 16
      %1464 = vst [vmem:[%s1463] ss:$2 sm:$0xff] %v281
      %s1465 = scalar_lea.vmem [#allocation1], 32
      %1466 = vst [vmem:[%s1465] ss:$2 sm:$0xff] %v282
      %s1467 = scalar_lea.vmem [#allocation1], 48
      %1468 = vst [vmem:[%s1467] ss:$2 sm:$0xff] %v283
      %v1469 = vld.sshfl [vmem:[#allocation1] sm:$0xff pattern:$0x75316420]
      %v1470 = vld.sshfl [vmem:[#allocation1 + $0x8] sm:$0xff pattern:$0x75316420]
      %v1471 = vld.sshfl [vmem:[#allocation1 + $0x10] sm:$0xff pattern:$0x75316420]
      %v1472 = vld.sshfl [vmem:[#allocation1 + $0x18] sm:$0xff pattern:$0x75316420]
      %v1473 = vld.sshfl [vmem:[#allocation1 + $0x20] sm:$0xff pattern:$0x75316420]
      %v1474 = vld.sshfl [vmem:[#allocation1 + $0x28] sm:$0xff pattern:$0x75316420]
      %v1475 = vld.sshfl [vmem:[#allocation1 + $0x30] sm:$0xff pattern:$0x75316420]
      %v1476 = vld.sshfl [vmem:[#allocation1 + $0x38] sm:$0xff pattern:$0x75316420]
      %1477 = vrot.lane.b32.xlu0 %v1469, 127
      %v1478 = vpop.permute.xlu0 %1477
      %1479 = vrot.lane.b32.xlu0 %v1470, 127
      %v1480 = vpop.permute.xlu0 %1479
      %1481 = vrot.lane.b32.xlu0 %v1471, 127
      %v1482 = vpop.permute.xlu0 %1481
      %1483 = vrot.lane.b32.xlu0 %v1472, 127
      %v1484 = vpop.permute.xlu0 %1483
      %1485 = vrot.lane.b32.xlu0 %v1473, 127
      %v1486 = vpop.permute.xlu0 %1485
      %1487 = vrot.lane.b32.xlu0 %v1474, 127
      %v1488 = vpop.permute.xlu0 %1487
      %1489 = vrot.lane.b32.xlu0 %v1475, 127
      %v1490 = vpop.permute.xlu0 %1489
      %1491 = vrot.lane.b32.xlu0 %v1476, 127
      %v1492 = vpop.permute.xlu0 %1491
      %vm1493 = vcmask 1039360
      %v1494 = vsel %vm1493, %v1478, %v1480
      %v1495 = vsel %vm1493, %v1480, %v1482
      %v1496 = vsel %vm1493, %v1482, %v1484
      %v1497 = vsel %vm1493, %v1484, %v1486
      %v1498 = vsel %vm1493, %v1486, %v1488
      %v1499 = vsel %vm1493, %v1488, %v1490
      %v1500 = vsel %vm1493, %v1490, %v1492
      %1509 = vst [vmem:[#allocation1] ss:$2 sm:$0xff] %v280
      %v1510 = vld.sshfl [vmem:[#allocation1] sm:$0xff pattern:$0x75316420]
      %1511 = vrot.lane.b32.xlu0 %v1510, 127
      %v1512 = vpop.permute.xlu0 %1511
      %v1514 = vsel %vm1493, %v1492, %v1512
      %s1515 = scalar_lea.vmem %s5, 5
      %v1516 = vld [vmem:[%s1515] ss:$8 sm:$0xf]
      %v1517 = vld [vmem:[%s1515] ss:$8 sm:$0xf0]
      %v1518 = vor.u32 %v1516, %v1517
      %v1520 = vperm.slane %v1518, 0
      %v1521 = vperm.slane %v1518, 1
      %v1522 = vperm.slane %v1518, 2
      %v1523 = vperm.slane %v1518, 3
      %v1524 = vperm.slane %v1518, 4
      %v1525 = vperm.slane %v1518, 5
      %v1526 = vperm.slane %v1518, 6
      %v1527 = vperm.slane %v1518, 7
      %v1536 = vmul.f32 %v1494, %v1520
      %v1537 = vmul.f32 %v1495, %v1521
      %v1538 = vmul.f32 %v1496, %v1522
      %v1539 = vmul.f32 %v1497, %v1523
      %v1540 = vmul.f32 %v1498, %v1524
      %v1541 = vmul.f32 %v1499, %v1525
      %v1542 = vmul.f32 %v1500, %v1526
      %v1543 = vmul.f32 %v1514, %v1527
      %s1544 = scalar_lea.vmem %s1, 40
      %v1545 = vld [vmem:[%s1544] sm:$0xf]
      %v1546 = vld [vmem:[%s1544 + $0x4] sm:$0x3]
      %v1547 = vpack.c.bf16 %v1536, %v1536
      %v1548 = vpack.c.bf16 %v1537, %v1537
      %v1549 = vpack.c.bf16 %v1538, %v1538
      %v1550 = vpack.c.bf16 %v1539, %v1539
      %v1551 = vpack.c.bf16 %v1540, %v1540
      %v1552 = vpack.c.bf16 %v1541, %v1541
      %v1553 = vpack.c.bf16 %v1542, %v1542
      %v1554 = vpack.c.bf16 %v1543, %v1543
      %v1557 = vunpack.c.l.b16 %v1545
      %v1558 = vunpack.c.l.b16 %v1546
      %v1559 = vpack.c.b16 %v1558, %v1557
      %v1561 = vsel %vm477, %v1559, 0
      %v1564 = vsel %vm481, %v1547, 0
      %v1567 = vsel %vm481, %v1548, 0
      %v1570 = vsel %vm481, %v1549, 0
      %v1573 = vsel %vm481, %v1550, 0
      %v1576 = vsel %vm481, %v1551, 0
      %v1579 = vsel %vm481, %v1552, 0
      %v1582 = vsel %vm481, %v1553, 0
      %v1585 = vsel %vm481, %v1554, 0
      %1587 = vmatpush.bf16.msra.mxu0 0
      %1588 = vmatpush.bf16.msra.mxu0 0
      %1589 = vmatpush.bf16.msra.mxu0 0
      %1590 = vmatpush.bf16.msra.mxu0 0
      %1591 = vmatpush.bf16.msra.mxu0 0
      %1592 = vmatpush.bf16.msra.mxu0 0
      %1593 = vmatpush.bf16.msra.mxu0 0
      %1594 = vmatpush.bf16.msra.mxu0 %v1564
      %1595 = vmatmul.bf16.gmra.mxu0 %v1561
      %v1596 = vpop.f32.mrf.mxu0
      %v1597 = vadd.f32 0.0, %v1596
      %v1598 = vpop.f32.mrf.mxu0
      %v1599 = vadd.f32 0.0, %v1598
      %1600 = vdwg.mxu0
      %1601 = vmatpush.bf16.msra.mxu0 0
      %1602 = vmatpush.bf16.msra.mxu0 0
      %1603 = vmatpush.bf16.msra.mxu0 0
      %1604 = vmatpush.bf16.msra.mxu0 0
      %1605 = vmatpush.bf16.msra.mxu0 0
      %1606 = vmatpush.bf16.msra.mxu0 0
      %1607 = vmatpush.bf16.msra.mxu0 0
      %1608 = vmatpush.bf16.msra.mxu0 %v1567
      %1609 = vmatmul.bf16.gmra.mxu0 %v1561
      %v1610 = vpop.f32.mrf.mxu0
      %v1611 = vadd.f32 0.0, %v1610
      %v1612 = vpop.f32.mrf.mxu0
      %v1613 = vadd.f32 0.0, %v1612
      %1614 = vdwg.mxu0
      %1615 = vmatpush.bf16.msra.mxu0 0
      %1616 = vmatpush.bf16.msra.mxu0 0
      %1617 = vmatpush.bf16.msra.mxu0 0
      %1618 = vmatpush.bf16.msra.mxu0 0
      %1619 = vmatpush.bf16.msra.mxu0 0
      %1620 = vmatpush.bf16.msra.mxu0 0
      %1621 = vmatpush.bf16.msra.mxu0 0
      %1622 = vmatpush.bf16.msra.mxu0 %v1570
      %1623 = vmatmul.bf16.gmra.mxu0 %v1561
      %v1624 = vpop.f32.mrf.mxu0
      %v1625 = vadd.f32 0.0, %v1624
      %v1626 = vpop.f32.mrf.mxu0
      %v1627 = vadd.f32 0.0, %v1626
      %1628 = vdwg.mxu0
      %1629 = vmatpush.bf16.msra.mxu0 0
      %1630 = vmatpush.bf16.msra.mxu0 0
      %1631 = vmatpush.bf16.msra.mxu0 0
      %1632 = vmatpush.bf16.msra.mxu0 0
      %1633 = vmatpush.bf16.msra.mxu0 0
      %1634 = vmatpush.bf16.msra.mxu0 0
      %1635 = vmatpush.bf16.msra.mxu0 0
      %1636 = vmatpush.bf16.msra.mxu0 %v1573
      %1637 = vmatmul.bf16.gmra.mxu0 %v1561
      %v1638 = vpop.f32.mrf.mxu0
      %v1639 = vadd.f32 0.0, %v1638
      %v1640 = vpop.f32.mrf.mxu0
      %v1641 = vadd.f32 0.0, %v1640
      %1642 = vdwg.mxu0
      %1643 = vmatpush.bf16.msra.mxu0 0
      %1644 = vmatpush.bf16.msra.mxu0 0
      %1645 = vmatpush.bf16.msra.mxu0 0
      %1646 = vmatpush.bf16.msra.mxu0 0
      %1647 = vmatpush.bf16.msra.mxu0 0
      %1648 = vmatpush.bf16.msra.mxu0 0
      %1649 = vmatpush.bf16.msra.mxu0 0
      %1650 = vmatpush.bf16.msra.mxu0 %v1576
      %1651 = vmatmul.bf16.gmra.mxu0 %v1561
      %v1652 = vpop.f32.mrf.mxu0
      %v1653 = vadd.f32 0.0, %v1652
      %v1654 = vpop.f32.mrf.mxu0
      %v1655 = vadd.f32 0.0, %v1654
      %1656 = vdwg.mxu0
      %1657 = vmatpush.bf16.msra.mxu0 0
      %1658 = vmatpush.bf16.msra.mxu0 0
      %1659 = vmatpush.bf16.msra.mxu0 0
      %1660 = vmatpush.bf16.msra.mxu0 0
      %1661 = vmatpush.bf16.msra.mxu0 0
      %1662 = vmatpush.bf16.msra.mxu0 0
      %1663 = vmatpush.bf16.msra.mxu0 0
      %1664 = vmatpush.bf16.msra.mxu0 %v1579
      %1665 = vmatmul.bf16.gmra.mxu0 %v1561
      %v1666 = vpop.f32.mrf.mxu0
      %v1667 = vadd.f32 0.0, %v1666
      %v1668 = vpop.f32.mrf.mxu0
      %v1669 = vadd.f32 0.0, %v1668
      %1670 = vdwg.mxu0
      %1671 = vmatpush.bf16.msra.mxu0 0
      %1672 = vmatpush.bf16.msra.mxu0 0
      %1673 = vmatpush.bf16.msra.mxu0 0
      %1674 = vmatpush.bf16.msra.mxu0 0
      %1675 = vmatpush.bf16.msra.mxu0 0
      %1676 = vmatpush.bf16.msra.mxu0 0
      %1677 = vmatpush.bf16.msra.mxu0 0
      %1678 = vmatpush.bf16.msra.mxu0 %v1582
      %1679 = vmatmul.bf16.gmra.mxu0 %v1561
      %v1680 = vpop.f32.mrf.mxu0
      %v1681 = vadd.f32 0.0, %v1680
      %v1682 = vpop.f32.mrf.mxu0
      %v1683 = vadd.f32 0.0, %v1682
      %1684 = vdwg.mxu0
      %1685 = vmatpush.bf16.msra.mxu0 0
      %1686 = vmatpush.bf16.msra.mxu0 0
      %1687 = vmatpush.bf16.msra.mxu0 0
      %1688 = vmatpush.bf16.msra.mxu0 0
      %1689 = vmatpush.bf16.msra.mxu0 0
      %1690 = vmatpush.bf16.msra.mxu0 0
      %1691 = vmatpush.bf16.msra.mxu0 0
      %1692 = vmatpush.bf16.msra.mxu0 %v1585
      %1693 = vmatmul.bf16.gmra.mxu0 %v1561
      %v1694 = vpop.f32.mrf.mxu0
      %v1695 = vadd.f32 0.0, %v1694
      %v1696 = vpop.f32.mrf.mxu0
      %v1697 = vadd.f32 0.0, %v1696
      %1698 = vdwg.mxu0
      %v1699 = vadd.f32 %v1446, %v1597
      %v1700 = vadd.f32 %v1447, %v1611
      %v1701 = vadd.f32 %v1448, %v1625
      %v1702 = vadd.f32 %v1449, %v1639
      %v1703 = vadd.f32 %v1450, %v1653
      %v1704 = vadd.f32 %v1451, %v1667
      %v1705 = vadd.f32 %v1452, %v1681
      %v1706 = vadd.f32 %v1453, %v1695
      %v1707 = vadd.f32 %v1454, %v1599
      %v1708 = vadd.f32 %v1455, %v1613
      %v1709 = vadd.f32 %v1456, %v1627
      %v1710 = vadd.f32 %v1457, %v1641
      %v1711 = vadd.f32 %v1458, %v1655
      %v1712 = vadd.f32 %v1459, %v1669
      %v1713 = vadd.f32 %v1460, %v1683
      %v1714 = vadd.f32 %v1461, %v1697
      %1715 = vst [vmem:[#allocation1] ss:$2 sm:$0xff] %v280
      %s1716 = scalar_lea.vmem [#allocation1], 16
      %1717 = vst [vmem:[%s1716] ss:$2 sm:$0xff] %v281
      %s1718 = scalar_lea.vmem [#allocation1], 32
      %1719 = vst [vmem:[%s1718] ss:$2 sm:$0xff] %v282
      %s1720 = scalar_lea.vmem [#allocation1], 48
      %1721 = vst [vmem:[%s1720] ss:$2 sm:$0xff] %v283
      %v1722 = vld.sshfl [vmem:[#allocation1] sm:$0xff pattern:$0x75316420]
      %v1723 = vld.sshfl [vmem:[#allocation1 + $0x8] sm:$0xff pattern:$0x75316420]
      %v1724 = vld.sshfl [vmem:[#allocation1 + $0x10] sm:$0xff pattern:$0x75316420]
      %v1725 = vld.sshfl [vmem:[#allocation1 + $0x18] sm:$0xff pattern:$0x75316420]
      %v1726 = vld.sshfl [vmem:[#allocation1 + $0x20] sm:$0xff pattern:$0x75316420]
      %v1727 = vld.sshfl [vmem:[#allocation1 + $0x28] sm:$0xff pattern:$0x75316420]
      %v1728 = vld.sshfl [vmem:[#allocation1 + $0x30] sm:$0xff pattern:$0x75316420]
      %v1729 = vld.sshfl [vmem:[#allocation1 + $0x38] sm:$0xff pattern:$0x75316420]
      %1730 = vrot.lane.b32.xlu0 %v1722, 113
      %v1731 = vpop.permute.xlu0 %1730
      %1732 = vrot.lane.b32.xlu0 %v1723, 113
      %v1733 = vpop.permute.xlu0 %1732
      %1734 = vrot.lane.b32.xlu0 %v1724, 113
      %v1735 = vpop.permute.xlu0 %1734
      %1736 = vrot.lane.b32.xlu0 %v1725, 113
      %v1737 = vpop.permute.xlu0 %1736
      %1738 = vrot.lane.b32.xlu0 %v1726, 113
      %v1739 = vpop.permute.xlu0 %1738
      %1740 = vrot.lane.b32.xlu0 %v1727, 113
      %v1741 = vpop.permute.xlu0 %1740
      %1742 = vrot.lane.b32.xlu0 %v1728, 113
      %v1743 = vpop.permute.xlu0 %1742
      %1744 = vrot.lane.b32.xlu0 %v1729, 113
      %v1745 = vpop.permute.xlu0 %1744
      %vm1746 = vcmask 924672
      %v1747 = vsel %vm1746, %v1731, %v1733
      %v1748 = vsel %vm1746, %v1733, %v1735
      %v1749 = vsel %vm1746, %v1735, %v1737
      %v1750 = vsel %vm1746, %v1737, %v1739
      %v1751 = vsel %vm1746, %v1739, %v1741
      %v1752 = vsel %vm1746, %v1741, %v1743
      %v1753 = vsel %vm1746, %v1743, %v1745
      %1762 = vst [vmem:[#allocation1] ss:$2 sm:$0xff] %v280
      %v1763 = vld.sshfl [vmem:[#allocation1] sm:$0xff pattern:$0x75316420]
      %1764 = vrot.lane.b32.xlu0 %v1763, 113
      %v1765 = vpop.permute.xlu0 %1764
      %v1767 = vsel %vm1746, %v1745, %v1765
      %s1768 = scalar_lea.vmem %s5, 6
      %v1769 = vld [vmem:[%s1768] ss:$8 sm:$0xf]
      %v1770 = vld [vmem:[%s1768] ss:$8 sm:$0xf0]
      %v1771 = vor.u32 %v1769, %v1770
      %v1773 = vperm.slane %v1771, 0
      %v1774 = vperm.slane %v1771, 1
      %v1775 = vperm.slane %v1771, 2
      %v1776 = vperm.slane %v1771, 3
      %v1777 = vperm.slane %v1771, 4
      %v1778 = vperm.slane %v1771, 5
      %v1779 = vperm.slane %v1771, 6
      %v1780 = vperm.slane %v1771, 7
      %v1789 = vmul.f32 %v1747, %v1773
      %v1790 = vmul.f32 %v1748, %v1774
      %v1791 = vmul.f32 %v1749, %v1775
      %v1792 = vmul.f32 %v1750, %v1776
      %v1793 = vmul.f32 %v1751, %v1777
      %v1794 = vmul.f32 %v1752, %v1778
      %v1795 = vmul.f32 %v1753, %v1779
      %v1796 = vmul.f32 %v1767, %v1780
      %s1797 = scalar_lea.vmem %s1, 48
      %v1798 = vld [vmem:[%s1797] sm:$0xf]
      %v1799 = vld [vmem:[%s1797 + $0x4] sm:$0x3]
      %v1800 = vpack.c.bf16 %v1789, %v1789
      %v1801 = vpack.c.bf16 %v1790, %v1790
      %v1802 = vpack.c.bf16 %v1791, %v1791
      %v1803 = vpack.c.bf16 %v1792, %v1792
      %v1804 = vpack.c.bf16 %v1793, %v1793
      %v1805 = vpack.c.bf16 %v1794, %v1794
      %v1806 = vpack.c.bf16 %v1795, %v1795
      %v1807 = vpack.c.bf16 %v1796, %v1796
      %v1810 = vunpack.c.l.b16 %v1798
      %v1811 = vunpack.c.l.b16 %v1799
      %v1812 = vpack.c.b16 %v1811, %v1810
      %v1814 = vsel %vm477, %v1812, 0
      %v1817 = vsel %vm481, %v1800, 0
      %v1820 = vsel %vm481, %v1801, 0
      %v1823 = vsel %vm481, %v1802, 0
      %v1826 = vsel %vm481, %v1803, 0
      %v1829 = vsel %vm481, %v1804, 0
      %v1832 = vsel %vm481, %v1805, 0
      %v1835 = vsel %vm481, %v1806, 0
      %v1838 = vsel %vm481, %v1807, 0
      %1840 = vmatpush.bf16.msra.mxu0 0
      %1841 = vmatpush.bf16.msra.mxu0 0
      %1842 = vmatpush.bf16.msra.mxu0 0
      %1843 = vmatpush.bf16.msra.mxu0 0
      %1844 = vmatpush.bf16.msra.mxu0 0
      %1845 = vmatpush.bf16.msra.mxu0 0
      %1846 = vmatpush.bf16.msra.mxu0 0
      %1847 = vmatpush.bf16.msra.mxu0 %v1817
      %1848 = vmatmul.bf16.gmra.mxu0 %v1814
      %v1849 = vpop.f32.mrf.mxu0
      %v1850 = vadd.f32 0.0, %v1849
      %v1851 = vpop.f32.mrf.mxu0
      %v1852 = vadd.f32 0.0, %v1851
      %1853 = vdwg.mxu0
      %1854 = vmatpush.bf16.msra.mxu0 0
      %1855 = vmatpush.bf16.msra.mxu0 0
      %1856 = vmatpush.bf16.msra.mxu0 0
      %1857 = vmatpush.bf16.msra.mxu0 0
      %1858 = vmatpush.bf16.msra.mxu0 0
      %1859 = vmatpush.bf16.msra.mxu0 0
      %1860 = vmatpush.bf16.msra.mxu0 0
      %1861 = vmatpush.bf16.msra.mxu0 %v1820
      %1862 = vmatmul.bf16.gmra.mxu0 %v1814
      %v1863 = vpop.f32.mrf.mxu0
      %v1864 = vadd.f32 0.0, %v1863
      %v1865 = vpop.f32.mrf.mxu0
      %v1866 = vadd.f32 0.0, %v1865
      %1867 = vdwg.mxu0
      %1868 = vmatpush.bf16.msra.mxu0 0
      %1869 = vmatpush.bf16.msra.mxu0 0
      %1870 = vmatpush.bf16.msra.mxu0 0
      %1871 = vmatpush.bf16.msra.mxu0 0
      %1872 = vmatpush.bf16.msra.mxu0 0
      %1873 = vmatpush.bf16.msra.mxu0 0
      %1874 = vmatpush.bf16.msra.mxu0 0
      %1875 = vmatpush.bf16.msra.mxu0 %v1823
      %1876 = vmatmul.bf16.gmra.mxu0 %v1814
      %v1877 = vpop.f32.mrf.mxu0
      %v1878 = vadd.f32 0.0, %v1877
      %v1879 = vpop.f32.mrf.mxu0
      %v1880 = vadd.f32 0.0, %v1879
      %1881 = vdwg.mxu0
      %1882 = vmatpush.bf16.msra.mxu0 0
      %1883 = vmatpush.bf16.msra.mxu0 0
      %1884 = vmatpush.bf16.msra.mxu0 0
      %1885 = vmatpush.bf16.msra.mxu0 0
      %1886 = vmatpush.bf16.msra.mxu0 0
      %1887 = vmatpush.bf16.msra.mxu0 0
      %1888 = vmatpush.bf16.msra.mxu0 0
      %1889 = vmatpush.bf16.msra.mxu0 %v1826
      %1890 = vmatmul.bf16.gmra.mxu0 %v1814
      %v1891 = vpop.f32.mrf.mxu0
      %v1892 = vadd.f32 0.0, %v1891
      %v1893 = vpop.f32.mrf.mxu0
      %v1894 = vadd.f32 0.0, %v1893
      %1895 = vdwg.mxu0
      %1896 = vmatpush.bf16.msra.mxu0 0
      %1897 = vmatpush.bf16.msra.mxu0 0
      %1898 = vmatpush.bf16.msra.mxu0 0
      %1899 = vmatpush.bf16.msra.mxu0 0
      %1900 = vmatpush.bf16.msra.mxu0 0
      %1901 = vmatpush.bf16.msra.mxu0 0
      %1902 = vmatpush.bf16.msra.mxu0 0
      %1903 = vmatpush.bf16.msra.mxu0 %v1829
      %1904 = vmatmul.bf16.gmra.mxu0 %v1814
      %v1905 = vpop.f32.mrf.mxu0
      %v1906 = vadd.f32 0.0, %v1905
      %v1907 = vpop.f32.mrf.mxu0
      %v1908 = vadd.f32 0.0, %v1907
      %1909 = vdwg.mxu0
      %1910 = vmatpush.bf16.msra.mxu0 0
      %1911 = vmatpush.bf16.msra.mxu0 0
      %1912 = vmatpush.bf16.msra.mxu0 0
      %1913 = vmatpush.bf16.msra.mxu0 0
      %1914 = vmatpush.bf16.msra.mxu0 0
      %1915 = vmatpush.bf16.msra.mxu0 0
      %1916 = vmatpush.bf16.msra.mxu0 0
      %1917 = vmatpush.bf16.msra.mxu0 %v1832
      %1918 = vmatmul.bf16.gmra.mxu0 %v1814
      %v1919 = vpop.f32.mrf.mxu0
      %v1920 = vadd.f32 0.0, %v1919
      %v1921 = vpop.f32.mrf.mxu0
      %v1922 = vadd.f32 0.0, %v1921
      %1923 = vdwg.mxu0
      %1924 = vmatpush.bf16.msra.mxu0 0
      %1925 = vmatpush.bf16.msra.mxu0 0
      %1926 = vmatpush.bf16.msra.mxu0 0
      %1927 = vmatpush.bf16.msra.mxu0 0
      %1928 = vmatpush.bf16.msra.mxu0 0
      %1929 = vmatpush.bf16.msra.mxu0 0
      %1930 = vmatpush.bf16.msra.mxu0 0
      %1931 = vmatpush.bf16.msra.mxu0 %v1835
      %1932 = vmatmul.bf16.gmra.mxu0 %v1814
      %v1933 = vpop.f32.mrf.mxu0
      %v1934 = vadd.f32 0.0, %v1933
      %v1935 = vpop.f32.mrf.mxu0
      %v1936 = vadd.f32 0.0, %v1935
      %1937 = vdwg.mxu0
      %1938 = vmatpush.bf16.msra.mxu0 0
      %1939 = vmatpush.bf16.msra.mxu0 0
      %1940 = vmatpush.bf16.msra.mxu0 0
      %1941 = vmatpush.bf16.msra.mxu0 0
      %1942 = vmatpush.bf16.msra.mxu0 0
      %1943 = vmatpush.bf16.msra.mxu0 0
      %1944 = vmatpush.bf16.msra.mxu0 0
      %1945 = vmatpush.bf16.msra.mxu0 %v1838
      %1946 = vmatmul.bf16.gmra.mxu0 %v1814
      %v1947 = vpop.f32.mrf.mxu0
      %v1948 = vadd.f32 0.0, %v1947
      %v1949 = vpop.f32.mrf.mxu0
      %v1950 = vadd.f32 0.0, %v1949
      %1951 = vdwg.mxu0
      %v1952 = vadd.f32 %v1699, %v1850
      %v1953 = vadd.f32 %v1700, %v1864
      %v1954 = vadd.f32 %v1701, %v1878
      %v1955 = vadd.f32 %v1702, %v1892
      %v1956 = vadd.f32 %v1703, %v1906
      %v1957 = vadd.f32 %v1704, %v1920
      %v1958 = vadd.f32 %v1705, %v1934
      %v1959 = vadd.f32 %v1706, %v1948
      %v1960 = vadd.f32 %v1707, %v1852
      %v1961 = vadd.f32 %v1708, %v1866
      %v1962 = vadd.f32 %v1709, %v1880
      %v1963 = vadd.f32 %v1710, %v1894
      %v1964 = vadd.f32 %v1711, %v1908
      %v1965 = vadd.f32 %v1712, %v1922
      %v1966 = vadd.f32 %v1713, %v1936
      %v1967 = vadd.f32 %v1714, %v1950
      %1968 = vst [vmem:[#allocation1] ss:$2 sm:$0xff] %v280
      %s1969 = scalar_lea.vmem [#allocation1], 16
      %1970 = vst [vmem:[%s1969] ss:$2 sm:$0xff] %v281
      %s1971 = scalar_lea.vmem [#allocation1], 32
      %1972 = vst [vmem:[%s1971] ss:$2 sm:$0xff] %v282
      %s1973 = scalar_lea.vmem [#allocation1], 48
      %1974 = vst [vmem:[%s1973] ss:$2 sm:$0xff] %v283
      %v1975 = vld.sshfl [vmem:[#allocation1] sm:$0xff pattern:$0x75316420]
      %v1976 = vld.sshfl [vmem:[#allocation1 + $0x8] sm:$0xff pattern:$0x75316420]
      %v1977 = vld.sshfl [vmem:[#allocation1 + $0x10] sm:$0xff pattern:$0x75316420]
      %v1978 = vld.sshfl [vmem:[#allocation1 + $0x18] sm:$0xff pattern:$0x75316420]
      %v1979 = vld.sshfl [vmem:[#allocation1 + $0x20] sm:$0xff pattern:$0x75316420]
      %v1980 = vld.sshfl [vmem:[#allocation1 + $0x28] sm:$0xff pattern:$0x75316420]
      %v1981 = vld.sshfl [vmem:[#allocation1 + $0x30] sm:$0xff pattern:$0x75316420]
      %v1982 = vld.sshfl [vmem:[#allocation1 + $0x38] sm:$0xff pattern:$0x75316420]
      %1983 = vrot.lane.b32.xlu0 %v1975, 112
      %v1984 = vpop.permute.xlu0 %1983
      %1985 = vrot.lane.b32.xlu0 %v1976, 112
      %v1986 = vpop.permute.xlu0 %1985
      %1987 = vrot.lane.b32.xlu0 %v1977, 112
      %v1988 = vpop.permute.xlu0 %1987
      %1989 = vrot.lane.b32.xlu0 %v1978, 112
      %v1990 = vpop.permute.xlu0 %1989
      %1991 = vrot.lane.b32.xlu0 %v1979, 112
      %v1992 = vpop.permute.xlu0 %1991
      %1993 = vrot.lane.b32.xlu0 %v1980, 112
      %v1994 = vpop.permute.xlu0 %1993
      %1995 = vrot.lane.b32.xlu0 %v1981, 112
      %v1996 = vpop.permute.xlu0 %1995
      %1997 = vrot.lane.b32.xlu0 %v1982, 112
      %v1998 = vpop.permute.xlu0 %1997
      %vm1999 = vcmask 916480
      %v2000 = vsel %vm1999, %v1984, %v1986
      %v2001 = vsel %vm1999, %v1986, %v1988
      %v2002 = vsel %vm1999, %v1988, %v1990
      %v2003 = vsel %vm1999, %v1990, %v1992
      %v2004 = vsel %vm1999, %v1992, %v1994
      %v2005 = vsel %vm1999, %v1994, %v1996
      %v2006 = vsel %vm1999, %v1996, %v1998
      %2015 = vst [vmem:[#allocation1] ss:$2 sm:$0xff] %v280
      %v2016 = vld.sshfl [vmem:[#allocation1] sm:$0xff pattern:$0x75316420]
      %2017 = vrot.lane.b32.xlu0 %v2016, 112
      %v2018 = vpop.permute.xlu0 %2017
      %v2020 = vsel %vm1999, %v1998, %v2018
      %s2021 = scalar_lea.vmem %s5, 7
      %v2022 = vld [vmem:[%s2021] ss:$8 sm:$0xf]
      %v2023 = vld [vmem:[%s2021] ss:$8 sm:$0xf0]
      %v2024 = vor.u32 %v2022, %v2023
      %v2026 = vperm.slane %v2024, 0
      %v2027 = vperm.slane %v2024, 1
      %v2028 = vperm.slane %v2024, 2
      %v2029 = vperm.slane %v2024, 3
      %v2030 = vperm.slane %v2024, 4
      %v2031 = vperm.slane %v2024, 5
      %v2032 = vperm.slane %v2024, 6
      %v2033 = vperm.slane %v2024, 7
      %v2042 = vmul.f32 %v2000, %v2026
      %v2043 = vmul.f32 %v2001, %v2027
      %v2044 = vmul.f32 %v2002, %v2028
      %v2045 = vmul.f32 %v2003, %v2029
      %v2046 = vmul.f32 %v2004, %v2030
      %v2047 = vmul.f32 %v2005, %v2031
      %v2048 = vmul.f32 %v2006, %v2032
      %v2049 = vmul.f32 %v2020, %v2033
      %s2050 = scalar_lea.vmem %s1, 56
      %v2051 = vld [vmem:[%s2050] sm:$0xf]
      %v2052 = vld [vmem:[%s2050 + $0x4] sm:$0x3]
      %v2053 = vpack.c.bf16 %v2042, %v2042
      %v2054 = vpack.c.bf16 %v2043, %v2043
      %v2055 = vpack.c.bf16 %v2044, %v2044
      %v2056 = vpack.c.bf16 %v2045, %v2045
      %v2057 = vpack.c.bf16 %v2046, %v2046
      %v2058 = vpack.c.bf16 %v2047, %v2047
      %v2059 = vpack.c.bf16 %v2048, %v2048
      %v2060 = vpack.c.bf16 %v2049, %v2049
      %v2063 = vunpack.c.l.b16 %v2051
      %v2064 = vunpack.c.l.b16 %v2052
      %v2065 = vpack.c.b16 %v2064, %v2063
      %v2067 = vsel %vm477, %v2065, 0
      %v2070 = vsel %vm481, %v2053, 0
      %v2073 = vsel %vm481, %v2054, 0
      %v2076 = vsel %vm481, %v2055, 0
      %v2079 = vsel %vm481, %v2056, 0
      %v2082 = vsel %vm481, %v2057, 0
      %v2085 = vsel %vm481, %v2058, 0
      %v2088 = vsel %vm481, %v2059, 0
      %v2091 = vsel %vm481, %v2060, 0
      %2093 = vmatpush.bf16.msra.mxu0 0
      %2094 = vmatpush.bf16.msra.mxu0 0
      %2095 = vmatpush.bf16.msra.mxu0 0
      %2096 = vmatpush.bf16.msra.mxu0 0
      %2097 = vmatpush.bf16.msra.mxu0 0
      %2098 = vmatpush.bf16.msra.mxu0 0
      %2099 = vmatpush.bf16.msra.mxu0 0
      %2100 = vmatpush.bf16.msra.mxu0 %v2070
      %2101 = vmatmul.bf16.gmra.mxu0 %v2067
      %v2102 = vpop.f32.mrf.mxu0
      %v2103 = vadd.f32 0.0, %v2102
      %v2104 = vpop.f32.mrf.mxu0
      %v2105 = vadd.f32 0.0, %v2104
      %2106 = vdwg.mxu0
      %2107 = vmatpush.bf16.msra.mxu0 0
      %2108 = vmatpush.bf16.msra.mxu0 0
      %2109 = vmatpush.bf16.msra.mxu0 0
      %2110 = vmatpush.bf16.msra.mxu0 0
      %2111 = vmatpush.bf16.msra.mxu0 0
      %2112 = vmatpush.bf16.msra.mxu0 0
      %2113 = vmatpush.bf16.msra.mxu0 0
      %2114 = vmatpush.bf16.msra.mxu0 %v2073
      %2115 = vmatmul.bf16.gmra.mxu0 %v2067
      %v2116 = vpop.f32.mrf.mxu0
      %v2117 = vadd.f32 0.0, %v2116
      %v2118 = vpop.f32.mrf.mxu0
      %v2119 = vadd.f32 0.0, %v2118
      %2120 = vdwg.mxu0
      %2121 = vmatpush.bf16.msra.mxu0 0
      %2122 = vmatpush.bf16.msra.mxu0 0
      %2123 = vmatpush.bf16.msra.mxu0 0
      %2124 = vmatpush.bf16.msra.mxu0 0
      %2125 = vmatpush.bf16.msra.mxu0 0
      %2126 = vmatpush.bf16.msra.mxu0 0
      %2127 = vmatpush.bf16.msra.mxu0 0
      %2128 = vmatpush.bf16.msra.mxu0 %v2076
      %2129 = vmatmul.bf16.gmra.mxu0 %v2067
      %v2130 = vpop.f32.mrf.mxu0
      %v2131 = vadd.f32 0.0, %v2130
      %v2132 = vpop.f32.mrf.mxu0
      %v2133 = vadd.f32 0.0, %v2132
      %2134 = vdwg.mxu0
      %2135 = vmatpush.bf16.msra.mxu0 0
      %2136 = vmatpush.bf16.msra.mxu0 0
      %2137 = vmatpush.bf16.msra.mxu0 0
      %2138 = vmatpush.bf16.msra.mxu0 0
      %2139 = vmatpush.bf16.msra.mxu0 0
      %2140 = vmatpush.bf16.msra.mxu0 0
      %2141 = vmatpush.bf16.msra.mxu0 0
      %2142 = vmatpush.bf16.msra.mxu0 %v2079
      %2143 = vmatmul.bf16.gmra.mxu0 %v2067
      %v2144 = vpop.f32.mrf.mxu0
      %v2145 = vadd.f32 0.0, %v2144
      %v2146 = vpop.f32.mrf.mxu0
      %v2147 = vadd.f32 0.0, %v2146
      %2148 = vdwg.mxu0
      %2149 = vmatpush.bf16.msra.mxu0 0
      %2150 = vmatpush.bf16.msra.mxu0 0
      %2151 = vmatpush.bf16.msra.mxu0 0
      %2152 = vmatpush.bf16.msra.mxu0 0
      %2153 = vmatpush.bf16.msra.mxu0 0
      %2154 = vmatpush.bf16.msra.mxu0 0
      %2155 = vmatpush.bf16.msra.mxu0 0
      %2156 = vmatpush.bf16.msra.mxu0 %v2082
      %2157 = vmatmul.bf16.gmra.mxu0 %v2067
      %v2158 = vpop.f32.mrf.mxu0
      %v2159 = vadd.f32 0.0, %v2158
      %v2160 = vpop.f32.mrf.mxu0
      %v2161 = vadd.f32 0.0, %v2160
      %2162 = vdwg.mxu0
      %2163 = vmatpush.bf16.msra.mxu0 0
      %2164 = vmatpush.bf16.msra.mxu0 0
      %2165 = vmatpush.bf16.msra.mxu0 0
      %2166 = vmatpush.bf16.msra.mxu0 0
      %2167 = vmatpush.bf16.msra.mxu0 0
      %2168 = vmatpush.bf16.msra.mxu0 0
      %2169 = vmatpush.bf16.msra.mxu0 0
      %2170 = vmatpush.bf16.msra.mxu0 %v2085
      %2171 = vmatmul.bf16.gmra.mxu0 %v2067
      %v2172 = vpop.f32.mrf.mxu0
      %v2173 = vadd.f32 0.0, %v2172
      %v2174 = vpop.f32.mrf.mxu0
      %v2175 = vadd.f32 0.0, %v2174
      %2176 = vdwg.mxu0
      %2177 = vmatpush.bf16.msra.mxu0 0
      %2178 = vmatpush.bf16.msra.mxu0 0
      %2179 = vmatpush.bf16.msra.mxu0 0
      %2180 = vmatpush.bf16.msra.mxu0 0
      %2181 = vmatpush.bf16.msra.mxu0 0
      %2182 = vmatpush.bf16.msra.mxu0 0
      %2183 = vmatpush.bf16.msra.mxu0 0
      %2184 = vmatpush.bf16.msra.mxu0 %v2088
      %2185 = vmatmul.bf16.gmra.mxu0 %v2067
      %v2186 = vpop.f32.mrf.mxu0
      %v2187 = vadd.f32 0.0, %v2186
      %v2188 = vpop.f32.mrf.mxu0
      %v2189 = vadd.f32 0.0, %v2188
      %2190 = vdwg.mxu0
      %2191 = vmatpush.bf16.msra.mxu0 0
      %2192 = vmatpush.bf16.msra.mxu0 0
      %2193 = vmatpush.bf16.msra.mxu0 0
      %2194 = vmatpush.bf16.msra.mxu0 0
      %2195 = vmatpush.bf16.msra.mxu0 0
      %2196 = vmatpush.bf16.msra.mxu0 0
      %2197 = vmatpush.bf16.msra.mxu0 0
      %2198 = vmatpush.bf16.msra.mxu0 %v2091
      %2199 = vmatmul.bf16.gmra.mxu0 %v2067
      %v2200 = vpop.f32.mrf.mxu0
      %v2201 = vadd.f32 0.0, %v2200
      %v2202 = vpop.f32.mrf.mxu0
      %v2203 = vadd.f32 0.0, %v2202
      %2204 = vdwg.mxu0
      %v2205 = vadd.f32 %v1952, %v2103
      %v2206 = vadd.f32 %v1953, %v2117
      %v2207 = vadd.f32 %v1954, %v2131
      %v2208 = vadd.f32 %v1955, %v2145
      %v2209 = vadd.f32 %v1956, %v2159
      %v2210 = vadd.f32 %v1957, %v2173
      %v2211 = vadd.f32 %v1958, %v2187
      %v2212 = vadd.f32 %v1959, %v2201
      %v2213 = vadd.f32 %v1960, %v2105
      %v2214 = vadd.f32 %v1961, %v2119
      %v2215 = vadd.f32 %v1962, %v2133
      %v2216 = vadd.f32 %v1963, %v2147
      %v2217 = vadd.f32 %v1964, %v2161
      %v2218 = vadd.f32 %v1965, %v2175
      %v2219 = vadd.f32 %v1966, %v2189
      %v2220 = vadd.f32 %v1967, %v2203
      %2221 = vst [vmem:[#allocation1] ss:$2 sm:$0xff] %v280
      %s2222 = scalar_lea.vmem [#allocation1], 16
      %2223 = vst [vmem:[%s2222] ss:$2 sm:$0xff] %v281
      %s2224 = scalar_lea.vmem [#allocation1], 32
      %2225 = vst [vmem:[%s2224] ss:$2 sm:$0xff] %v282
      %s2226 = scalar_lea.vmem [#allocation1], 48
      %2227 = vst [vmem:[%s2226] ss:$2 sm:$0xff] %v283
      %v2228 = vld.sshfl [vmem:[#allocation1] sm:$0xff pattern:$0x75316420]
      %v2229 = vld.sshfl [vmem:[#allocation1 + $0x8] sm:$0xff pattern:$0x75316420]
      %v2230 = vld.sshfl [vmem:[#allocation1 + $0x10] sm:$0xff pattern:$0x75316420]
      %v2231 = vld.sshfl [vmem:[#allocation1 + $0x18] sm:$0xff pattern:$0x75316420]
      %v2232 = vld.sshfl [vmem:[#allocation1 + $0x20] sm:$0xff pattern:$0x75316420]
      %v2233 = vld.sshfl [vmem:[#allocation1 + $0x28] sm:$0xff pattern:$0x75316420]
      %v2234 = vld.sshfl [vmem:[#allocation1 + $0x30] sm:$0xff pattern:$0x75316420]
      %v2235 = vld.sshfl [vmem:[#allocation1 + $0x38] sm:$0xff pattern:$0x75316420]
      %2236 = vrot.lane.b32.xlu0 %v2228, 111
      %v2237 = vpop.permute.xlu0 %2236
      %2238 = vrot.lane.b32.xlu0 %v2229, 111
      %v2239 = vpop.permute.xlu0 %2238
      %2240 = vrot.lane.b32.xlu0 %v2230, 111
      %v2241 = vpop.permute.xlu0 %2240
      %2242 = vrot.lane.b32.xlu0 %v2231, 111
      %v2243 = vpop.permute.xlu0 %2242
      %2244 = vrot.lane.b32.xlu0 %v2232, 111
      %v2245 = vpop.permute.xlu0 %2244
      %2246 = vrot.lane.b32.xlu0 %v2233, 111
      %v2247 = vpop.permute.xlu0 %2246
      %2248 = vrot.lane.b32.xlu0 %v2234, 111
      %v2249 = vpop.permute.xlu0 %2248
      %2250 = vrot.lane.b32.xlu0 %v2235, 111
      %v2251 = vpop.permute.xlu0 %2250
      %vm2252 = vcmask 908288
      %v2253 = vsel %vm2252, %v2237, %v2239
      %v2254 = vsel %vm2252, %v2239, %v2241
      %v2255 = vsel %vm2252, %v2241, %v2243
      %v2256 = vsel %vm2252, %v2243, %v2245
      %v2257 = vsel %vm2252, %v2245, %v2247
      %v2258 = vsel %vm2252, %v2247, %v2249
      %v2259 = vsel %vm2252, %v2249, %v2251
      %2268 = vst [vmem:[#allocation1] ss:$2 sm:$0xff] %v280
      %v2269 = vld.sshfl [vmem:[#allocation1] sm:$0xff pattern:$0x75316420]
      %2270 = vrot.lane.b32.xlu0 %v2269, 111
      %v2271 = vpop.permute.xlu0 %2270
      %v2273 = vsel %vm2252, %v2251, %v2271
      %s2274 = scalar_lea.vmem %s5, 64
      %v2275 = vld [vmem:[%s2274] ss:$8 sm:$0xf]
      %v2276 = vld [vmem:[%s2274] ss:$8 sm:$0xf0]
      %v2277 = vor.u32 %v2275, %v2276
      %v2279 = vperm.slane %v2277, 0
      %v2280 = vperm.slane %v2277, 1
      %v2281 = vperm.slane %v2277, 2
      %v2282 = vperm.slane %v2277, 3
      %v2283 = vperm.slane %v2277, 4
      %v2284 = vperm.slane %v2277, 5
      %v2285 = vperm.slane %v2277, 6
      %v2286 = vperm.slane %v2277, 7
      %v2295 = vmul.f32 %v2253, %v2279
      %v2296 = vmul.f32 %v2254, %v2280
      %v2297 = vmul.f32 %v2255, %v2281
      %v2298 = vmul.f32 %v2256, %v2282
      %v2299 = vmul.f32 %v2257, %v2283
      %v2300 = vmul.f32 %v2258, %v2284
      %v2301 = vmul.f32 %v2259, %v2285
      %v2302 = vmul.f32 %v2273, %v2286
      %s2303 = scalar_lea.vmem %s1, 64
      %v2304 = vld [vmem:[%s2303] sm:$0xf]
      %v2305 = vld [vmem:[%s2303 + $0x4] sm:$0x3]
      %v2306 = vpack.c.bf16 %v2295, %v2295
      %v2307 = vpack.c.bf16 %v2296, %v2296
      %v2308 = vpack.c.bf16 %v2297, %v2297
      %v2309 = vpack.c.bf16 %v2298, %v2298
      %v2310 = vpack.c.bf16 %v2299, %v2299
      %v2311 = vpack.c.bf16 %v2300, %v2300
      %v2312 = vpack.c.bf16 %v2301, %v2301
      %v2313 = vpack.c.bf16 %v2302, %v2302
      %v2316 = vunpack.c.l.b16 %v2304
      %v2317 = vunpack.c.l.b16 %v2305
      %v2318 = vpack.c.b16 %v2317, %v2316
      %v2320 = vsel %vm477, %v2318, 0
      %v2323 = vsel %vm481, %v2306, 0
      %v2326 = vsel %vm481, %v2307, 0
      %v2329 = vsel %vm481, %v2308, 0
      %v2332 = vsel %vm481, %v2309, 0
      %v2335 = vsel %vm481, %v2310, 0
      %v2338 = vsel %vm481, %v2311, 0
      %v2341 = vsel %vm481, %v2312, 0
      %v2344 = vsel %vm481, %v2313, 0
      %2346 = vmatpush.bf16.msra.mxu0 0
      %2347 = vmatpush.bf16.msra.mxu0 0
      %2348 = vmatpush.bf16.msra.mxu0 0
      %2349 = vmatpush.bf16.msra.mxu0 0
      %2350 = vmatpush.bf16.msra.mxu0 0
      %2351 = vmatpush.bf16.msra.mxu0 0
      %2352 = vmatpush.bf16.msra.mxu0 0
      %2353 = vmatpush.bf16.msra.mxu0 %v2323
      %2354 = vmatmul.bf16.gmra.mxu0 %v2320
      %v2355 = vpop.f32.mrf.mxu0
      %v2356 = vadd.f32 0.0, %v2355
      %v2357 = vpop.f32.mrf.mxu0
      %v2358 = vadd.f32 0.0, %v2357
      %2359 = vdwg.mxu0
      %2360 = vmatpush.bf16.msra.mxu0 0
      %2361 = vmatpush.bf16.msra.mxu0 0
      %2362 = vmatpush.bf16.msra.mxu0 0
      %2363 = vmatpush.bf16.msra.mxu0 0
      %2364 = vmatpush.bf16.msra.mxu0 0
      %2365 = vmatpush.bf16.msra.mxu0 0
      %2366 = vmatpush.bf16.msra.mxu0 0
      %2367 = vmatpush.bf16.msra.mxu0 %v2326
      %2368 = vmatmul.bf16.gmra.mxu0 %v2320
      %v2369 = vpop.f32.mrf.mxu0
      %v2370 = vadd.f32 0.0, %v2369
      %v2371 = vpop.f32.mrf.mxu0
      %v2372 = vadd.f32 0.0, %v2371
      %2373 = vdwg.mxu0
      %2374 = vmatpush.bf16.msra.mxu0 0
      %2375 = vmatpush.bf16.msra.mxu0 0
      %2376 = vmatpush.bf16.msra.mxu0 0
      %2377 = vmatpush.bf16.msra.mxu0 0
      %2378 = vmatpush.bf16.msra.mxu0 0
      %2379 = vmatpush.bf16.msra.mxu0 0
      %2380 = vmatpush.bf16.msra.mxu0 0
      %2381 = vmatpush.bf16.msra.mxu0 %v2329
      %2382 = vmatmul.bf16.gmra.mxu0 %v2320
      %v2383 = vpop.f32.mrf.mxu0
      %v2384 = vadd.f32 0.0, %v2383
      %v2385 = vpop.f32.mrf.mxu0
      %v2386 = vadd.f32 0.0, %v2385
      %2387 = vdwg.mxu0
      %2388 = vmatpush.bf16.msra.mxu0 0
      %2389 = vmatpush.bf16.msra.mxu0 0
      %2390 = vmatpush.bf16.msra.mxu0 0
      %2391 = vmatpush.bf16.msra.mxu0 0
      %2392 = vmatpush.bf16.msra.mxu0 0
      %2393 = vmatpush.bf16.msra.mxu0 0
      %2394 = vmatpush.bf16.msra.mxu0 0
      %2395 = vmatpush.bf16.msra.mxu0 %v2332
      %2396 = vmatmul.bf16.gmra.mxu0 %v2320
      %v2397 = vpop.f32.mrf.mxu0
      %v2398 = vadd.f32 0.0, %v2397
      %v2399 = vpop.f32.mrf.mxu0
      %v2400 = vadd.f32 0.0, %v2399
      %2401 = vdwg.mxu0
      %2402 = vmatpush.bf16.msra.mxu0 0
      %2403 = vmatpush.bf16.msra.mxu0 0
      %2404 = vmatpush.bf16.msra.mxu0 0
      %2405 = vmatpush.bf16.msra.mxu0 0
      %2406 = vmatpush.bf16.msra.mxu0 0
      %2407 = vmatpush.bf16.msra.mxu0 0
      %2408 = vmatpush.bf16.msra.mxu0 0
      %2409 = vmatpush.bf16.msra.mxu0 %v2335
      %2410 = vmatmul.bf16.gmra.mxu0 %v2320
      %v2411 = vpop.f32.mrf.mxu0
      %v2412 = vadd.f32 0.0, %v2411
      %v2413 = vpop.f32.mrf.mxu0
      %v2414 = vadd.f32 0.0, %v2413
      %2415 = vdwg.mxu0
      %2416 = vmatpush.bf16.msra.mxu0 0
      %2417 = vmatpush.bf16.msra.mxu0 0
      %2418 = vmatpush.bf16.msra.mxu0 0
      %2419 = vmatpush.bf16.msra.mxu0 0
      %2420 = vmatpush.bf16.msra.mxu0 0
      %2421 = vmatpush.bf16.msra.mxu0 0
      %2422 = vmatpush.bf16.msra.mxu0 0
      %2423 = vmatpush.bf16.msra.mxu0 %v2338
      %2424 = vmatmul.bf16.gmra.mxu0 %v2320
      %v2425 = vpop.f32.mrf.mxu0
      %v2426 = vadd.f32 0.0, %v2425
      %v2427 = vpop.f32.mrf.mxu0
      %v2428 = vadd.f32 0.0, %v2427
      %2429 = vdwg.mxu0
      %2430 = vmatpush.bf16.msra.mxu0 0
      %2431 = vmatpush.bf16.msra.mxu0 0
      %2432 = vmatpush.bf16.msra.mxu0 0
      %2433 = vmatpush.bf16.msra.mxu0 0
      %2434 = vmatpush.bf16.msra.mxu0 0
      %2435 = vmatpush.bf16.msra.mxu0 0
      %2436 = vmatpush.bf16.msra.mxu0 0
      %2437 = vmatpush.bf16.msra.mxu0 %v2341
      %2438 = vmatmul.bf16.gmra.mxu0 %v2320
      %v2439 = vpop.f32.mrf.mxu0
      %v2440 = vadd.f32 0.0, %v2439
      %v2441 = vpop.f32.mrf.mxu0
      %v2442 = vadd.f32 0.0, %v2441
      %2443 = vdwg.mxu0
      %2444 = vmatpush.bf16.msra.mxu0 0
      %2445 = vmatpush.bf16.msra.mxu0 0
      %2446 = vmatpush.bf16.msra.mxu0 0
      %2447 = vmatpush.bf16.msra.mxu0 0
      %2448 = vmatpush.bf16.msra.mxu0 0
      %2449 = vmatpush.bf16.msra.mxu0 0
      %2450 = vmatpush.bf16.msra.mxu0 0
      %2451 = vmatpush.bf16.msra.mxu0 %v2344
      %2452 = vmatmul.bf16.gmra.mxu0 %v2320
      %v2453 = vpop.f32.mrf.mxu0
      %v2454 = vadd.f32 0.0, %v2453
      %v2455 = vpop.f32.mrf.mxu0
      %v2456 = vadd.f32 0.0, %v2455
      %2457 = vdwg.mxu0
      %v2458 = vadd.f32 %v2205, %v2356
      %v2459 = vadd.f32 %v2206, %v2370
      %v2460 = vadd.f32 %v2207, %v2384
      %v2461 = vadd.f32 %v2208, %v2398
      %v2462 = vadd.f32 %v2209, %v2412
      %v2463 = vadd.f32 %v2210, %v2426
      %v2464 = vadd.f32 %v2211, %v2440
      %v2465 = vadd.f32 %v2212, %v2454
      %v2466 = vadd.f32 %v2213, %v2358
      %v2467 = vadd.f32 %v2214, %v2372
      %v2468 = vadd.f32 %v2215, %v2386
      %v2469 = vadd.f32 %v2216, %v2400
      %v2470 = vadd.f32 %v2217, %v2414
      %v2471 = vadd.f32 %v2218, %v2428
      %v2472 = vadd.f32 %v2219, %v2442
      %v2473 = vadd.f32 %v2220, %v2456
      %v2474 = vld [vmem:[%s2] sm:$0xff]
      %v2475 = vld [vmem:[%s2 + $0x8] sm:$0xf]
      %2477 = vset.pattern.permute.xlu0 0
      %2478 = vperm.xlu0 %2477, %v2474
      %v2479 = vpop.permute.xlu0 %2478
      %2482 = vset.pattern.permute.xlu0 0
      %2483 = vperm.xlu0 %2482, %v2475
      %v2484 = vpop.permute.xlu0 %2483
      %v2486 = vadd.f32 %v2458, %v2479
      %v2487 = vadd.f32 %v2459, %v2479
      %v2488 = vadd.f32 %v2460, %v2479
      %v2489 = vadd.f32 %v2461, %v2479
      %v2490 = vadd.f32 %v2462, %v2479
      %v2491 = vadd.f32 %v2463, %v2479
      %v2492 = vadd.f32 %v2464, %v2479
      %v2493 = vadd.f32 %v2465, %v2479
      %v2494 = vadd.f32 %v2466, %v2484
      %v2495 = vadd.f32 %v2467, %v2484
      %v2496 = vadd.f32 %v2468, %v2484
      %v2497 = vadd.f32 %v2469, %v2484
      %v2498 = vadd.f32 %v2470, %v2484
      %v2499 = vadd.f32 %v2471, %v2484
      %v2500 = vadd.f32 %v2472, %v2484
      %v2501 = vadd.f32 %v2473, %v2484
      %v2502 = vmax.f32 %v2486, 0.0
      %v2503 = vmax.f32 %v2487, 0.0
      %v2504 = vmax.f32 %v2488, 0.0
      %v2505 = vmax.f32 %v2489, 0.0
      %v2506 = vmax.f32 %v2490, 0.0
      %v2507 = vmax.f32 %v2491, 0.0
      %v2508 = vmax.f32 %v2492, 0.0
      %v2509 = vmax.f32 %v2493, 0.0
      %v2510 = vmax.f32 %v2494, 0.0
      %v2511 = vmax.f32 %v2495, 0.0
      %v2512 = vmax.f32 %v2496, 0.0
      %v2513 = vmax.f32 %v2497, 0.0
      %v2514 = vmax.f32 %v2498, 0.0
      %v2515 = vmax.f32 %v2499, 0.0
      %v2516 = vmax.f32 %v2500, 0.0
      %v2517 = vmax.f32 %v2501, 0.0
      %2520 = vrot.lane.b32.xlu0 %v2509, 17
      %v2521 = vpop.permute.xlu0 %2520
      %2522 = vrot.lane.b32.xlu0 %v2517, 17
      %v2523 = vpop.permute.xlu0 %2522
      %2540 = vrot.lane.b32.xlu0 %v2502, 17
      %v2541 = vpop.permute.xlu0 %2540
      %2542 = vrot.lane.b32.xlu0 %v2503, 17
      %v2543 = vpop.permute.xlu0 %2542
      %2544 = vrot.lane.b32.xlu0 %v2504, 17
      %v2545 = vpop.permute.xlu0 %2544
      %2546 = vrot.lane.b32.xlu0 %v2505, 17
      %v2547 = vpop.permute.xlu0 %2546
      %2548 = vrot.lane.b32.xlu0 %v2506, 17
      %v2549 = vpop.permute.xlu0 %2548
      %2550 = vrot.lane.b32.xlu0 %v2507, 17
      %v2551 = vpop.permute.xlu0 %2550
      %2552 = vrot.lane.b32.xlu0 %v2508, 17
      %v2553 = vpop.permute.xlu0 %2552
      %2554 = vrot.lane.b32.xlu0 %v2510, 17
      %v2555 = vpop.permute.xlu0 %2554
      %2556 = vrot.lane.b32.xlu0 %v2511, 17
      %v2557 = vpop.permute.xlu0 %2556
      %2558 = vrot.lane.b32.xlu0 %v2512, 17
      %v2559 = vpop.permute.xlu0 %2558
      %2560 = vrot.lane.b32.xlu0 %v2513, 17
      %v2561 = vpop.permute.xlu0 %2560
      %2562 = vrot.lane.b32.xlu0 %v2514, 17
      %v2563 = vpop.permute.xlu0 %2562
      %2564 = vrot.lane.b32.xlu0 %v2515, 17
      %v2565 = vpop.permute.xlu0 %2564
      %2566 = vrot.lane.b32.xlu0 %v2516, 17
      %v2567 = vpop.permute.xlu0 %2566
      %v2568 = vsel %vm324, %v2541, %v2543
      %v2569 = vsel %vm324, %v2543, %v2545
      %v2570 = vsel %vm324, %v2545, %v2547
      %v2571 = vsel %vm324, %v2547, %v2549
      %v2572 = vsel %vm324, %v2549, %v2551
      %v2573 = vsel %vm324, %v2551, %v2553
      %v2574 = vsel %vm324, %v2553, %v2521
      %v2575 = vsel %vm324, %v2555, %v2557
      %v2576 = vsel %vm324, %v2557, %v2559
      %v2577 = vsel %vm324, %v2559, %v2561
      %v2578 = vsel %vm324, %v2561, %v2563
      %v2579 = vsel %vm324, %v2563, %v2565
      %v2580 = vsel %vm324, %v2565, %v2567
      %v2581 = vsel %vm324, %v2567, %v2523
      %v2598 = vsel %vm324, %v2521, %v2541
      %v2599 = vsel %vm324, %v2523, %v2555
      %v2600 = vmul.f32 %v2598, %v345
      %v2601 = vmul.f32 %v2568, %v346
      %v2602 = vmul.f32 %v2569, %v347
      %v2603 = vmul.f32 %v2570, %v348
      %v2604 = vmul.f32 %v2571, %v349
      %v2605 = vmul.f32 %v2572, %v350
      %v2606 = vmul.f32 %v2573, %v351
      %v2607 = vmul.f32 %v2574, %v352
      %v2608 = vmul.f32 %v2599, %v345
      %v2609 = vmul.f32 %v2575, %v346
      %v2610 = vmul.f32 %v2576, %v347
      %v2611 = vmul.f32 %v2577, %v348
      %v2612 = vmul.f32 %v2578, %v349
      %v2613 = vmul.f32 %v2579, %v350
      %v2614 = vmul.f32 %v2580, %v351
      %v2615 = vmul.f32 %v2581, %v352
      %v2616 = vld [vmem:[%s3] sm:$0xf]
      %v2617 = vld [vmem:[%s3 + $0x4] sm:$0x3]
      %v2618 = vpack.c.bf16 %v2608, %v2600
      %v2619 = vpack.c.bf16 %v2609, %v2601
      %v2620 = vpack.c.bf16 %v2610, %v2602
      %v2621 = vpack.c.bf16 %v2611, %v2603
      %v2622 = vpack.c.bf16 %v2612, %v2604
      %v2623 = vpack.c.bf16 %v2613, %v2605
      %v2624 = vpack.c.bf16 %v2614, %v2606
      %v2625 = vpack.c.bf16 %v2615, %v2607
      %2626 = vrot.lane.b32.xlu0 %v2509, 16
      %v2627 = vpop.permute.xlu0 %2626
      %2628 = vrot.lane.b32.xlu0 %v2517, 16
      %v2629 = vpop.permute.xlu0 %2628
      %2632 = vrot.lane.b32.xlu0 %v2502, 16
      %v2633 = vpop.permute.xlu0 %2632
      %2634 = vrot.lane.b32.xlu0 %v2503, 16
      %v2635 = vpop.permute.xlu0 %2634
      %2636 = vrot.lane.b32.xlu0 %v2504, 16
      %v2637 = vpop.permute.xlu0 %2636
      %2638 = vrot.lane.b32.xlu0 %v2505, 16
      %v2639 = vpop.permute.xlu0 %2638
      %2640 = vrot.lane.b32.xlu0 %v2506, 16
      %v2641 = vpop.permute.xlu0 %2640
      %2642 = vrot.lane.b32.xlu0 %v2507, 16
      %v2643 = vpop.permute.xlu0 %2642
      %2644 = vrot.lane.b32.xlu0 %v2508, 16
      %v2645 = vpop.permute.xlu0 %2644
      %2646 = vrot.lane.b32.xlu0 %v2510, 16
      %v2647 = vpop.permute.xlu0 %2646
      %2648 = vrot.lane.b32.xlu0 %v2511, 16
      %v2649 = vpop.permute.xlu0 %2648
      %2650 = vrot.lane.b32.xlu0 %v2512, 16
      %v2651 = vpop.permute.xlu0 %2650
      %2652 = vrot.lane.b32.xlu0 %v2513, 16
      %v2653 = vpop.permute.xlu0 %2652
      %2654 = vrot.lane.b32.xlu0 %v2514, 16
      %v2655 = vpop.permute.xlu0 %2654
      %2656 = vrot.lane.b32.xlu0 %v2515, 16
      %v2657 = vpop.permute.xlu0 %2656
      %2658 = vrot.lane.b32.xlu0 %v2516, 16
      %v2659 = vpop.permute.xlu0 %2658
      %v2660 = vsel %vm415, %v2633, %v2635
      %v2661 = vsel %vm415, %v2635, %v2637
      %v2662 = vsel %vm415, %v2637, %v2639
      %v2663 = vsel %vm415, %v2639, %v2641
      %v2664 = vsel %vm415, %v2641, %v2643
      %v2665 = vsel %vm415, %v2643, %v2645
      %v2666 = vsel %vm415, %v2645, %v2627
      %v2667 = vsel %vm415, %v2647, %v2649
      %v2668 = vsel %vm415, %v2649, %v2651
      %v2669 = vsel %vm415, %v2651, %v2653
      %v2670 = vsel %vm415, %v2653, %v2655
      %v2671 = vsel %vm415, %v2655, %v2657
      %v2672 = vsel %vm415, %v2657, %v2659
      %v2673 = vsel %vm415, %v2659, %v2629
      %v2690 = vsel %vm415, %v2627, %v2633
      %v2691 = vsel %vm415, %v2629, %v2647
      %v2692 = vmul.f32 %v2690, %v437
      %v2693 = vmul.f32 %v2660, %v438
      %v2694 = vmul.f32 %v2661, %v439
      %v2695 = vmul.f32 %v2662, %v440
      %v2696 = vmul.f32 %v2663, %v441
      %v2697 = vmul.f32 %v2664, %v442
      %v2698 = vmul.f32 %v2665, %v443
      %v2699 = vmul.f32 %v2666, %v444
      %v2700 = vmul.f32 %v2691, %v437
      %v2701 = vmul.f32 %v2667, %v438
      %v2702 = vmul.f32 %v2668, %v439
      %v2703 = vmul.f32 %v2669, %v440
      %v2704 = vmul.f32 %v2670, %v441
      %v2705 = vmul.f32 %v2671, %v442
      %v2706 = vmul.f32 %v2672, %v443
      %v2707 = vmul.f32 %v2673, %v444
      %s2708 = scalar_lea.vmem %s3, 8
      %v2709 = vld [vmem:[%s2708] sm:$0xf]
      %v2710 = vld [vmem:[%s2708 + $0x4] sm:$0x3]
      %v2711 = vpack.c.bf16 %v2700, %v2692
      %v2712 = vpack.c.bf16 %v2701, %v2693
      %v2713 = vpack.c.bf16 %v2702, %v2694
      %v2714 = vpack.c.bf16 %v2703, %v2695
      %v2715 = vpack.c.bf16 %v2704, %v2696
      %v2716 = vpack.c.bf16 %v2705, %v2697
      %v2717 = vpack.c.bf16 %v2706, %v2698
      %v2718 = vpack.c.bf16 %v2707, %v2699
      %v2721 = vunpack.c.l.b16 %v2709
      %v2722 = vunpack.c.l.b16 %v2710
      %v2723 = vpack.c.b16 %v2722, %v2721
      %vm2724 = vcmask 97280
      %v2726 = vsel %vm2724, %v2723, 0
      %vm2728 = vcmask 1045504
      %v2730 = vsel %vm2728, %v2711, 0
      %v2733 = vsel %vm2728, %v2712, 0
      %v2736 = vsel %vm2728, %v2713, 0
      %v2739 = vsel %vm2728, %v2714, 0
      %v2742 = vsel %vm2728, %v2715, 0
      %v2745 = vsel %vm2728, %v2716, 0
      %v2748 = vsel %vm2728, %v2717, 0
      %v2751 = vsel %vm2728, %v2718, 0
      %2753 = vmatpush.bf16.msra.mxu0 0
      %2754 = vmatpush.bf16.msra.mxu0 0
      %2755 = vmatpush.bf16.msra.mxu0 0
      %2756 = vmatpush.bf16.msra.mxu0 0
      %2757 = vmatpush.bf16.msra.mxu0 0
      %2758 = vmatpush.bf16.msra.mxu0 0
      %2759 = vmatpush.bf16.msra.mxu0 0
      %2760 = vmatpush.bf16.msra.mxu0 %v2730
      %2761 = vmatmul.bf16.gmra.mxu0 %v2726
      %v2762 = vpop.f32.mrf.mxu0
      %v2763 = vadd.f32 0.0, %v2762
      %v2764 = vpop.f32.mrf.mxu0
      %v2765 = vadd.f32 0.0, %v2764
      %2766 = vdwg.mxu0
      %2767 = vmatpush.bf16.msra.mxu0 0
      %2768 = vmatpush.bf16.msra.mxu0 0
      %2769 = vmatpush.bf16.msra.mxu0 0
      %2770 = vmatpush.bf16.msra.mxu0 0
      %2771 = vmatpush.bf16.msra.mxu0 0
      %2772 = vmatpush.bf16.msra.mxu0 0
      %2773 = vmatpush.bf16.msra.mxu0 0
      %2774 = vmatpush.bf16.msra.mxu0 %v2733
      %2775 = vmatmul.bf16.gmra.mxu0 %v2726
      %v2776 = vpop.f32.mrf.mxu0
      %v2777 = vadd.f32 0.0, %v2776
      %v2778 = vpop.f32.mrf.mxu0
      %v2779 = vadd.f32 0.0, %v2778
      %2780 = vdwg.mxu0
      %2781 = vmatpush.bf16.msra.mxu0 0
      %2782 = vmatpush.bf16.msra.mxu0 0
      %2783 = vmatpush.bf16.msra.mxu0 0
      %2784 = vmatpush.bf16.msra.mxu0 0
      %2785 = vmatpush.bf16.msra.mxu0 0
      %2786 = vmatpush.bf16.msra.mxu0 0
      %2787 = vmatpush.bf16.msra.mxu0 0
      %2788 = vmatpush.bf16.msra.mxu0 %v2736
      %2789 = vmatmul.bf16.gmra.mxu0 %v2726
      %v2790 = vpop.f32.mrf.mxu0
      %v2791 = vadd.f32 0.0, %v2790
      %v2792 = vpop.f32.mrf.mxu0
      %v2793 = vadd.f32 0.0, %v2792
      %2794 = vdwg.mxu0
      %2795 = vmatpush.bf16.msra.mxu0 0
      %2796 = vmatpush.bf16.msra.mxu0 0
      %2797 = vmatpush.bf16.msra.mxu0 0
      %2798 = vmatpush.bf16.msra.mxu0 0
      %2799 = vmatpush.bf16.msra.mxu0 0
      %2800 = vmatpush.bf16.msra.mxu0 0
      %2801 = vmatpush.bf16.msra.mxu0 0
      %2802 = vmatpush.bf16.msra.mxu0 %v2739
      %2803 = vmatmul.bf16.gmra.mxu0 %v2726
      %v2804 = vpop.f32.mrf.mxu0
      %v2805 = vadd.f32 0.0, %v2804
      %v2806 = vpop.f32.mrf.mxu0
      %v2807 = vadd.f32 0.0, %v2806
      %2808 = vdwg.mxu0
      %2809 = vmatpush.bf16.msra.mxu0 0
      %2810 = vmatpush.bf16.msra.mxu0 0
      %2811 = vmatpush.bf16.msra.mxu0 0
      %2812 = vmatpush.bf16.msra.mxu0 0
      %2813 = vmatpush.bf16.msra.mxu0 0
      %2814 = vmatpush.bf16.msra.mxu0 0
      %2815 = vmatpush.bf16.msra.mxu0 0
      %2816 = vmatpush.bf16.msra.mxu0 %v2742
      %2817 = vmatmul.bf16.gmra.mxu0 %v2726
      %v2818 = vpop.f32.mrf.mxu0
      %v2819 = vadd.f32 0.0, %v2818
      %v2820 = vpop.f32.mrf.mxu0
      %v2821 = vadd.f32 0.0, %v2820
      %2822 = vdwg.mxu0
      %2823 = vmatpush.bf16.msra.mxu0 0
      %2824 = vmatpush.bf16.msra.mxu0 0
      %2825 = vmatpush.bf16.msra.mxu0 0
      %2826 = vmatpush.bf16.msra.mxu0 0
      %2827 = vmatpush.bf16.msra.mxu0 0
      %2828 = vmatpush.bf16.msra.mxu0 0
      %2829 = vmatpush.bf16.msra.mxu0 0
      %2830 = vmatpush.bf16.msra.mxu0 %v2745
      %2831 = vmatmul.bf16.gmra.mxu0 %v2726
      %v2832 = vpop.f32.mrf.mxu0
      %v2833 = vadd.f32 0.0, %v2832
      %v2834 = vpop.f32.mrf.mxu0
      %v2835 = vadd.f32 0.0, %v2834
      %2836 = vdwg.mxu0
      %2837 = vmatpush.bf16.msra.mxu0 0
      %2838 = vmatpush.bf16.msra.mxu0 0
      %2839 = vmatpush.bf16.msra.mxu0 0
      %2840 = vmatpush.bf16.msra.mxu0 0
      %2841 = vmatpush.bf16.msra.mxu0 0
      %2842 = vmatpush.bf16.msra.mxu0 0
      %2843 = vmatpush.bf16.msra.mxu0 0
      %2844 = vmatpush.bf16.msra.mxu0 %v2748
      %2845 = vmatmul.bf16.gmra.mxu0 %v2726
      %v2846 = vpop.f32.mrf.mxu0
      %v2847 = vadd.f32 0.0, %v2846
      %v2848 = vpop.f32.mrf.mxu0
      %v2849 = vadd.f32 0.0, %v2848
      %2850 = vdwg.mxu0
      %2851 = vmatpush.bf16.msra.mxu0 0
      %2852 = vmatpush.bf16.msra.mxu0 0
      %2853 = vmatpush.bf16.msra.mxu0 0
      %2854 = vmatpush.bf16.msra.mxu0 0
      %2855 = vmatpush.bf16.msra.mxu0 0
      %2856 = vmatpush.bf16.msra.mxu0 0
      %2857 = vmatpush.bf16.msra.mxu0 0
      %2858 = vmatpush.bf16.msra.mxu0 %v2751
      %2859 = vmatmul.bf16.gmra.mxu0 %v2726
      %v2860 = vpop.f32.mrf.mxu0
      %v2861 = vadd.f32 0.0, %v2860
      %v2862 = vpop.f32.mrf.mxu0
      %v2863 = vadd.f32 0.0, %v2862
      %2864 = vdwg.mxu0
      %v2867 = vunpack.c.l.b16 %v2616
      %v2868 = vunpack.c.l.b16 %v2617
      %v2869 = vpack.c.b16 %v2868, %v2867
      %v2871 = vsel %vm2724, %v2869, 0
      %v2874 = vsel %vm2728, %v2618, 0
      %v2877 = vsel %vm2728, %v2619, 0
      %v2880 = vsel %vm2728, %v2620, 0
      %v2883 = vsel %vm2728, %v2621, 0
      %v2886 = vsel %vm2728, %v2622, 0
      %v2889 = vsel %vm2728, %v2623, 0
      %v2892 = vsel %vm2728, %v2624, 0
      %v2895 = vsel %vm2728, %v2625, 0
      %2897 = vmatpush.bf16.msra.mxu0 0
      %2898 = vmatpush.bf16.msra.mxu0 0
      %2899 = vmatpush.bf16.msra.mxu0 0
      %2900 = vmatpush.bf16.msra.mxu0 0
      %2901 = vmatpush.bf16.msra.mxu0 0
      %2902 = vmatpush.bf16.msra.mxu0 0
      %2903 = vmatpush.bf16.msra.mxu0 0
      %2904 = vmatpush.bf16.msra.mxu0 %v2874
      %2905 = vmatmul.bf16.gmra.mxu0 %v2871
      %v2906 = vpop.f32.mrf.mxu0
      %v2907 = vadd.f32 %v2763, %v2906
      %v2908 = vpop.f32.mrf.mxu0
      %v2909 = vadd.f32 %v2765, %v2908
      %2910 = vdwg.mxu0
      %2911 = vmatpush.bf16.msra.mxu0 0
      %2912 = vmatpush.bf16.msra.mxu0 0
      %2913 = vmatpush.bf16.msra.mxu0 0
      %2914 = vmatpush.bf16.msra.mxu0 0
      %2915 = vmatpush.bf16.msra.mxu0 0
      %2916 = vmatpush.bf16.msra.mxu0 0
      %2917 = vmatpush.bf16.msra.mxu0 0
      %2918 = vmatpush.bf16.msra.mxu0 %v2877
      %2919 = vmatmul.bf16.gmra.mxu0 %v2871
      %v2920 = vpop.f32.mrf.mxu0
      %v2921 = vadd.f32 %v2777, %v2920
      %v2922 = vpop.f32.mrf.mxu0
      %v2923 = vadd.f32 %v2779, %v2922
      %2924 = vdwg.mxu0
      %2925 = vmatpush.bf16.msra.mxu0 0
      %2926 = vmatpush.bf16.msra.mxu0 0
      %2927 = vmatpush.bf16.msra.mxu0 0
      %2928 = vmatpush.bf16.msra.mxu0 0
      %2929 = vmatpush.bf16.msra.mxu0 0
      %2930 = vmatpush.bf16.msra.mxu0 0
      %2931 = vmatpush.bf16.msra.mxu0 0
      %2932 = vmatpush.bf16.msra.mxu0 %v2880
      %2933 = vmatmul.bf16.gmra.mxu0 %v2871
      %v2934 = vpop.f32.mrf.mxu0
      %v2935 = vadd.f32 %v2791, %v2934
      %v2936 = vpop.f32.mrf.mxu0
      %v2937 = vadd.f32 %v2793, %v2936
      %2938 = vdwg.mxu0
      %2939 = vmatpush.bf16.msra.mxu0 0
      %2940 = vmatpush.bf16.msra.mxu0 0
      %2941 = vmatpush.bf16.msra.mxu0 0
      %2942 = vmatpush.bf16.msra.mxu0 0
      %2943 = vmatpush.bf16.msra.mxu0 0
      %2944 = vmatpush.bf16.msra.mxu0 0
      %2945 = vmatpush.bf16.msra.mxu0 0
      %2946 = vmatpush.bf16.msra.mxu0 %v2883
      %2947 = vmatmul.bf16.gmra.mxu0 %v2871
      %v2948 = vpop.f32.mrf.mxu0
      %v2949 = vadd.f32 %v2805, %v2948
      %v2950 = vpop.f32.mrf.mxu0
      %v2951 = vadd.f32 %v2807, %v2950
      %2952 = vdwg.mxu0
      %2953 = vmatpush.bf16.msra.mxu0 0
      %2954 = vmatpush.bf16.msra.mxu0 0
      %2955 = vmatpush.bf16.msra.mxu0 0
      %2956 = vmatpush.bf16.msra.mxu0 0
      %2957 = vmatpush.bf16.msra.mxu0 0
      %2958 = vmatpush.bf16.msra.mxu0 0
      %2959 = vmatpush.bf16.msra.mxu0 0
      %2960 = vmatpush.bf16.msra.mxu0 %v2886
      %2961 = vmatmul.bf16.gmra.mxu0 %v2871
      %v2962 = vpop.f32.mrf.mxu0
      %v2963 = vadd.f32 %v2819, %v2962
      %v2964 = vpop.f32.mrf.mxu0
      %v2965 = vadd.f32 %v2821, %v2964
      %2966 = vdwg.mxu0
      %2967 = vmatpush.bf16.msra.mxu0 0
      %2968 = vmatpush.bf16.msra.mxu0 0
      %2969 = vmatpush.bf16.msra.mxu0 0
      %2970 = vmatpush.bf16.msra.mxu0 0
      %2971 = vmatpush.bf16.msra.mxu0 0
      %2972 = vmatpush.bf16.msra.mxu0 0
      %2973 = vmatpush.bf16.msra.mxu0 0
      %2974 = vmatpush.bf16.msra.mxu0 %v2889
      %2975 = vmatmul.bf16.gmra.mxu0 %v2871
      %v2976 = vpop.f32.mrf.mxu0
      %v2977 = vadd.f32 %v2833, %v2976
      %v2978 = vpop.f32.mrf.mxu0
      %v2979 = vadd.f32 %v2835, %v2978
      %2980 = vdwg.mxu0
      %2981 = vmatpush.bf16.msra.mxu0 0
      %2982 = vmatpush.bf16.msra.mxu0 0
      %2983 = vmatpush.bf16.msra.mxu0 0
      %2984 = vmatpush.bf16.msra.mxu0 0
      %2985 = vmatpush.bf16.msra.mxu0 0
      %2986 = vmatpush.bf16.msra.mxu0 0
      %2987 = vmatpush.bf16.msra.mxu0 0
      %2988 = vmatpush.bf16.msra.mxu0 %v2892
      %2989 = vmatmul.bf16.gmra.mxu0 %v2871
      %v2990 = vpop.f32.mrf.mxu0
      %v2991 = vadd.f32 %v2847, %v2990
      %v2992 = vpop.f32.mrf.mxu0
      %v2993 = vadd.f32 %v2849, %v2992
      %2994 = vdwg.mxu0
      %2995 = vmatpush.bf16.msra.mxu0 0
      %2996 = vmatpush.bf16.msra.mxu0 0
      %2997 = vmatpush.bf16.msra.mxu0 0
      %2998 = vmatpush.bf16.msra.mxu0 0
      %2999 = vmatpush.bf16.msra.mxu0 0
      %3000 = vmatpush.bf16.msra.mxu0 0
      %3001 = vmatpush.bf16.msra.mxu0 0
      %3002 = vmatpush.bf16.msra.mxu0 %v2895
      %3003 = vmatmul.bf16.gmra.mxu0 %v2871
      %v3004 = vpop.f32.mrf.mxu0
      %v3005 = vadd.f32 %v2861, %v3004
      %v3006 = vpop.f32.mrf.mxu0
      %v3007 = vadd.f32 %v2863, %v3006
      %3008 = vdwg.mxu0
      %3009 = vrot.lane.b32.xlu0 %v2509, 15
      %v3010 = vpop.permute.xlu0 %3009
      %3011 = vrot.lane.b32.xlu0 %v2517, 15
      %v3012 = vpop.permute.xlu0 %3011
      %3015 = vrot.lane.b32.xlu0 %v2502, 15
      %v3016 = vpop.permute.xlu0 %3015
      %3017 = vrot.lane.b32.xlu0 %v2503, 15
      %v3018 = vpop.permute.xlu0 %3017
      %3019 = vrot.lane.b32.xlu0 %v2504, 15
      %v3020 = vpop.permute.xlu0 %3019
      %3021 = vrot.lane.b32.xlu0 %v2505, 15
      %v3022 = vpop.permute.xlu0 %3021
      %3023 = vrot.lane.b32.xlu0 %v2506, 15
      %v3024 = vpop.permute.xlu0 %3023
      %3025 = vrot.lane.b32.xlu0 %v2507, 15
      %v3026 = vpop.permute.xlu0 %3025
      %3027 = vrot.lane.b32.xlu0 %v2508, 15
      %v3028 = vpop.permute.xlu0 %3027
      %3029 = vrot.lane.b32.xlu0 %v2510, 15
      %v3030 = vpop.permute.xlu0 %3029
      %3031 = vrot.lane.b32.xlu0 %v2511, 15
      %v3032 = vpop.permute.xlu0 %3031
      %3033 = vrot.lane.b32.xlu0 %v2512, 15
      %v3034 = vpop.permute.xlu0 %3033
      %3035 = vrot.lane.b32.xlu0 %v2513, 15
      %v3036 = vpop.permute.xlu0 %3035
      %3037 = vrot.lane.b32.xlu0 %v2514, 15
      %v3038 = vpop.permute.xlu0 %3037
      %3039 = vrot.lane.b32.xlu0 %v2515, 15
      %v3040 = vpop.permute.xlu0 %3039
      %3041 = vrot.lane.b32.xlu0 %v2516, 15
      %v3042 = vpop.permute.xlu0 %3041
      %v3043 = vsel %vm798, %v3016, %v3018
      %v3044 = vsel %vm798, %v3018, %v3020
      %v3045 = vsel %vm798, %v3020, %v3022
      %v3046 = vsel %vm798, %v3022, %v3024
      %v3047 = vsel %vm798, %v3024, %v3026
      %v3048 = vsel %vm798, %v3026, %v3028
      %v3049 = vsel %vm798, %v3028, %v3010
      %v3050 = vsel %vm798, %v3030, %v3032
      %v3051 = vsel %vm798, %v3032, %v3034
      %v3052 = vsel %vm798, %v3034, %v3036
      %v3053 = vsel %vm798, %v3036, %v3038
      %v3054 = vsel %vm798, %v3038, %v3040
      %v3055 = vsel %vm798, %v3040, %v3042
      %v3056 = vsel %vm798, %v3042, %v3012
      %v3073 = vsel %vm798, %v3010, %v3016
      %v3074 = vsel %vm798, %v3012, %v3030
      %v3075 = vmul.f32 %v3073, %v820
      %v3076 = vmul.f32 %v3043, %v821
      %v3077 = vmul.f32 %v3044, %v822
      %v3078 = vmul.f32 %v3045, %v823
      %v3079 = vmul.f32 %v3046, %v824
      %v3080 = vmul.f32 %v3047, %v825
      %v3081 = vmul.f32 %v3048, %v826
      %v3082 = vmul.f32 %v3049, %v827
      %v3083 = vmul.f32 %v3074, %v820
      %v3084 = vmul.f32 %v3050, %v821
      %v3085 = vmul.f32 %v3051, %v822
      %v3086 = vmul.f32 %v3052, %v823
      %v3087 = vmul.f32 %v3053, %v824
      %v3088 = vmul.f32 %v3054, %v825
      %v3089 = vmul.f32 %v3055, %v826
      %v3090 = vmul.f32 %v3056, %v827
      %s3091 = scalar_lea.vmem %s3, 16
      %v3092 = vld [vmem:[%s3091] sm:$0xf]
      %v3093 = vld [vmem:[%s3091 + $0x4] sm:$0x3]
      %v3094 = vpack.c.bf16 %v3083, %v3075
      %v3095 = vpack.c.bf16 %v3084, %v3076
      %v3096 = vpack.c.bf16 %v3085, %v3077
      %v3097 = vpack.c.bf16 %v3086, %v3078
      %v3098 = vpack.c.bf16 %v3087, %v3079
      %v3099 = vpack.c.bf16 %v3088, %v3080
      %v3100 = vpack.c.bf16 %v3089, %v3081
      %v3101 = vpack.c.bf16 %v3090, %v3082
      %v3104 = vunpack.c.l.b16 %v3092
      %v3105 = vunpack.c.l.b16 %v3093
      %v3106 = vpack.c.b16 %v3105, %v3104
      %v3108 = vsel %vm2724, %v3106, 0
      %v3111 = vsel %vm2728, %v3094, 0
      %v3114 = vsel %vm2728, %v3095, 0
      %v3117 = vsel %vm2728, %v3096, 0
      %v3120 = vsel %vm2728, %v3097, 0
      %v3123 = vsel %vm2728, %v3098, 0
      %v3126 = vsel %vm2728, %v3099, 0
      %v3129 = vsel %vm2728, %v3100, 0
      %v3132 = vsel %vm2728, %v3101, 0
      %3134 = vmatpush.bf16.msra.mxu0 0
      %3135 = vmatpush.bf16.msra.mxu0 0
      %3136 = vmatpush.bf16.msra.mxu0 0
      %3137 = vmatpush.bf16.msra.mxu0 0
      %3138 = vmatpush.bf16.msra.mxu0 0
      %3139 = vmatpush.bf16.msra.mxu0 0
      %3140 = vmatpush.bf16.msra.mxu0 0
      %3141 = vmatpush.bf16.msra.mxu0 %v3111
      %3142 = vmatmul.bf16.gmra.mxu0 %v3108
      %v3143 = vpop.f32.mrf.mxu0
      %v3144 = vadd.f32 0.0, %v3143
      %v3145 = vpop.f32.mrf.mxu0
      %v3146 = vadd.f32 0.0, %v3145
      %3147 = vdwg.mxu0
      %3148 = vmatpush.bf16.msra.mxu0 0
      %3149 = vmatpush.bf16.msra.mxu0 0
      %3150 = vmatpush.bf16.msra.mxu0 0
      %3151 = vmatpush.bf16.msra.mxu0 0
      %3152 = vmatpush.bf16.msra.mxu0 0
      %3153 = vmatpush.bf16.msra.mxu0 0
      %3154 = vmatpush.bf16.msra.mxu0 0
      %3155 = vmatpush.bf16.msra.mxu0 %v3114
      %3156 = vmatmul.bf16.gmra.mxu0 %v3108
      %v3157 = vpop.f32.mrf.mxu0
      %v3158 = vadd.f32 0.0, %v3157
      %v3159 = vpop.f32.mrf.mxu0
      %v3160 = vadd.f32 0.0, %v3159
      %3161 = vdwg.mxu0
      %3162 = vmatpush.bf16.msra.mxu0 0
      %3163 = vmatpush.bf16.msra.mxu0 0
      %3164 = vmatpush.bf16.msra.mxu0 0
      %3165 = vmatpush.bf16.msra.mxu0 0
      %3166 = vmatpush.bf16.msra.mxu0 0
      %3167 = vmatpush.bf16.msra.mxu0 0
      %3168 = vmatpush.bf16.msra.mxu0 0
      %3169 = vmatpush.bf16.msra.mxu0 %v3117
      %3170 = vmatmul.bf16.gmra.mxu0 %v3108
      %v3171 = vpop.f32.mrf.mxu0
      %v3172 = vadd.f32 0.0, %v3171
      %v3173 = vpop.f32.mrf.mxu0
      %v3174 = vadd.f32 0.0, %v3173
      %3175 = vdwg.mxu0
      %3176 = vmatpush.bf16.msra.mxu0 0
      %3177 = vmatpush.bf16.msra.mxu0 0
      %3178 = vmatpush.bf16.msra.mxu0 0
      %3179 = vmatpush.bf16.msra.mxu0 0
      %3180 = vmatpush.bf16.msra.mxu0 0
      %3181 = vmatpush.bf16.msra.mxu0 0
      %3182 = vmatpush.bf16.msra.mxu0 0
      %3183 = vmatpush.bf16.msra.mxu0 %v3120
      %3184 = vmatmul.bf16.gmra.mxu0 %v3108
      %v3185 = vpop.f32.mrf.mxu0
      %v3186 = vadd.f32 0.0, %v3185
      %v3187 = vpop.f32.mrf.mxu0
      %v3188 = vadd.f32 0.0, %v3187
      %3189 = vdwg.mxu0
      %3190 = vmatpush.bf16.msra.mxu0 0
      %3191 = vmatpush.bf16.msra.mxu0 0
      %3192 = vmatpush.bf16.msra.mxu0 0
      %3193 = vmatpush.bf16.msra.mxu0 0
      %3194 = vmatpush.bf16.msra.mxu0 0
      %3195 = vmatpush.bf16.msra.mxu0 0
      %3196 = vmatpush.bf16.msra.mxu0 0
      %3197 = vmatpush.bf16.msra.mxu0 %v3123
      %3198 = vmatmul.bf16.gmra.mxu0 %v3108
      %v3199 = vpop.f32.mrf.mxu0
      %v3200 = vadd.f32 0.0, %v3199
      %v3201 = vpop.f32.mrf.mxu0
      %v3202 = vadd.f32 0.0, %v3201
      %3203 = vdwg.mxu0
      %3204 = vmatpush.bf16.msra.mxu0 0
      %3205 = vmatpush.bf16.msra.mxu0 0
      %3206 = vmatpush.bf16.msra.mxu0 0
      %3207 = vmatpush.bf16.msra.mxu0 0
      %3208 = vmatpush.bf16.msra.mxu0 0
      %3209 = vmatpush.bf16.msra.mxu0 0
      %3210 = vmatpush.bf16.msra.mxu0 0
      %3211 = vmatpush.bf16.msra.mxu0 %v3126
      %3212 = vmatmul.bf16.gmra.mxu0 %v3108
      %v3213 = vpop.f32.mrf.mxu0
      %v3214 = vadd.f32 0.0, %v3213
      %v3215 = vpop.f32.mrf.mxu0
      %v3216 = vadd.f32 0.0, %v3215
      %3217 = vdwg.mxu0
      %3218 = vmatpush.bf16.msra.mxu0 0
      %3219 = vmatpush.bf16.msra.mxu0 0
      %3220 = vmatpush.bf16.msra.mxu0 0
      %3221 = vmatpush.bf16.msra.mxu0 0
      %3222 = vmatpush.bf16.msra.mxu0 0
      %3223 = vmatpush.bf16.msra.mxu0 0
      %3224 = vmatpush.bf16.msra.mxu0 0
      %3225 = vmatpush.bf16.msra.mxu0 %v3129
      %3226 = vmatmul.bf16.gmra.mxu0 %v3108
      %v3227 = vpop.f32.mrf.mxu0
      %v3228 = vadd.f32 0.0, %v3227
      %v3229 = vpop.f32.mrf.mxu0
      %v3230 = vadd.f32 0.0, %v3229
      %3231 = vdwg.mxu0
      %3232 = vmatpush.bf16.msra.mxu0 0
      %3233 = vmatpush.bf16.msra.mxu0 0
      %3234 = vmatpush.bf16.msra.mxu0 0
      %3235 = vmatpush.bf16.msra.mxu0 0
      %3236 = vmatpush.bf16.msra.mxu0 0
      %3237 = vmatpush.bf16.msra.mxu0 0
      %3238 = vmatpush.bf16.msra.mxu0 0
      %3239 = vmatpush.bf16.msra.mxu0 %v3132
      %3240 = vmatmul.bf16.gmra.mxu0 %v3108
      %v3241 = vpop.f32.mrf.mxu0
      %v3242 = vadd.f32 0.0, %v3241
      %v3243 = vpop.f32.mrf.mxu0
      %v3244 = vadd.f32 0.0, %v3243
      %3245 = vdwg.mxu0
      %v3246 = vadd.f32 %v2907, %v3144
      %v3247 = vadd.f32 %v2921, %v3158
      %v3248 = vadd.f32 %v2935, %v3172
      %v3249 = vadd.f32 %v2949, %v3186
      %v3250 = vadd.f32 %v2963, %v3200
      %v3251 = vadd.f32 %v2977, %v3214
      %v3252 = vadd.f32 %v2991, %v3228
      %v3253 = vadd.f32 %v3005, %v3242
      %v3254 = vadd.f32 %v2909, %v3146
      %v3255 = vadd.f32 %v2923, %v3160
      %v3256 = vadd.f32 %v2937, %v3174
      %v3257 = vadd.f32 %v2951, %v3188
      %v3258 = vadd.f32 %v2965, %v3202
      %v3259 = vadd.f32 %v2979, %v3216
      %v3260 = vadd.f32 %v2993, %v3230
      %v3261 = vadd.f32 %v3007, %v3244
      %3262 = vrot.lane.b32.xlu0 %v2509, 1
      %v3263 = vpop.permute.xlu0 %3262
      %3264 = vrot.lane.b32.xlu0 %v2517, 1
      %v3265 = vpop.permute.xlu0 %3264
      %3268 = vrot.lane.b32.xlu0 %v2502, 1
      %v3269 = vpop.permute.xlu0 %3268
      %3270 = vrot.lane.b32.xlu0 %v2503, 1
      %v3271 = vpop.permute.xlu0 %3270
      %3272 = vrot.lane.b32.xlu0 %v2504, 1
      %v3273 = vpop.permute.xlu0 %3272
      %3274 = vrot.lane.b32.xlu0 %v2505, 1
      %v3275 = vpop.permute.xlu0 %3274
      %3276 = vrot.lane.b32.xlu0 %v2506, 1
      %v3277 = vpop.permute.xlu0 %3276
      %3278 = vrot.lane.b32.xlu0 %v2507, 1
      %v3279 = vpop.permute.xlu0 %3278
      %3280 = vrot.lane.b32.xlu0 %v2508, 1
      %v3281 = vpop.permute.xlu0 %3280
      %3282 = vrot.lane.b32.xlu0 %v2510, 1
      %v3283 = vpop.permute.xlu0 %3282
      %3284 = vrot.lane.b32.xlu0 %v2511, 1
      %v3285 = vpop.permute.xlu0 %3284
      %3286 = vrot.lane.b32.xlu0 %v2512, 1
      %v3287 = vpop.permute.xlu0 %3286
      %3288 = vrot.lane.b32.xlu0 %v2513, 1
      %v3289 = vpop.permute.xlu0 %3288
      %3290 = vrot.lane.b32.xlu0 %v2514, 1
      %v3291 = vpop.permute.xlu0 %3290
      %3292 = vrot.lane.b32.xlu0 %v2515, 1
      %v3293 = vpop.permute.xlu0 %3292
      %3294 = vrot.lane.b32.xlu0 %v2516, 1
      %v3295 = vpop.permute.xlu0 %3294
      %v3296 = vsel %vm1051, %v3269, %v3271
      %v3297 = vsel %vm1051, %v3271, %v3273
      %v3298 = vsel %vm1051, %v3273, %v3275
      %v3299 = vsel %vm1051, %v3275, %v3277
      %v3300 = vsel %vm1051, %v3277, %v3279
      %v3301 = vsel %vm1051, %v3279, %v3281
      %v3302 = vsel %vm1051, %v3281, %v3263
      %v3303 = vsel %vm1051, %v3283, %v3285
      %v3304 = vsel %vm1051, %v3285, %v3287
      %v3305 = vsel %vm1051, %v3287, %v3289
      %v3306 = vsel %vm1051, %v3289, %v3291
      %v3307 = vsel %vm1051, %v3291, %v3293
      %v3308 = vsel %vm1051, %v3293, %v3295
      %v3309 = vsel %vm1051, %v3295, %v3265
      %v3326 = vsel %vm1051, %v3263, %v3269
      %v3327 = vsel %vm1051, %v3265, %v3283
      %v3328 = vmul.f32 %v3326, %v1073
      %v3329 = vmul.f32 %v3296, %v1074
      %v3330 = vmul.f32 %v3297, %v1075
      %v3331 = vmul.f32 %v3298, %v1076
      %v3332 = vmul.f32 %v3299, %v1077
      %v3333 = vmul.f32 %v3300, %v1078
      %v3334 = vmul.f32 %v3301, %v1079
      %v3335 = vmul.f32 %v3302, %v1080
      %v3336 = vmul.f32 %v3327, %v1073
      %v3337 = vmul.f32 %v3303, %v1074
      %v3338 = vmul.f32 %v3304, %v1075
      %v3339 = vmul.f32 %v3305, %v1076
      %v3340 = vmul.f32 %v3306, %v1077
      %v3341 = vmul.f32 %v3307, %v1078
      %v3342 = vmul.f32 %v3308, %v1079
      %v3343 = vmul.f32 %v3309, %v1080
      %s3344 = scalar_lea.vmem %s3, 24
      %v3345 = vld [vmem:[%s3344] sm:$0xf]
      %v3346 = vld [vmem:[%s3344 + $0x4] sm:$0x3]
      %v3347 = vpack.c.bf16 %v3336, %v3328
      %v3348 = vpack.c.bf16 %v3337, %v3329
      %v3349 = vpack.c.bf16 %v3338, %v3330
      %v3350 = vpack.c.bf16 %v3339, %v3331
      %v3351 = vpack.c.bf16 %v3340, %v3332
      %v3352 = vpack.c.bf16 %v3341, %v3333
      %v3353 = vpack.c.bf16 %v3342, %v3334
      %v3354 = vpack.c.bf16 %v3343, %v3335
      %v3357 = vunpack.c.l.b16 %v3345
      %v3358 = vunpack.c.l.b16 %v3346
      %v3359 = vpack.c.b16 %v3358, %v3357
      %v3361 = vsel %vm2724, %v3359, 0
      %v3364 = vsel %vm2728, %v3347, 0
      %v3367 = vsel %vm2728, %v3348, 0
      %v3370 = vsel %vm2728, %v3349, 0
      %v3373 = vsel %vm2728, %v3350, 0
      %v3376 = vsel %vm2728, %v3351, 0
      %v3379 = vsel %vm2728, %v3352, 0
      %v3382 = vsel %vm2728, %v3353, 0
      %v3385 = vsel %vm2728, %v3354, 0
      %3387 = vmatpush.bf16.msra.mxu0 0
      %3388 = vmatpush.bf16.msra.mxu0 0
      %3389 = vmatpush.bf16.msra.mxu0 0
      %3390 = vmatpush.bf16.msra.mxu0 0
      %3391 = vmatpush.bf16.msra.mxu0 0
      %3392 = vmatpush.bf16.msra.mxu0 0
      %3393 = vmatpush.bf16.msra.mxu0 0
      %3394 = vmatpush.bf16.msra.mxu0 %v3364
      %3395 = vmatmul.bf16.gmra.mxu0 %v3361
      %v3396 = vpop.f32.mrf.mxu0
      %v3397 = vadd.f32 0.0, %v3396
      %v3398 = vpop.f32.mrf.mxu0
      %v3399 = vadd.f32 0.0, %v3398
      %3400 = vdwg.mxu0
      %3401 = vmatpush.bf16.msra.mxu0 0
      %3402 = vmatpush.bf16.msra.mxu0 0
      %3403 = vmatpush.bf16.msra.mxu0 0
      %3404 = vmatpush.bf16.msra.mxu0 0
      %3405 = vmatpush.bf16.msra.mxu0 0
      %3406 = vmatpush.bf16.msra.mxu0 0
      %3407 = vmatpush.bf16.msra.mxu0 0
      %3408 = vmatpush.bf16.msra.mxu0 %v3367
      %3409 = vmatmul.bf16.gmra.mxu0 %v3361
      %v3410 = vpop.f32.mrf.mxu0
      %v3411 = vadd.f32 0.0, %v3410
      %v3412 = vpop.f32.mrf.mxu0
      %v3413 = vadd.f32 0.0, %v3412
      %3414 = vdwg.mxu0
      %3415 = vmatpush.bf16.msra.mxu0 0
      %3416 = vmatpush.bf16.msra.mxu0 0
      %3417 = vmatpush.bf16.msra.mxu0 0
      %3418 = vmatpush.bf16.msra.mxu0 0
      %3419 = vmatpush.bf16.msra.mxu0 0
      %3420 = vmatpush.bf16.msra.mxu0 0
      %3421 = vmatpush.bf16.msra.mxu0 0
      %3422 = vmatpush.bf16.msra.mxu0 %v3370
      %3423 = vmatmul.bf16.gmra.mxu0 %v3361
      %v3424 = vpop.f32.mrf.mxu0
      %v3425 = vadd.f32 0.0, %v3424
      %v3426 = vpop.f32.mrf.mxu0
      %v3427 = vadd.f32 0.0, %v3426
      %3428 = vdwg.mxu0
      %3429 = vmatpush.bf16.msra.mxu0 0
      %3430 = vmatpush.bf16.msra.mxu0 0
      %3431 = vmatpush.bf16.msra.mxu0 0
      %3432 = vmatpush.bf16.msra.mxu0 0
      %3433 = vmatpush.bf16.msra.mxu0 0
      %3434 = vmatpush.bf16.msra.mxu0 0
      %3435 = vmatpush.bf16.msra.mxu0 0
      %3436 = vmatpush.bf16.msra.mxu0 %v3373
      %3437 = vmatmul.bf16.gmra.mxu0 %v3361
      %v3438 = vpop.f32.mrf.mxu0
      %v3439 = vadd.f32 0.0, %v3438
      %v3440 = vpop.f32.mrf.mxu0
      %v3441 = vadd.f32 0.0, %v3440
      %3442 = vdwg.mxu0
      %3443 = vmatpush.bf16.msra.mxu0 0
      %3444 = vmatpush.bf16.msra.mxu0 0
      %3445 = vmatpush.bf16.msra.mxu0 0
      %3446 = vmatpush.bf16.msra.mxu0 0
      %3447 = vmatpush.bf16.msra.mxu0 0
      %3448 = vmatpush.bf16.msra.mxu0 0
      %3449 = vmatpush.bf16.msra.mxu0 0
      %3450 = vmatpush.bf16.msra.mxu0 %v3376
      %3451 = vmatmul.bf16.gmra.mxu0 %v3361
      %v3452 = vpop.f32.mrf.mxu0
      %v3453 = vadd.f32 0.0, %v3452
      %v3454 = vpop.f32.mrf.mxu0
      %v3455 = vadd.f32 0.0, %v3454
      %3456 = vdwg.mxu0
      %3457 = vmatpush.bf16.msra.mxu0 0
      %3458 = vmatpush.bf16.msra.mxu0 0
      %3459 = vmatpush.bf16.msra.mxu0 0
      %3460 = vmatpush.bf16.msra.mxu0 0
      %3461 = vmatpush.bf16.msra.mxu0 0
      %3462 = vmatpush.bf16.msra.mxu0 0
      %3463 = vmatpush.bf16.msra.mxu0 0
      %3464 = vmatpush.bf16.msra.mxu0 %v3379
      %3465 = vmatmul.bf16.gmra.mxu0 %v3361
      %v3466 = vpop.f32.mrf.mxu0
      %v3467 = vadd.f32 0.0, %v3466
      %v3468 = vpop.f32.mrf.mxu0
      %v3469 = vadd.f32 0.0, %v3468
      %3470 = vdwg.mxu0
      %3471 = vmatpush.bf16.msra.mxu0 0
      %3472 = vmatpush.bf16.msra.mxu0 0
      %3473 = vmatpush.bf16.msra.mxu0 0
      %3474 = vmatpush.bf16.msra.mxu0 0
      %3475 = vmatpush.bf16.msra.mxu0 0
      %3476 = vmatpush.bf16.msra.mxu0 0
      %3477 = vmatpush.bf16.msra.mxu0 0
      %3478 = vmatpush.bf16.msra.mxu0 %v3382
      %3479 = vmatmul.bf16.gmra.mxu0 %v3361
      %v3480 = vpop.f32.mrf.mxu0
      %v3481 = vadd.f32 0.0, %v3480
      %v3482 = vpop.f32.mrf.mxu0
      %v3483 = vadd.f32 0.0, %v3482
      %3484 = vdwg.mxu0
      %3485 = vmatpush.bf16.msra.mxu0 0
      %3486 = vmatpush.bf16.msra.mxu0 0
      %3487 = vmatpush.bf16.msra.mxu0 0
      %3488 = vmatpush.bf16.msra.mxu0 0
      %3489 = vmatpush.bf16.msra.mxu0 0
      %3490 = vmatpush.bf16.msra.mxu0 0
      %3491 = vmatpush.bf16.msra.mxu0 0
      %3492 = vmatpush.bf16.msra.mxu0 %v3385
      %3493 = vmatmul.bf16.gmra.mxu0 %v3361
      %v3494 = vpop.f32.mrf.mxu0
      %v3495 = vadd.f32 0.0, %v3494
      %v3496 = vpop.f32.mrf.mxu0
      %v3497 = vadd.f32 0.0, %v3496
      %3498 = vdwg.mxu0
      %v3499 = vadd.f32 %v3246, %v3397
      %v3500 = vadd.f32 %v3247, %v3411
      %v3501 = vadd.f32 %v3248, %v3425
      %v3502 = vadd.f32 %v3249, %v3439
      %v3503 = vadd.f32 %v3250, %v3453
      %v3504 = vadd.f32 %v3251, %v3467
      %v3505 = vadd.f32 %v3252, %v3481
      %v3506 = vadd.f32 %v3253, %v3495
      %v3507 = vadd.f32 %v3254, %v3399
      %v3508 = vadd.f32 %v3255, %v3413
      %v3509 = vadd.f32 %v3256, %v3427
      %v3510 = vadd.f32 %v3257, %v3441
      %v3511 = vadd.f32 %v3258, %v3455
      %v3512 = vadd.f32 %v3259, %v3469
      %v3513 = vadd.f32 %v3260, %v3483
      %v3514 = vadd.f32 %v3261, %v3497
      %s3515 = scalar_lea.vmem %s3, 32
      %v3516 = vld [vmem:[%s3515] sm:$0xf]
      %v3517 = vld [vmem:[%s3515 + $0x4] sm:$0x3]
      %v3518 = vpack.c.bf16 %v2510, %v2502
      %v3519 = vpack.c.bf16 %v2511, %v2503
      %v3520 = vpack.c.bf16 %v2512, %v2504
      %v3521 = vpack.c.bf16 %v2513, %v2505
      %v3522 = vpack.c.bf16 %v2514, %v2506
      %v3523 = vpack.c.bf16 %v2515, %v2507
      %v3524 = vpack.c.bf16 %v2516, %v2508
      %v3525 = vpack.c.bf16 %v2517, %v2509
      %v3528 = vunpack.c.l.b16 %v3516
      %v3529 = vunpack.c.l.b16 %v3517
      %v3530 = vpack.c.b16 %v3529, %v3528
      %v3532 = vsel %vm2724, %v3530, 0
      %v3535 = vsel %vm2728, %v3518, 0
      %v3538 = vsel %vm2728, %v3519, 0
      %v3541 = vsel %vm2728, %v3520, 0
      %v3544 = vsel %vm2728, %v3521, 0
      %v3547 = vsel %vm2728, %v3522, 0
      %v3550 = vsel %vm2728, %v3523, 0
      %v3553 = vsel %vm2728, %v3524, 0
      %v3556 = vsel %vm2728, %v3525, 0
      %3558 = vmatpush.bf16.msra.mxu0 0
      %3559 = vmatpush.bf16.msra.mxu0 0
      %3560 = vmatpush.bf16.msra.mxu0 0
      %3561 = vmatpush.bf16.msra.mxu0 0
      %3562 = vmatpush.bf16.msra.mxu0 0
      %3563 = vmatpush.bf16.msra.mxu0 0
      %3564 = vmatpush.bf16.msra.mxu0 0
      %3565 = vmatpush.bf16.msra.mxu0 %v3535
      %3566 = vmatmul.bf16.gmra.mxu0 %v3532
      %v3567 = vpop.f32.mrf.mxu0
      %v3568 = vadd.f32 0.0, %v3567
      %v3569 = vpop.f32.mrf.mxu0
      %v3570 = vadd.f32 0.0, %v3569
      %3571 = vdwg.mxu0
      %3572 = vmatpush.bf16.msra.mxu0 0
      %3573 = vmatpush.bf16.msra.mxu0 0
      %3574 = vmatpush.bf16.msra.mxu0 0
      %3575 = vmatpush.bf16.msra.mxu0 0
      %3576 = vmatpush.bf16.msra.mxu0 0
      %3577 = vmatpush.bf16.msra.mxu0 0
      %3578 = vmatpush.bf16.msra.mxu0 0
      %3579 = vmatpush.bf16.msra.mxu0 %v3538
      %3580 = vmatmul.bf16.gmra.mxu0 %v3532
      %v3581 = vpop.f32.mrf.mxu0
      %v3582 = vadd.f32 0.0, %v3581
      %v3583 = vpop.f32.mrf.mxu0
      %v3584 = vadd.f32 0.0, %v3583
      %3585 = vdwg.mxu0
      %3586 = vmatpush.bf16.msra.mxu0 0
      %3587 = vmatpush.bf16.msra.mxu0 0
      %3588 = vmatpush.bf16.msra.mxu0 0
      %3589 = vmatpush.bf16.msra.mxu0 0
      %3590 = vmatpush.bf16.msra.mxu0 0
      %3591 = vmatpush.bf16.msra.mxu0 0
      %3592 = vmatpush.bf16.msra.mxu0 0
      %3593 = vmatpush.bf16.msra.mxu0 %v3541
      %3594 = vmatmul.bf16.gmra.mxu0 %v3532
      %v3595 = vpop.f32.mrf.mxu0
      %v3596 = vadd.f32 0.0, %v3595
      %v3597 = vpop.f32.mrf.mxu0
      %v3598 = vadd.f32 0.0, %v3597
      %3599 = vdwg.mxu0
      %3600 = vmatpush.bf16.msra.mxu0 0
      %3601 = vmatpush.bf16.msra.mxu0 0
      %3602 = vmatpush.bf16.msra.mxu0 0
      %3603 = vmatpush.bf16.msra.mxu0 0
      %3604 = vmatpush.bf16.msra.mxu0 0
      %3605 = vmatpush.bf16.msra.mxu0 0
      %3606 = vmatpush.bf16.msra.mxu0 0
      %3607 = vmatpush.bf16.msra.mxu0 %v3544
      %3608 = vmatmul.bf16.gmra.mxu0 %v3532
      %v3609 = vpop.f32.mrf.mxu0
      %v3610 = vadd.f32 0.0, %v3609
      %v3611 = vpop.f32.mrf.mxu0
      %v3612 = vadd.f32 0.0, %v3611
      %3613 = vdwg.mxu0
      %3614 = vmatpush.bf16.msra.mxu0 0
      %3615 = vmatpush.bf16.msra.mxu0 0
      %3616 = vmatpush.bf16.msra.mxu0 0
      %3617 = vmatpush.bf16.msra.mxu0 0
      %3618 = vmatpush.bf16.msra.mxu0 0
      %3619 = vmatpush.bf16.msra.mxu0 0
      %3620 = vmatpush.bf16.msra.mxu0 0
      %3621 = vmatpush.bf16.msra.mxu0 %v3547
      %3622 = vmatmul.bf16.gmra.mxu0 %v3532
      %v3623 = vpop.f32.mrf.mxu0
      %v3624 = vadd.f32 0.0, %v3623
      %v3625 = vpop.f32.mrf.mxu0
      %v3626 = vadd.f32 0.0, %v3625
      %3627 = vdwg.mxu0
      %3628 = vmatpush.bf16.msra.mxu0 0
      %3629 = vmatpush.bf16.msra.mxu0 0
      %3630 = vmatpush.bf16.msra.mxu0 0
      %3631 = vmatpush.bf16.msra.mxu0 0
      %3632 = vmatpush.bf16.msra.mxu0 0
      %3633 = vmatpush.bf16.msra.mxu0 0
      %3634 = vmatpush.bf16.msra.mxu0 0
      %3635 = vmatpush.bf16.msra.mxu0 %v3550
      %3636 = vmatmul.bf16.gmra.mxu0 %v3532
      %v3637 = vpop.f32.mrf.mxu0
      %v3638 = vadd.f32 0.0, %v3637
      %v3639 = vpop.f32.mrf.mxu0
      %v3640 = vadd.f32 0.0, %v3639
      %3641 = vdwg.mxu0
      %3642 = vmatpush.bf16.msra.mxu0 0
      %3643 = vmatpush.bf16.msra.mxu0 0
      %3644 = vmatpush.bf16.msra.mxu0 0
      %3645 = vmatpush.bf16.msra.mxu0 0
      %3646 = vmatpush.bf16.msra.mxu0 0
      %3647 = vmatpush.bf16.msra.mxu0 0
      %3648 = vmatpush.bf16.msra.mxu0 0
      %3649 = vmatpush.bf16.msra.mxu0 %v3553
      %3650 = vmatmul.bf16.gmra.mxu0 %v3532
      %v3651 = vpop.f32.mrf.mxu0
      %v3652 = vadd.f32 0.0, %v3651
      %v3653 = vpop.f32.mrf.mxu0
      %v3654 = vadd.f32 0.0, %v3653
      %3655 = vdwg.mxu0
      %3656 = vmatpush.bf16.msra.mxu0 0
      %3657 = vmatpush.bf16.msra.mxu0 0
      %3658 = vmatpush.bf16.msra.mxu0 0
      %3659 = vmatpush.bf16.msra.mxu0 0
      %3660 = vmatpush.bf16.msra.mxu0 0
      %3661 = vmatpush.bf16.msra.mxu0 0
      %3662 = vmatpush.bf16.msra.mxu0 0
      %3663 = vmatpush.bf16.msra.mxu0 %v3556
      %3664 = vmatmul.bf16.gmra.mxu0 %v3532
      %v3665 = vpop.f32.mrf.mxu0
      %v3666 = vadd.f32 0.0, %v3665
      %v3667 = vpop.f32.mrf.mxu0
      %v3668 = vadd.f32 0.0, %v3667
      %3669 = vdwg.mxu0
      %v3670 = vadd.f32 %v3499, %v3568
      %v3671 = vadd.f32 %v3500, %v3582
      %v3672 = vadd.f32 %v3501, %v3596
      %v3673 = vadd.f32 %v3502, %v3610
      %v3674 = vadd.f32 %v3503, %v3624
      %v3675 = vadd.f32 %v3504, %v3638
      %v3676 = vadd.f32 %v3505, %v3652
      %v3677 = vadd.f32 %v3506, %v3666
      %v3678 = vadd.f32 %v3507, %v3570
      %v3679 = vadd.f32 %v3508, %v3584
      %v3680 = vadd.f32 %v3509, %v3598
      %v3681 = vadd.f32 %v3510, %v3612
      %v3682 = vadd.f32 %v3511, %v3626
      %v3683 = vadd.f32 %v3512, %v3640
      %v3684 = vadd.f32 %v3513, %v3654
      %v3685 = vadd.f32 %v3514, %v3668
      %3686 = vrot.lane.b32.xlu0 %v2502, 127
      %v3687 = vpop.permute.xlu0 %3686
      %3688 = vrot.lane.b32.xlu0 %v2503, 127
      %v3689 = vpop.permute.xlu0 %3688
      %3690 = vrot.lane.b32.xlu0 %v2504, 127
      %v3691 = vpop.permute.xlu0 %3690
      %3692 = vrot.lane.b32.xlu0 %v2505, 127
      %v3693 = vpop.permute.xlu0 %3692
      %3694 = vrot.lane.b32.xlu0 %v2506, 127
      %v3695 = vpop.permute.xlu0 %3694
      %3696 = vrot.lane.b32.xlu0 %v2507, 127
      %v3697 = vpop.permute.xlu0 %3696
      %3698 = vrot.lane.b32.xlu0 %v2508, 127
      %v3699 = vpop.permute.xlu0 %3698
      %3700 = vrot.lane.b32.xlu0 %v2509, 127
      %v3701 = vpop.permute.xlu0 %3700
      %3702 = vrot.lane.b32.xlu0 %v2510, 127
      %v3703 = vpop.permute.xlu0 %3702
      %3704 = vrot.lane.b32.xlu0 %v2511, 127
      %v3705 = vpop.permute.xlu0 %3704
      %3706 = vrot.lane.b32.xlu0 %v2512, 127
      %v3707 = vpop.permute.xlu0 %3706
      %3708 = vrot.lane.b32.xlu0 %v2513, 127
      %v3709 = vpop.permute.xlu0 %3708
      %3710 = vrot.lane.b32.xlu0 %v2514, 127
      %v3711 = vpop.permute.xlu0 %3710
      %3712 = vrot.lane.b32.xlu0 %v2515, 127
      %v3713 = vpop.permute.xlu0 %3712
      %3714 = vrot.lane.b32.xlu0 %v2516, 127
      %v3715 = vpop.permute.xlu0 %3714
      %3716 = vrot.lane.b32.xlu0 %v2517, 127
      %v3717 = vpop.permute.xlu0 %3716
      %v3718 = vsel %vm1493, %v3687, %v3689
      %v3719 = vsel %vm1493, %v3689, %v3691
      %v3720 = vsel %vm1493, %v3691, %v3693
      %v3721 = vsel %vm1493, %v3693, %v3695
      %v3722 = vsel %vm1493, %v3695, %v3697
      %v3723 = vsel %vm1493, %v3697, %v3699
      %v3724 = vsel %vm1493, %v3699, %v3701
      %v3725 = vsel %vm1493, %v3703, %v3705
      %v3726 = vsel %vm1493, %v3705, %v3707
      %v3727 = vsel %vm1493, %v3707, %v3709
      %v3728 = vsel %vm1493, %v3709, %v3711
      %v3729 = vsel %vm1493, %v3711, %v3713
      %v3730 = vsel %vm1493, %v3713, %v3715
      %v3731 = vsel %vm1493, %v3715, %v3717
      %v3750 = vsel %vm1493, %v3701, %v3687
      %v3751 = vsel %vm1493, %v3717, %v3703
      %v3752 = vmul.f32 %v3718, %v1520
      %v3753 = vmul.f32 %v3719, %v1521
      %v3754 = vmul.f32 %v3720, %v1522
      %v3755 = vmul.f32 %v3721, %v1523
      %v3756 = vmul.f32 %v3722, %v1524
      %v3757 = vmul.f32 %v3723, %v1525
      %v3758 = vmul.f32 %v3724, %v1526
      %v3759 = vmul.f32 %v3750, %v1527
      %v3760 = vmul.f32 %v3725, %v1520
      %v3761 = vmul.f32 %v3726, %v1521
      %v3762 = vmul.f32 %v3727, %v1522
      %v3763 = vmul.f32 %v3728, %v1523
      %v3764 = vmul.f32 %v3729, %v1524
      %v3765 = vmul.f32 %v3730, %v1525
      %v3766 = vmul.f32 %v3731, %v1526
      %v3767 = vmul.f32 %v3751, %v1527
      %s3768 = scalar_lea.vmem %s3, 40
      %v3769 = vld [vmem:[%s3768] sm:$0xf]
      %v3770 = vld [vmem:[%s3768 + $0x4] sm:$0x3]
      %v3771 = vpack.c.bf16 %v3760, %v3752
      %v3772 = vpack.c.bf16 %v3761, %v3753
      %v3773 = vpack.c.bf16 %v3762, %v3754
      %v3774 = vpack.c.bf16 %v3763, %v3755
      %v3775 = vpack.c.bf16 %v3764, %v3756
      %v3776 = vpack.c.bf16 %v3765, %v3757
      %v3777 = vpack.c.bf16 %v3766, %v3758
      %v3778 = vpack.c.bf16 %v3767, %v3759
      %v3781 = vunpack.c.l.b16 %v3769
      %v3782 = vunpack.c.l.b16 %v3770
      %v3783 = vpack.c.b16 %v3782, %v3781
      %v3785 = vsel %vm2724, %v3783, 0
      %v3788 = vsel %vm2728, %v3771, 0
      %v3791 = vsel %vm2728, %v3772, 0
      %v3794 = vsel %vm2728, %v3773, 0
      %v3797 = vsel %vm2728, %v3774, 0
      %v3800 = vsel %vm2728, %v3775, 0
      %v3803 = vsel %vm2728, %v3776, 0
      %v3806 = vsel %vm2728, %v3777, 0
      %v3809 = vsel %vm2728, %v3778, 0
      %3811 = vmatpush.bf16.msra.mxu0 0
      %3812 = vmatpush.bf16.msra.mxu0 0
      %3813 = vmatpush.bf16.msra.mxu0 0
      %3814 = vmatpush.bf16.msra.mxu0 0
      %3815 = vmatpush.bf16.msra.mxu0 0
      %3816 = vmatpush.bf16.msra.mxu0 0
      %3817 = vmatpush.bf16.msra.mxu0 0
      %3818 = vmatpush.bf16.msra.mxu0 %v3788
      %3819 = vmatmul.bf16.gmra.mxu0 %v3785
      %v3820 = vpop.f32.mrf.mxu0
      %v3821 = vadd.f32 0.0, %v3820
      %v3822 = vpop.f32.mrf.mxu0
      %v3823 = vadd.f32 0.0, %v3822
      %3824 = vdwg.mxu0
      %3825 = vmatpush.bf16.msra.mxu0 0
      %3826 = vmatpush.bf16.msra.mxu0 0
      %3827 = vmatpush.bf16.msra.mxu0 0
      %3828 = vmatpush.bf16.msra.mxu0 0
      %3829 = vmatpush.bf16.msra.mxu0 0
      %3830 = vmatpush.bf16.msra.mxu0 0
      %3831 = vmatpush.bf16.msra.mxu0 0
      %3832 = vmatpush.bf16.msra.mxu0 %v3791
      %3833 = vmatmul.bf16.gmra.mxu0 %v3785
      %v3834 = vpop.f32.mrf.mxu0
      %v3835 = vadd.f32 0.0, %v3834
      %v3836 = vpop.f32.mrf.mxu0
      %v3837 = vadd.f32 0.0, %v3836
      %3838 = vdwg.mxu0
      %3839 = vmatpush.bf16.msra.mxu0 0
      %3840 = vmatpush.bf16.msra.mxu0 0
      %3841 = vmatpush.bf16.msra.mxu0 0
      %3842 = vmatpush.bf16.msra.mxu0 0
      %3843 = vmatpush.bf16.msra.mxu0 0
      %3844 = vmatpush.bf16.msra.mxu0 0
      %3845 = vmatpush.bf16.msra.mxu0 0
      %3846 = vmatpush.bf16.msra.mxu0 %v3794
      %3847 = vmatmul.bf16.gmra.mxu0 %v3785
      %v3848 = vpop.f32.mrf.mxu0
      %v3849 = vadd.f32 0.0, %v3848
      %v3850 = vpop.f32.mrf.mxu0
      %v3851 = vadd.f32 0.0, %v3850
      %3852 = vdwg.mxu0
      %3853 = vmatpush.bf16.msra.mxu0 0
      %3854 = vmatpush.bf16.msra.mxu0 0
      %3855 = vmatpush.bf16.msra.mxu0 0
      %3856 = vmatpush.bf16.msra.mxu0 0
      %3857 = vmatpush.bf16.msra.mxu0 0
      %3858 = vmatpush.bf16.msra.mxu0 0
      %3859 = vmatpush.bf16.msra.mxu0 0
      %3860 = vmatpush.bf16.msra.mxu0 %v3797
      %3861 = vmatmul.bf16.gmra.mxu0 %v3785
      %v3862 = vpop.f32.mrf.mxu0
      %v3863 = vadd.f32 0.0, %v3862
      %v3864 = vpop.f32.mrf.mxu0
      %v3865 = vadd.f32 0.0, %v3864
      %3866 = vdwg.mxu0
      %3867 = vmatpush.bf16.msra.mxu0 0
      %3868 = vmatpush.bf16.msra.mxu0 0
      %3869 = vmatpush.bf16.msra.mxu0 0
      %3870 = vmatpush.bf16.msra.mxu0 0
      %3871 = vmatpush.bf16.msra.mxu0 0
      %3872 = vmatpush.bf16.msra.mxu0 0
      %3873 = vmatpush.bf16.msra.mxu0 0
      %3874 = vmatpush.bf16.msra.mxu0 %v3800
      %3875 = vmatmul.bf16.gmra.mxu0 %v3785
      %v3876 = vpop.f32.mrf.mxu0
      %v3877 = vadd.f32 0.0, %v3876
      %v3878 = vpop.f32.mrf.mxu0
      %v3879 = vadd.f32 0.0, %v3878
      %3880 = vdwg.mxu0
      %3881 = vmatpush.bf16.msra.mxu0 0
      %3882 = vmatpush.bf16.msra.mxu0 0
      %3883 = vmatpush.bf16.msra.mxu0 0
      %3884 = vmatpush.bf16.msra.mxu0 0
      %3885 = vmatpush.bf16.msra.mxu0 0
      %3886 = vmatpush.bf16.msra.mxu0 0
      %3887 = vmatpush.bf16.msra.mxu0 0
      %3888 = vmatpush.bf16.msra.mxu0 %v3803
      %3889 = vmatmul.bf16.gmra.mxu0 %v3785
      %v3890 = vpop.f32.mrf.mxu0
      %v3891 = vadd.f32 0.0, %v3890
      %v3892 = vpop.f32.mrf.mxu0
      %v3893 = vadd.f32 0.0, %v3892
      %3894 = vdwg.mxu0
      %3895 = vmatpush.bf16.msra.mxu0 0
      %3896 = vmatpush.bf16.msra.mxu0 0
      %3897 = vmatpush.bf16.msra.mxu0 0
      %3898 = vmatpush.bf16.msra.mxu0 0
      %3899 = vmatpush.bf16.msra.mxu0 0
      %3900 = vmatpush.bf16.msra.mxu0 0
      %3901 = vmatpush.bf16.msra.mxu0 0
      %3902 = vmatpush.bf16.msra.mxu0 %v3806
      %3903 = vmatmul.bf16.gmra.mxu0 %v3785
      %v3904 = vpop.f32.mrf.mxu0
      %v3905 = vadd.f32 0.0, %v3904
      %v3906 = vpop.f32.mrf.mxu0
      %v3907 = vadd.f32 0.0, %v3906
      %3908 = vdwg.mxu0
      %3909 = vmatpush.bf16.msra.mxu0 0
      %3910 = vmatpush.bf16.msra.mxu0 0
      %3911 = vmatpush.bf16.msra.mxu0 0
      %3912 = vmatpush.bf16.msra.mxu0 0
      %3913 = vmatpush.bf16.msra.mxu0 0
      %3914 = vmatpush.bf16.msra.mxu0 0
      %3915 = vmatpush.bf16.msra.mxu0 0
      %3916 = vmatpush.bf16.msra.mxu0 %v3809
      %3917 = vmatmul.bf16.gmra.mxu0 %v3785
      %v3918 = vpop.f32.mrf.mxu0
      %v3919 = vadd.f32 0.0, %v3918
      %v3920 = vpop.f32.mrf.mxu0
      %v3921 = vadd.f32 0.0, %v3920
      %3922 = vdwg.mxu0
      %v3923 = vadd.f32 %v3670, %v3821
      %v3924 = vadd.f32 %v3671, %v3835
      %v3925 = vadd.f32 %v3672, %v3849
      %v3926 = vadd.f32 %v3673, %v3863
      %v3927 = vadd.f32 %v3674, %v3877
      %v3928 = vadd.f32 %v3675, %v3891
      %v3929 = vadd.f32 %v3676, %v3905
      %v3930 = vadd.f32 %v3677, %v3919
      %v3931 = vadd.f32 %v3678, %v3823
      %v3932 = vadd.f32 %v3679, %v3837
      %v3933 = vadd.f32 %v3680, %v3851
      %v3934 = vadd.f32 %v3681, %v3865
      %v3935 = vadd.f32 %v3682, %v3879
      %v3936 = vadd.f32 %v3683, %v3893
      %v3937 = vadd.f32 %v3684, %v3907
      %v3938 = vadd.f32 %v3685, %v3921
      %3939 = vrot.lane.b32.xlu0 %v2502, 113
      %v3940 = vpop.permute.xlu0 %3939
      %3941 = vrot.lane.b32.xlu0 %v2503, 113
      %v3942 = vpop.permute.xlu0 %3941
      %3943 = vrot.lane.b32.xlu0 %v2504, 113
      %v3944 = vpop.permute.xlu0 %3943
      %3945 = vrot.lane.b32.xlu0 %v2505, 113
      %v3946 = vpop.permute.xlu0 %3945
      %3947 = vrot.lane.b32.xlu0 %v2506, 113
      %v3948 = vpop.permute.xlu0 %3947
      %3949 = vrot.lane.b32.xlu0 %v2507, 113
      %v3950 = vpop.permute.xlu0 %3949
      %3951 = vrot.lane.b32.xlu0 %v2508, 113
      %v3952 = vpop.permute.xlu0 %3951
      %3953 = vrot.lane.b32.xlu0 %v2509, 113
      %v3954 = vpop.permute.xlu0 %3953
      %3955 = vrot.lane.b32.xlu0 %v2510, 113
      %v3956 = vpop.permute.xlu0 %3955
      %3957 = vrot.lane.b32.xlu0 %v2511, 113
      %v3958 = vpop.permute.xlu0 %3957
      %3959 = vrot.lane.b32.xlu0 %v2512, 113
      %v3960 = vpop.permute.xlu0 %3959
      %3961 = vrot.lane.b32.xlu0 %v2513, 113
      %v3962 = vpop.permute.xlu0 %3961
      %3963 = vrot.lane.b32.xlu0 %v2514, 113
      %v3964 = vpop.permute.xlu0 %3963
      %3965 = vrot.lane.b32.xlu0 %v2515, 113
      %v3966 = vpop.permute.xlu0 %3965
      %3967 = vrot.lane.b32.xlu0 %v2516, 113
      %v3968 = vpop.permute.xlu0 %3967
      %3969 = vrot.lane.b32.xlu0 %v2517, 113
      %v3970 = vpop.permute.xlu0 %3969
      %v3971 = vsel %vm1746, %v3940, %v3942
      %v3972 = vsel %vm1746, %v3942, %v3944
      %v3973 = vsel %vm1746, %v3944, %v3946
      %v3974 = vsel %vm1746, %v3946, %v3948
      %v3975 = vsel %vm1746, %v3948, %v3950
      %v3976 = vsel %vm1746, %v3950, %v3952
      %v3977 = vsel %vm1746, %v3952, %v3954
      %v3978 = vsel %vm1746, %v3956, %v3958
      %v3979 = vsel %vm1746, %v3958, %v3960
      %v3980 = vsel %vm1746, %v3960, %v3962
      %v3981 = vsel %vm1746, %v3962, %v3964
      %v3982 = vsel %vm1746, %v3964, %v3966
      %v3983 = vsel %vm1746, %v3966, %v3968
      %v3984 = vsel %vm1746, %v3968, %v3970
      %v4003 = vsel %vm1746, %v3954, %v3940
      %v4004 = vsel %vm1746, %v3970, %v3956
      %v4005 = vmul.f32 %v3971, %v1773
      %v4006 = vmul.f32 %v3972, %v1774
      %v4007 = vmul.f32 %v3973, %v1775
      %v4008 = vmul.f32 %v3974, %v1776
      %v4009 = vmul.f32 %v3975, %v1777
      %v4010 = vmul.f32 %v3976, %v1778
      %v4011 = vmul.f32 %v3977, %v1779
      %v4012 = vmul.f32 %v4003, %v1780
      %v4013 = vmul.f32 %v3978, %v1773
      %v4014 = vmul.f32 %v3979, %v1774
      %v4015 = vmul.f32 %v3980, %v1775
      %v4016 = vmul.f32 %v3981, %v1776
      %v4017 = vmul.f32 %v3982, %v1777
      %v4018 = vmul.f32 %v3983, %v1778
      %v4019 = vmul.f32 %v3984, %v1779
      %v4020 = vmul.f32 %v4004, %v1780
      %s4021 = scalar_lea.vmem %s3, 48
      %v4022 = vld [vmem:[%s4021] sm:$0xf]
      %v4023 = vld [vmem:[%s4021 + $0x4] sm:$0x3]
      %v4024 = vpack.c.bf16 %v4013, %v4005
      %v4025 = vpack.c.bf16 %v4014, %v4006
      %v4026 = vpack.c.bf16 %v4015, %v4007
      %v4027 = vpack.c.bf16 %v4016, %v4008
      %v4028 = vpack.c.bf16 %v4017, %v4009
      %v4029 = vpack.c.bf16 %v4018, %v4010
      %v4030 = vpack.c.bf16 %v4019, %v4011
      %v4031 = vpack.c.bf16 %v4020, %v4012
      %v4034 = vunpack.c.l.b16 %v4022
      %v4035 = vunpack.c.l.b16 %v4023
      %v4036 = vpack.c.b16 %v4035, %v4034
      %v4038 = vsel %vm2724, %v4036, 0
      %v4041 = vsel %vm2728, %v4024, 0
      %v4044 = vsel %vm2728, %v4025, 0
      %v4047 = vsel %vm2728, %v4026, 0
      %v4050 = vsel %vm2728, %v4027, 0
      %v4053 = vsel %vm2728, %v4028, 0
      %v4056 = vsel %vm2728, %v4029, 0
      %v4059 = vsel %vm2728, %v4030, 0
      %v4062 = vsel %vm2728, %v4031, 0
      %4064 = vmatpush.bf16.msra.mxu0 0
      %4065 = vmatpush.bf16.msra.mxu0 0
      %4066 = vmatpush.bf16.msra.mxu0 0
      %4067 = vmatpush.bf16.msra.mxu0 0
      %4068 = vmatpush.bf16.msra.mxu0 0
      %4069 = vmatpush.bf16.msra.mxu0 0
      %4070 = vmatpush.bf16.msra.mxu0 0
      %4071 = vmatpush.bf16.msra.mxu0 %v4041
      %4072 = vmatmul.bf16.gmra.mxu0 %v4038
      %v4073 = vpop.f32.mrf.mxu0
      %v4074 = vadd.f32 0.0, %v4073
      %v4075 = vpop.f32.mrf.mxu0
      %v4076 = vadd.f32 0.0, %v4075
      %4077 = vdwg.mxu0
      %4078 = vmatpush.bf16.msra.mxu0 0
      %4079 = vmatpush.bf16.msra.mxu0 0
      %4080 = vmatpush.bf16.msra.mxu0 0
      %4081 = vmatpush.bf16.msra.mxu0 0
      %4082 = vmatpush.bf16.msra.mxu0 0
      %4083 = vmatpush.bf16.msra.mxu0 0
      %4084 = vmatpush.bf16.msra.mxu0 0
      %4085 = vmatpush.bf16.msra.mxu0 %v4044
      %4086 = vmatmul.bf16.gmra.mxu0 %v4038
      %v4087 = vpop.f32.mrf.mxu0
      %v4088 = vadd.f32 0.0, %v4087
      %v4089 = vpop.f32.mrf.mxu0
      %v4090 = vadd.f32 0.0, %v4089
      %4091 = vdwg.mxu0
      %4092 = vmatpush.bf16.msra.mxu0 0
      %4093 = vmatpush.bf16.msra.mxu0 0
      %4094 = vmatpush.bf16.msra.mxu0 0
      %4095 = vmatpush.bf16.msra.mxu0 0
      %4096 = vmatpush.bf16.msra.mxu0 0
      %4097 = vmatpush.bf16.msra.mxu0 0
      %4098 = vmatpush.bf16.msra.mxu0 0
      %4099 = vmatpush.bf16.msra.mxu0 %v4047
      %4100 = vmatmul.bf16.gmra.mxu0 %v4038
      %v4101 = vpop.f32.mrf.mxu0
      %v4102 = vadd.f32 0.0, %v4101
      %v4103 = vpop.f32.mrf.mxu0
      %v4104 = vadd.f32 0.0, %v4103
      %4105 = vdwg.mxu0
      %4106 = vmatpush.bf16.msra.mxu0 0
      %4107 = vmatpush.bf16.msra.mxu0 0
      %4108 = vmatpush.bf16.msra.mxu0 0
      %4109 = vmatpush.bf16.msra.mxu0 0
      %4110 = vmatpush.bf16.msra.mxu0 0
      %4111 = vmatpush.bf16.msra.mxu0 0
      %4112 = vmatpush.bf16.msra.mxu0 0
      %4113 = vmatpush.bf16.msra.mxu0 %v4050
      %4114 = vmatmul.bf16.gmra.mxu0 %v4038
      %v4115 = vpop.f32.mrf.mxu0
      %v4116 = vadd.f32 0.0, %v4115
      %v4117 = vpop.f32.mrf.mxu0
      %v4118 = vadd.f32 0.0, %v4117
      %4119 = vdwg.mxu0
      %4120 = vmatpush.bf16.msra.mxu0 0
      %4121 = vmatpush.bf16.msra.mxu0 0
      %4122 = vmatpush.bf16.msra.mxu0 0
      %4123 = vmatpush.bf16.msra.mxu0 0
      %4124 = vmatpush.bf16.msra.mxu0 0
      %4125 = vmatpush.bf16.msra.mxu0 0
      %4126 = vmatpush.bf16.msra.mxu0 0
      %4127 = vmatpush.bf16.msra.mxu0 %v4053
      %4128 = vmatmul.bf16.gmra.mxu0 %v4038
      %v4129 = vpop.f32.mrf.mxu0
      %v4130 = vadd.f32 0.0, %v4129
      %v4131 = vpop.f32.mrf.mxu0
      %v4132 = vadd.f32 0.0, %v4131
      %4133 = vdwg.mxu0
      %4134 = vmatpush.bf16.msra.mxu0 0
      %4135 = vmatpush.bf16.msra.mxu0 0
      %4136 = vmatpush.bf16.msra.mxu0 0
      %4137 = vmatpush.bf16.msra.mxu0 0
      %4138 = vmatpush.bf16.msra.mxu0 0
      %4139 = vmatpush.bf16.msra.mxu0 0
      %4140 = vmatpush.bf16.msra.mxu0 0
      %4141 = vmatpush.bf16.msra.mxu0 %v4056
      %4142 = vmatmul.bf16.gmra.mxu0 %v4038
      %v4143 = vpop.f32.mrf.mxu0
      %v4144 = vadd.f32 0.0, %v4143
      %v4145 = vpop.f32.mrf.mxu0
      %v4146 = vadd.f32 0.0, %v4145
      %4147 = vdwg.mxu0
      %4148 = vmatpush.bf16.msra.mxu0 0
      %4149 = vmatpush.bf16.msra.mxu0 0
      %4150 = vmatpush.bf16.msra.mxu0 0
      %4151 = vmatpush.bf16.msra.mxu0 0
      %4152 = vmatpush.bf16.msra.mxu0 0
      %4153 = vmatpush.bf16.msra.mxu0 0
      %4154 = vmatpush.bf16.msra.mxu0 0
      %4155 = vmatpush.bf16.msra.mxu0 %v4059
      %4156 = vmatmul.bf16.gmra.mxu0 %v4038
      %v4157 = vpop.f32.mrf.mxu0
      %v4158 = vadd.f32 0.0, %v4157
      %v4159 = vpop.f32.mrf.mxu0
      %v4160 = vadd.f32 0.0, %v4159
      %4161 = vdwg.mxu0
      %4162 = vmatpush.bf16.msra.mxu0 0
      %4163 = vmatpush.bf16.msra.mxu0 0
      %4164 = vmatpush.bf16.msra.mxu0 0
      %4165 = vmatpush.bf16.msra.mxu0 0
      %4166 = vmatpush.bf16.msra.mxu0 0
      %4167 = vmatpush.bf16.msra.mxu0 0
      %4168 = vmatpush.bf16.msra.mxu0 0
      %4169 = vmatpush.bf16.msra.mxu0 %v4062
      %4170 = vmatmul.bf16.gmra.mxu0 %v4038
      %v4171 = vpop.f32.mrf.mxu0
      %v4172 = vadd.f32 0.0, %v4171
      %v4173 = vpop.f32.mrf.mxu0
      %v4174 = vadd.f32 0.0, %v4173
      %4175 = vdwg.mxu0
      %v4176 = vadd.f32 %v3923, %v4074
      %v4177 = vadd.f32 %v3924, %v4088
      %v4178 = vadd.f32 %v3925, %v4102
      %v4179 = vadd.f32 %v3926, %v4116
      %v4180 = vadd.f32 %v3927, %v4130
      %v4181 = vadd.f32 %v3928, %v4144
      %v4182 = vadd.f32 %v3929, %v4158
      %v4183 = vadd.f32 %v3930, %v4172
      %v4184 = vadd.f32 %v3931, %v4076
      %v4185 = vadd.f32 %v3932, %v4090
      %v4186 = vadd.f32 %v3933, %v4104
      %v4187 = vadd.f32 %v3934, %v4118
      %v4188 = vadd.f32 %v3935, %v4132
      %v4189 = vadd.f32 %v3936, %v4146
      %v4190 = vadd.f32 %v3937, %v4160
      %v4191 = vadd.f32 %v3938, %v4174
      %4192 = vrot.lane.b32.xlu0 %v2502, 112
      %v4193 = vpop.permute.xlu0 %4192
      %4194 = vrot.lane.b32.xlu0 %v2503, 112
      %v4195 = vpop.permute.xlu0 %4194
      %4196 = vrot.lane.b32.xlu0 %v2504, 112
      %v4197 = vpop.permute.xlu0 %4196
      %4198 = vrot.lane.b32.xlu0 %v2505, 112
      %v4199 = vpop.permute.xlu0 %4198
      %4200 = vrot.lane.b32.xlu0 %v2506, 112
      %v4201 = vpop.permute.xlu0 %4200
      %4202 = vrot.lane.b32.xlu0 %v2507, 112
      %v4203 = vpop.permute.xlu0 %4202
      %4204 = vrot.lane.b32.xlu0 %v2508, 112
      %v4205 = vpop.permute.xlu0 %4204
      %4206 = vrot.lane.b32.xlu0 %v2509, 112
      %v4207 = vpop.permute.xlu0 %4206
      %4208 = vrot.lane.b32.xlu0 %v2510, 112
      %v4209 = vpop.permute.xlu0 %4208
      %4210 = vrot.lane.b32.xlu0 %v2511, 112
      %v4211 = vpop.permute.xlu0 %4210
      %4212 = vrot.lane.b32.xlu0 %v2512, 112
      %v4213 = vpop.permute.xlu0 %4212
      %4214 = vrot.lane.b32.xlu0 %v2513, 112
      %v4215 = vpop.permute.xlu0 %4214
      %4216 = vrot.lane.b32.xlu0 %v2514, 112
      %v4217 = vpop.permute.xlu0 %4216
      %4218 = vrot.lane.b32.xlu0 %v2515, 112
      %v4219 = vpop.permute.xlu0 %4218
      %4220 = vrot.lane.b32.xlu0 %v2516, 112
      %v4221 = vpop.permute.xlu0 %4220
      %4222 = vrot.lane.b32.xlu0 %v2517, 112
      %v4223 = vpop.permute.xlu0 %4222
      %v4224 = vsel %vm1999, %v4193, %v4195
      %v4225 = vsel %vm1999, %v4195, %v4197
      %v4226 = vsel %vm1999, %v4197, %v4199
      %v4227 = vsel %vm1999, %v4199, %v4201
      %v4228 = vsel %vm1999, %v4201, %v4203
      %v4229 = vsel %vm1999, %v4203, %v4205
      %v4230 = vsel %vm1999, %v4205, %v4207
      %v4231 = vsel %vm1999, %v4209, %v4211
      %v4232 = vsel %vm1999, %v4211, %v4213
      %v4233 = vsel %vm1999, %v4213, %v4215
      %v4234 = vsel %vm1999, %v4215, %v4217
      %v4235 = vsel %vm1999, %v4217, %v4219
      %v4236 = vsel %vm1999, %v4219, %v4221
      %v4237 = vsel %vm1999, %v4221, %v4223
      %v4256 = vsel %vm1999, %v4207, %v4193
      %v4257 = vsel %vm1999, %v4223, %v4209
      %v4258 = vmul.f32 %v4224, %v2026
      %v4259 = vmul.f32 %v4225, %v2027
      %v4260 = vmul.f32 %v4226, %v2028
      %v4261 = vmul.f32 %v4227, %v2029
      %v4262 = vmul.f32 %v4228, %v2030
      %v4263 = vmul.f32 %v4229, %v2031
      %v4264 = vmul.f32 %v4230, %v2032
      %v4265 = vmul.f32 %v4256, %v2033
      %v4266 = vmul.f32 %v4231, %v2026
      %v4267 = vmul.f32 %v4232, %v2027
      %v4268 = vmul.f32 %v4233, %v2028
      %v4269 = vmul.f32 %v4234, %v2029
      %v4270 = vmul.f32 %v4235, %v2030
      %v4271 = vmul.f32 %v4236, %v2031
      %v4272 = vmul.f32 %v4237, %v2032
      %v4273 = vmul.f32 %v4257, %v2033
      %s4274 = scalar_lea.vmem %s3, 56
      %v4275 = vld [vmem:[%s4274] sm:$0xf]
      %v4276 = vld [vmem:[%s4274 + $0x4] sm:$0x3]
      %v4277 = vpack.c.bf16 %v4266, %v4258
      %v4278 = vpack.c.bf16 %v4267, %v4259
      %v4279 = vpack.c.bf16 %v4268, %v4260
      %v4280 = vpack.c.bf16 %v4269, %v4261
      %v4281 = vpack.c.bf16 %v4270, %v4262
      %v4282 = vpack.c.bf16 %v4271, %v4263
      %v4283 = vpack.c.bf16 %v4272, %v4264
      %v4284 = vpack.c.bf16 %v4273, %v4265
      %v4287 = vunpack.c.l.b16 %v4275
      %v4288 = vunpack.c.l.b16 %v4276
      %v4289 = vpack.c.b16 %v4288, %v4287
      %v4291 = vsel %vm2724, %v4289, 0
      %v4294 = vsel %vm2728, %v4277, 0
      %v4297 = vsel %vm2728, %v4278, 0
      %v4300 = vsel %vm2728, %v4279, 0
      %v4303 = vsel %vm2728, %v4280, 0
      %v4306 = vsel %vm2728, %v4281, 0
      %v4309 = vsel %vm2728, %v4282, 0
      %v4312 = vsel %vm2728, %v4283, 0
      %v4315 = vsel %vm2728, %v4284, 0
      %4317 = vmatpush.bf16.msra.mxu0 0
      %4318 = vmatpush.bf16.msra.mxu0 0
      %4319 = vmatpush.bf16.msra.mxu0 0
      %4320 = vmatpush.bf16.msra.mxu0 0
      %4321 = vmatpush.bf16.msra.mxu0 0
      %4322 = vmatpush.bf16.msra.mxu0 0
      %4323 = vmatpush.bf16.msra.mxu0 0
      %4324 = vmatpush.bf16.msra.mxu0 %v4294
      %4325 = vmatmul.bf16.gmra.mxu0 %v4291
      %v4326 = vpop.f32.mrf.mxu0
      %v4327 = vadd.f32 0.0, %v4326
      %v4328 = vpop.f32.mrf.mxu0
      %v4329 = vadd.f32 0.0, %v4328
      %4330 = vdwg.mxu0
      %4331 = vmatpush.bf16.msra.mxu0 0
      %4332 = vmatpush.bf16.msra.mxu0 0
      %4333 = vmatpush.bf16.msra.mxu0 0
      %4334 = vmatpush.bf16.msra.mxu0 0
      %4335 = vmatpush.bf16.msra.mxu0 0
      %4336 = vmatpush.bf16.msra.mxu0 0
      %4337 = vmatpush.bf16.msra.mxu0 0
      %4338 = vmatpush.bf16.msra.mxu0 %v4297
      %4339 = vmatmul.bf16.gmra.mxu0 %v4291
      %v4340 = vpop.f32.mrf.mxu0
      %v4341 = vadd.f32 0.0, %v4340
      %v4342 = vpop.f32.mrf.mxu0
      %v4343 = vadd.f32 0.0, %v4342
      %4344 = vdwg.mxu0
      %4345 = vmatpush.bf16.msra.mxu0 0
      %4346 = vmatpush.bf16.msra.mxu0 0
      %4347 = vmatpush.bf16.msra.mxu0 0
      %4348 = vmatpush.bf16.msra.mxu0 0
      %4349 = vmatpush.bf16.msra.mxu0 0
      %4350 = vmatpush.bf16.msra.mxu0 0
      %4351 = vmatpush.bf16.msra.mxu0 0
      %4352 = vmatpush.bf16.msra.mxu0 %v4300
      %4353 = vmatmul.bf16.gmra.mxu0 %v4291
      %v4354 = vpop.f32.mrf.mxu0
      %v4355 = vadd.f32 0.0, %v4354
      %v4356 = vpop.f32.mrf.mxu0
      %v4357 = vadd.f32 0.0, %v4356
      %4358 = vdwg.mxu0
      %4359 = vmatpush.bf16.msra.mxu0 0
      %4360 = vmatpush.bf16.msra.mxu0 0
      %4361 = vmatpush.bf16.msra.mxu0 0
      %4362 = vmatpush.bf16.msra.mxu0 0
      %4363 = vmatpush.bf16.msra.mxu0 0
      %4364 = vmatpush.bf16.msra.mxu0 0
      %4365 = vmatpush.bf16.msra.mxu0 0
      %4366 = vmatpush.bf16.msra.mxu0 %v4303
      %4367 = vmatmul.bf16.gmra.mxu0 %v4291
      %v4368 = vpop.f32.mrf.mxu0
      %v4369 = vadd.f32 0.0, %v4368
      %v4370 = vpop.f32.mrf.mxu0
      %v4371 = vadd.f32 0.0, %v4370
      %4372 = vdwg.mxu0
      %4373 = vmatpush.bf16.msra.mxu0 0
      %4374 = vmatpush.bf16.msra.mxu0 0
      %4375 = vmatpush.bf16.msra.mxu0 0
      %4376 = vmatpush.bf16.msra.mxu0 0
      %4377 = vmatpush.bf16.msra.mxu0 0
      %4378 = vmatpush.bf16.msra.mxu0 0
      %4379 = vmatpush.bf16.msra.mxu0 0
      %4380 = vmatpush.bf16.msra.mxu0 %v4306
      %4381 = vmatmul.bf16.gmra.mxu0 %v4291
      %v4382 = vpop.f32.mrf.mxu0
      %v4383 = vadd.f32 0.0, %v4382
      %v4384 = vpop.f32.mrf.mxu0
      %v4385 = vadd.f32 0.0, %v4384
      %4386 = vdwg.mxu0
      %4387 = vmatpush.bf16.msra.mxu0 0
      %4388 = vmatpush.bf16.msra.mxu0 0
      %4389 = vmatpush.bf16.msra.mxu0 0
      %4390 = vmatpush.bf16.msra.mxu0 0
      %4391 = vmatpush.bf16.msra.mxu0 0
      %4392 = vmatpush.bf16.msra.mxu0 0
      %4393 = vmatpush.bf16.msra.mxu0 0
      %4394 = vmatpush.bf16.msra.mxu0 %v4309
      %4395 = vmatmul.bf16.gmra.mxu0 %v4291
      %v4396 = vpop.f32.mrf.mxu0
      %v4397 = vadd.f32 0.0, %v4396
      %v4398 = vpop.f32.mrf.mxu0
      %v4399 = vadd.f32 0.0, %v4398
      %4400 = vdwg.mxu0
      %4401 = vmatpush.bf16.msra.mxu0 0
      %4402 = vmatpush.bf16.msra.mxu0 0
      %4403 = vmatpush.bf16.msra.mxu0 0
      %4404 = vmatpush.bf16.msra.mxu0 0
      %4405 = vmatpush.bf16.msra.mxu0 0
      %4406 = vmatpush.bf16.msra.mxu0 0
      %4407 = vmatpush.bf16.msra.mxu0 0
      %4408 = vmatpush.bf16.msra.mxu0 %v4312
      %4409 = vmatmul.bf16.gmra.mxu0 %v4291
      %v4410 = vpop.f32.mrf.mxu0
      %v4411 = vadd.f32 0.0, %v4410
      %v4412 = vpop.f32.mrf.mxu0
      %v4413 = vadd.f32 0.0, %v4412
      %4414 = vdwg.mxu0
      %4415 = vmatpush.bf16.msra.mxu0 0
      %4416 = vmatpush.bf16.msra.mxu0 0
      %4417 = vmatpush.bf16.msra.mxu0 0
      %4418 = vmatpush.bf16.msra.mxu0 0
      %4419 = vmatpush.bf16.msra.mxu0 0
      %4420 = vmatpush.bf16.msra.mxu0 0
      %4421 = vmatpush.bf16.msra.mxu0 0
      %4422 = vmatpush.bf16.msra.mxu0 %v4315
      %4423 = vmatmul.bf16.gmra.mxu0 %v4291
      %v4424 = vpop.f32.mrf.mxu0
      %v4425 = vadd.f32 0.0, %v4424
      %v4426 = vpop.f32.mrf.mxu0
      %v4427 = vadd.f32 0.0, %v4426
      %4428 = vdwg.mxu0
      %v4429 = vadd.f32 %v4176, %v4327
      %v4430 = vadd.f32 %v4177, %v4341
      %v4431 = vadd.f32 %v4178, %v4355
      %v4432 = vadd.f32 %v4179, %v4369
      %v4433 = vadd.f32 %v4180, %v4383
      %v4434 = vadd.f32 %v4181, %v4397
      %v4435 = vadd.f32 %v4182, %v4411
      %v4436 = vadd.f32 %v4183, %v4425
      %v4437 = vadd.f32 %v4184, %v4329
      %v4438 = vadd.f32 %v4185, %v4343
      %v4439 = vadd.f32 %v4186, %v4357
      %v4440 = vadd.f32 %v4187, %v4371
      %v4441 = vadd.f32 %v4188, %v4385
      %v4442 = vadd.f32 %v4189, %v4399
      %v4443 = vadd.f32 %v4190, %v4413
      %v4444 = vadd.f32 %v4191, %v4427
      %4445 = vrot.lane.b32.xlu0 %v2502, 111
      %v4446 = vpop.permute.xlu0 %4445
      %4447 = vrot.lane.b32.xlu0 %v2503, 111
      %v4448 = vpop.permute.xlu0 %4447
      %4449 = vrot.lane.b32.xlu0 %v2504, 111
      %v4450 = vpop.permute.xlu0 %4449
      %4451 = vrot.lane.b32.xlu0 %v2505, 111
      %v4452 = vpop.permute.xlu0 %4451
      %4453 = vrot.lane.b32.xlu0 %v2506, 111
      %v4454 = vpop.permute.xlu0 %4453
      %4455 = vrot.lane.b32.xlu0 %v2507, 111
      %v4456 = vpop.permute.xlu0 %4455
      %4457 = vrot.lane.b32.xlu0 %v2508, 111
      %v4458 = vpop.permute.xlu0 %4457
      %4459 = vrot.lane.b32.xlu0 %v2509, 111
      %v4460 = vpop.permute.xlu0 %4459
      %4461 = vrot.lane.b32.xlu0 %v2510, 111
      %v4462 = vpop.permute.xlu0 %4461
      %4463 = vrot.lane.b32.xlu0 %v2511, 111
      %v4464 = vpop.permute.xlu0 %4463
      %4465 = vrot.lane.b32.xlu0 %v2512, 111
      %v4466 = vpop.permute.xlu0 %4465
      %4467 = vrot.lane.b32.xlu0 %v2513, 111
      %v4468 = vpop.permute.xlu0 %4467
      %4469 = vrot.lane.b32.xlu0 %v2514, 111
      %v4470 = vpop.permute.xlu0 %4469
      %4471 = vrot.lane.b32.xlu0 %v2515, 111
      %v4472 = vpop.permute.xlu0 %4471
      %4473 = vrot.lane.b32.xlu0 %v2516, 111
      %v4474 = vpop.permute.xlu0 %4473
      %4475 = vrot.lane.b32.xlu0 %v2517, 111
      %v4476 = vpop.permute.xlu0 %4475
      %v4477 = vsel %vm2252, %v4446, %v4448
      %v4478 = vsel %vm2252, %v4448, %v4450
      %v4479 = vsel %vm2252, %v4450, %v4452
      %v4480 = vsel %vm2252, %v4452, %v4454
      %v4481 = vsel %vm2252, %v4454, %v4456
      %v4482 = vsel %vm2252, %v4456, %v4458
      %v4483 = vsel %vm2252, %v4458, %v4460
      %v4484 = vsel %vm2252, %v4462, %v4464
      %v4485 = vsel %vm2252, %v4464, %v4466
      %v4486 = vsel %vm2252, %v4466, %v4468
      %v4487 = vsel %vm2252, %v4468, %v4470
      %v4488 = vsel %vm2252, %v4470, %v4472
      %v4489 = vsel %vm2252, %v4472, %v4474
      %v4490 = vsel %vm2252, %v4474, %v4476
      %v4509 = vsel %vm2252, %v4460, %v4446
      %v4510 = vsel %vm2252, %v4476, %v4462
      %v4511 = vmul.f32 %v4477, %v2279
      %v4512 = vmul.f32 %v4478, %v2280
      %v4513 = vmul.f32 %v4479, %v2281
      %v4514 = vmul.f32 %v4480, %v2282
      %v4515 = vmul.f32 %v4481, %v2283
      %v4516 = vmul.f32 %v4482, %v2284
      %v4517 = vmul.f32 %v4483, %v2285
      %v4518 = vmul.f32 %v4509, %v2286
      %v4519 = vmul.f32 %v4484, %v2279
      %v4520 = vmul.f32 %v4485, %v2280
      %v4521 = vmul.f32 %v4486, %v2281
      %v4522 = vmul.f32 %v4487, %v2282
      %v4523 = vmul.f32 %v4488, %v2283
      %v4524 = vmul.f32 %v4489, %v2284
      %v4525 = vmul.f32 %v4490, %v2285
      %v4526 = vmul.f32 %v4510, %v2286
      %s4527 = scalar_lea.vmem %s3, 64
      %v4528 = vld [vmem:[%s4527] sm:$0xf]
      %v4529 = vld [vmem:[%s4527 + $0x4] sm:$0x3]
      %v4530 = vpack.c.bf16 %v4519, %v4511
      %v4531 = vpack.c.bf16 %v4520, %v4512
      %v4532 = vpack.c.bf16 %v4521, %v4513
      %v4533 = vpack.c.bf16 %v4522, %v4514
      %v4534 = vpack.c.bf16 %v4523, %v4515
      %v4535 = vpack.c.bf16 %v4524, %v4516
      %v4536 = vpack.c.bf16 %v4525, %v4517
      %v4537 = vpack.c.bf16 %v4526, %v4518
      %v4540 = vunpack.c.l.b16 %v4528
      %v4541 = vunpack.c.l.b16 %v4529
      %v4542 = vpack.c.b16 %v4541, %v4540
      %v4544 = vsel %vm2724, %v4542, 0
      %v4547 = vsel %vm2728, %v4530, 0
      %v4550 = vsel %vm2728, %v4531, 0
      %v4553 = vsel %vm2728, %v4532, 0
      %v4556 = vsel %vm2728, %v4533, 0
      %v4559 = vsel %vm2728, %v4534, 0
      %v4562 = vsel %vm2728, %v4535, 0
      %v4565 = vsel %vm2728, %v4536, 0
      %v4568 = vsel %vm2728, %v4537, 0
      %4570 = vmatpush.bf16.msra.mxu0 0
      %4571 = vmatpush.bf16.msra.mxu0 0
      %4572 = vmatpush.bf16.msra.mxu0 0
      %4573 = vmatpush.bf16.msra.mxu0 0
      %4574 = vmatpush.bf16.msra.mxu0 0
      %4575 = vmatpush.bf16.msra.mxu0 0
      %4576 = vmatpush.bf16.msra.mxu0 0
      %4577 = vmatpush.bf16.msra.mxu0 %v4547
      %4578 = vmatmul.bf16.gmra.mxu0 %v4544
      %v4579 = vpop.f32.mrf.mxu0
      %v4580 = vadd.f32 0.0, %v4579
      %v4581 = vpop.f32.mrf.mxu0
      %v4582 = vadd.f32 0.0, %v4581
      %4583 = vdwg.mxu0
      %4584 = vmatpush.bf16.msra.mxu0 0
      %4585 = vmatpush.bf16.msra.mxu0 0
      %4586 = vmatpush.bf16.msra.mxu0 0
      %4587 = vmatpush.bf16.msra.mxu0 0
      %4588 = vmatpush.bf16.msra.mxu0 0
      %4589 = vmatpush.bf16.msra.mxu0 0
      %4590 = vmatpush.bf16.msra.mxu0 0
      %4591 = vmatpush.bf16.msra.mxu0 %v4550
      %4592 = vmatmul.bf16.gmra.mxu0 %v4544
      %v4593 = vpop.f32.mrf.mxu0
      %v4594 = vadd.f32 0.0, %v4593
      %v4595 = vpop.f32.mrf.mxu0
      %v4596 = vadd.f32 0.0, %v4595
      %4597 = vdwg.mxu0
      %4598 = vmatpush.bf16.msra.mxu0 0
      %4599 = vmatpush.bf16.msra.mxu0 0
      %4600 = vmatpush.bf16.msra.mxu0 0
      %4601 = vmatpush.bf16.msra.mxu0 0
      %4602 = vmatpush.bf16.msra.mxu0 0
      %4603 = vmatpush.bf16.msra.mxu0 0
      %4604 = vmatpush.bf16.msra.mxu0 0
      %4605 = vmatpush.bf16.msra.mxu0 %v4553
      %4606 = vmatmul.bf16.gmra.mxu0 %v4544
      %v4607 = vpop.f32.mrf.mxu0
      %v4608 = vadd.f32 0.0, %v4607
      %v4609 = vpop.f32.mrf.mxu0
      %v4610 = vadd.f32 0.0, %v4609
      %4611 = vdwg.mxu0
      %4612 = vmatpush.bf16.msra.mxu0 0
      %4613 = vmatpush.bf16.msra.mxu0 0
      %4614 = vmatpush.bf16.msra.mxu0 0
      %4615 = vmatpush.bf16.msra.mxu0 0
      %4616 = vmatpush.bf16.msra.mxu0 0
      %4617 = vmatpush.bf16.msra.mxu0 0
      %4618 = vmatpush.bf16.msra.mxu0 0
      %4619 = vmatpush.bf16.msra.mxu0 %v4556
      %4620 = vmatmul.bf16.gmra.mxu0 %v4544
      %v4621 = vpop.f32.mrf.mxu0
      %v4622 = vadd.f32 0.0, %v4621
      %v4623 = vpop.f32.mrf.mxu0
      %v4624 = vadd.f32 0.0, %v4623
      %4625 = vdwg.mxu0
      %4626 = vmatpush.bf16.msra.mxu0 0
      %4627 = vmatpush.bf16.msra.mxu0 0
      %4628 = vmatpush.bf16.msra.mxu0 0
      %4629 = vmatpush.bf16.msra.mxu0 0
      %4630 = vmatpush.bf16.msra.mxu0 0
      %4631 = vmatpush.bf16.msra.mxu0 0
      %4632 = vmatpush.bf16.msra.mxu0 0
      %4633 = vmatpush.bf16.msra.mxu0 %v4559
      %4634 = vmatmul.bf16.gmra.mxu0 %v4544
      %v4635 = vpop.f32.mrf.mxu0
      %v4636 = vadd.f32 0.0, %v4635
      %v4637 = vpop.f32.mrf.mxu0
      %v4638 = vadd.f32 0.0, %v4637
      %4639 = vdwg.mxu0
      %4640 = vmatpush.bf16.msra.mxu0 0
      %4641 = vmatpush.bf16.msra.mxu0 0
      %4642 = vmatpush.bf16.msra.mxu0 0
      %4643 = vmatpush.bf16.msra.mxu0 0
      %4644 = vmatpush.bf16.msra.mxu0 0
      %4645 = vmatpush.bf16.msra.mxu0 0
      %4646 = vmatpush.bf16.msra.mxu0 0
      %4647 = vmatpush.bf16.msra.mxu0 %v4562
      %4648 = vmatmul.bf16.gmra.mxu0 %v4544
      %v4649 = vpop.f32.mrf.mxu0
      %v4650 = vadd.f32 0.0, %v4649
      %v4651 = vpop.f32.mrf.mxu0
      %v4652 = vadd.f32 0.0, %v4651
      %4653 = vdwg.mxu0
      %4654 = vmatpush.bf16.msra.mxu0 0
      %4655 = vmatpush.bf16.msra.mxu0 0
      %4656 = vmatpush.bf16.msra.mxu0 0
      %4657 = vmatpush.bf16.msra.mxu0 0
      %4658 = vmatpush.bf16.msra.mxu0 0
      %4659 = vmatpush.bf16.msra.mxu0 0
      %4660 = vmatpush.bf16.msra.mxu0 0
      %4661 = vmatpush.bf16.msra.mxu0 %v4565
      %4662 = vmatmul.bf16.gmra.mxu0 %v4544
      %v4663 = vpop.f32.mrf.mxu0
      %v4664 = vadd.f32 0.0, %v4663
      %v4665 = vpop.f32.mrf.mxu0
      %v4666 = vadd.f32 0.0, %v4665
      %4667 = vdwg.mxu0
      %4668 = vmatpush.bf16.msra.mxu0 0
      %4669 = vmatpush.bf16.msra.mxu0 0
      %4670 = vmatpush.bf16.msra.mxu0 0
      %4671 = vmatpush.bf16.msra.mxu0 0
      %4672 = vmatpush.bf16.msra.mxu0 0
      %4673 = vmatpush.bf16.msra.mxu0 0
      %4674 = vmatpush.bf16.msra.mxu0 0
      %4675 = vmatpush.bf16.msra.mxu0 %v4568
      %4676 = vmatmul.bf16.gmra.mxu0 %v4544
      %v4677 = vpop.f32.mrf.mxu0
      %v4678 = vadd.f32 0.0, %v4677
      %v4679 = vpop.f32.mrf.mxu0
      %v4680 = vadd.f32 0.0, %v4679
      %4681 = vdwg.mxu0
      %v4682 = vadd.f32 %v4429, %v4580
      %v4683 = vadd.f32 %v4430, %v4594
      %v4684 = vadd.f32 %v4431, %v4608
      %v4685 = vadd.f32 %v4432, %v4622
      %v4686 = vadd.f32 %v4433, %v4636
      %v4687 = vadd.f32 %v4434, %v4650
      %v4688 = vadd.f32 %v4435, %v4664
      %v4689 = vadd.f32 %v4436, %v4678
      %v4690 = vadd.f32 %v4437, %v4582
      %v4691 = vadd.f32 %v4438, %v4596
      %v4692 = vadd.f32 %v4439, %v4610
      %v4693 = vadd.f32 %v4440, %v4624
      %v4694 = vadd.f32 %v4441, %v4638
      %v4695 = vadd.f32 %v4442, %v4652
      %v4696 = vadd.f32 %v4443, %v4666
      %v4697 = vadd.f32 %v4444, %v4680
      %v4698 = vld [vmem:[%s4] sm:$0xff]
      %v4699 = vld [vmem:[%s4 + $0x8] sm:$0xf]
      %4701 = vset.pattern.permute.xlu0 0
      %4702 = vperm.xlu0 %4701, %v4698
      %v4703 = vpop.permute.xlu0 %4702
      %4706 = vset.pattern.permute.xlu0 0
      %4707 = vperm.xlu0 %4706, %v4699
      %v4708 = vpop.permute.xlu0 %4707
      %v4710 = vadd.f32 %v4682, %v4703
      %v4711 = vadd.f32 %v4683, %v4703
      %v4712 = vadd.f32 %v4684, %v4703
      %v4713 = vadd.f32 %v4685, %v4703
      %v4714 = vadd.f32 %v4686, %v4703
      %v4715 = vadd.f32 %v4687, %v4703
      %v4716 = vadd.f32 %v4688, %v4703
      %v4717 = vadd.f32 %v4689, %v4703
      %v4718 = vadd.f32 %v4690, %v4708
      %v4719 = vadd.f32 %v4691, %v4708
      %v4720 = vadd.f32 %v4692, %v4708
      %v4721 = vadd.f32 %v4693, %v4708
      %v4722 = vadd.f32 %v4694, %v4708
      %v4723 = vadd.f32 %v4695, %v4708
      %v4724 = vadd.f32 %v4696, %v4708
      %v4725 = vadd.f32 %v4697, %v4708
      %v4726 = vmax.f32 %v4710, 0.0
      %v4727 = vmax.f32 %v4711, 0.0
      %v4728 = vmax.f32 %v4712, 0.0
      %v4729 = vmax.f32 %v4713, 0.0
      %v4730 = vmax.f32 %v4714, 0.0
      %v4731 = vmax.f32 %v4715, 0.0
      %v4732 = vmax.f32 %v4716, 0.0
      %v4733 = vmax.f32 %v4717, 0.0
      %v4734 = vmax.f32 %v4718, 0.0
      %v4735 = vmax.f32 %v4719, 0.0
      %v4736 = vmax.f32 %v4720, 0.0
      %v4737 = vmax.f32 %v4721, 0.0
      %v4738 = vmax.f32 %v4722, 0.0
      %v4739 = vmax.f32 %v4723, 0.0
      %v4740 = vmax.f32 %v4724, 0.0
      %v4741 = vmax.f32 %v4725, 0.0
      %v4742 = vld [vmem:[%s6] sm:$0xff]
      %v4743 = vld [vmem:[%s6 + $0x8] sm:$0xff]
      %v4744 = vld [vmem:[%s6 + $0x10] sm:$0xff]
      %v4745 = vld [vmem:[%s6 + $0x18] sm:$0xff]
      %v4754 = vrot.slane %v4726, 4
      %v4755 = vrot.slane %v4727, 4
      %v4756 = vrot.slane %v4728, 4
      %v4757 = vrot.slane %v4729, 4
      %v4758 = vrot.slane %v4730, 4
      %v4759 = vrot.slane %v4731, 4
      %v4760 = vrot.slane %v4732, 4
      %v4761 = vrot.slane %v4733, 4
      %v4770 = vmul.f32 %v4726, %v4754
      %v4771 = vmul.f32 %v4727, %v4755
      %v4772 = vmul.f32 %v4728, %v4756
      %v4773 = vmul.f32 %v4729, %v4757
      %v4774 = vmul.f32 %v4730, %v4758
      %v4775 = vmul.f32 %v4731, %v4759
      %v4776 = vmul.f32 %v4732, %v4760
      %v4777 = vmul.f32 %v4733, %v4761
      %4782 = vst [vmem:[#allocation1] ss:$2 sm:$0xff] %v4742
      %s4783 = scalar_lea.vmem [#allocation1], 16
      %4784 = vst [vmem:[%s4783] ss:$2 sm:$0xff] %v4743
      %s4785 = scalar_lea.vmem [#allocation1], 32
      %4786 = vst [vmem:[%s4785] ss:$2 sm:$0xff] %v4744
      %s4787 = scalar_lea.vmem [#allocation1], 48
      %4788 = vst [vmem:[%s4787] ss:$2 sm:$0xff] %v4745
      %v4789 = vld.sshfl [vmem:[#allocation1] sm:$0xff pattern:$0x75316420]
      %v4790 = vld.sshfl [vmem:[#allocation1 + $0x8] sm:$0xff pattern:$0x75316420]
      %v4791 = vld.sshfl [vmem:[#allocation1 + $0x10] sm:$0xff pattern:$0x75316420]
      %v4792 = vld.sshfl [vmem:[#allocation1 + $0x18] sm:$0xff pattern:$0x75316420]
      %v4793 = vld.sshfl [vmem:[#allocation1 + $0x20] sm:$0xff pattern:$0x75316420]
      %v4794 = vld.sshfl [vmem:[#allocation1 + $0x28] sm:$0xff pattern:$0x75316420]
      %v4795 = vld.sshfl [vmem:[#allocation1 + $0x30] sm:$0xff pattern:$0x75316420]
      %v4796 = vld.sshfl [vmem:[#allocation1 + $0x38] sm:$0xff pattern:$0x75316420]
      %4805 = vmatpush.xpose.msra.mxu0 0.0
      %4806 = vmatpush.xpose.msra.mxu0 0.0
      %4807 = vmatpush.xpose.msra.mxu0 0.0
      %4808 = vmatpush.xpose.msra.mxu0 0.0
      %4809 = vmatpush.xpose.msra.mxu0 0.0
      %4810 = vmatpush.xpose.msra.mxu0 0.0
      %4811 = vmatpush.xpose.msra.mxu0 0.0
      %4812 = vmatpush.xpose.msra.mxu0 0.0
      %4813 = vmatpush.xpose.msra.mxu0 0.0
      %4814 = vmatpush.xpose.msra.mxu0 0.0
      %4815 = vmatpush.xpose.msra.mxu0 0.0
      %4816 = vmatpush.xpose.msra.mxu0 0.0
      %4817 = vmatpush.xpose.msra.mxu0 0.0
      %4818 = vmatpush.xpose.msra.mxu0 0.0
      %4819 = vmatpush.xpose.msra.mxu0 0.0
      %4820 = vmatpush.xpose.msra.mxu0 %v4789
      %4821 = vmatmul.f32.gmra.mxu0 %v4770
      %v4822 = vpop.f32.mrf.mxu0
      %v4823 = vadd.f32 0.0, %v4822
      %4824 = vdwg.mxu0
      %4825 = vmatpush.xpose.msra.mxu0 0.0
      %4826 = vmatpush.xpose.msra.mxu0 0.0
      %4827 = vmatpush.xpose.msra.mxu0 0.0
      %4828 = vmatpush.xpose.msra.mxu0 0.0
      %4829 = vmatpush.xpose.msra.mxu0 0.0
      %4830 = vmatpush.xpose.msra.mxu0 0.0
      %4831 = vmatpush.xpose.msra.mxu0 0.0
      %4832 = vmatpush.xpose.msra.mxu0 0.0
      %4833 = vmatpush.xpose.msra.mxu0 0.0
      %4834 = vmatpush.xpose.msra.mxu0 0.0
      %4835 = vmatpush.xpose.msra.mxu0 0.0
      %4836 = vmatpush.xpose.msra.mxu0 0.0
      %4837 = vmatpush.xpose.msra.mxu0 0.0
      %4838 = vmatpush.xpose.msra.mxu0 0.0
      %4839 = vmatpush.xpose.msra.mxu0 0.0
      %4840 = vmatpush.xpose.msra.mxu0 %v4790
      %4841 = vmatmul.f32.gmra.mxu0 %v4771
      %v4842 = vpop.f32.mrf.mxu0
      %v4843 = vadd.f32 %v4823, %v4842
      %4844 = vdwg.mxu0
      %4845 = vmatpush.xpose.msra.mxu0 0.0
      %4846 = vmatpush.xpose.msra.mxu0 0.0
      %4847 = vmatpush.xpose.msra.mxu0 0.0
      %4848 = vmatpush.xpose.msra.mxu0 0.0
      %4849 = vmatpush.xpose.msra.mxu0 0.0
      %4850 = vmatpush.xpose.msra.mxu0 0.0
      %4851 = vmatpush.xpose.msra.mxu0 0.0
      %4852 = vmatpush.xpose.msra.mxu0 0.0
      %4853 = vmatpush.xpose.msra.mxu0 0.0
      %4854 = vmatpush.xpose.msra.mxu0 0.0
      %4855 = vmatpush.xpose.msra.mxu0 0.0
      %4856 = vmatpush.xpose.msra.mxu0 0.0
      %4857 = vmatpush.xpose.msra.mxu0 0.0
      %4858 = vmatpush.xpose.msra.mxu0 0.0
      %4859 = vmatpush.xpose.msra.mxu0 0.0
      %4860 = vmatpush.xpose.msra.mxu0 %v4791
      %4861 = vmatmul.f32.gmra.mxu0 %v4772
      %v4862 = vpop.f32.mrf.mxu0
      %v4863 = vadd.f32 %v4843, %v4862
      %4864 = vdwg.mxu0
      %4865 = vmatpush.xpose.msra.mxu0 0.0
      %4866 = vmatpush.xpose.msra.mxu0 0.0
      %4867 = vmatpush.xpose.msra.mxu0 0.0
      %4868 = vmatpush.xpose.msra.mxu0 0.0
      %4869 = vmatpush.xpose.msra.mxu0 0.0
      %4870 = vmatpush.xpose.msra.mxu0 0.0
      %4871 = vmatpush.xpose.msra.mxu0 0.0
      %4872 = vmatpush.xpose.msra.mxu0 0.0
      %4873 = vmatpush.xpose.msra.mxu0 0.0
      %4874 = vmatpush.xpose.msra.mxu0 0.0
      %4875 = vmatpush.xpose.msra.mxu0 0.0
      %4876 = vmatpush.xpose.msra.mxu0 0.0
      %4877 = vmatpush.xpose.msra.mxu0 0.0
      %4878 = vmatpush.xpose.msra.mxu0 0.0
      %4879 = vmatpush.xpose.msra.mxu0 0.0
      %4880 = vmatpush.xpose.msra.mxu0 %v4792
      %4881 = vmatmul.f32.gmra.mxu0 %v4773
      %v4882 = vpop.f32.mrf.mxu0
      %v4883 = vadd.f32 %v4863, %v4882
      %4884 = vdwg.mxu0
      %4885 = vmatpush.xpose.msra.mxu0 0.0
      %4886 = vmatpush.xpose.msra.mxu0 0.0
      %4887 = vmatpush.xpose.msra.mxu0 0.0
      %4888 = vmatpush.xpose.msra.mxu0 0.0
      %4889 = vmatpush.xpose.msra.mxu0 0.0
      %4890 = vmatpush.xpose.msra.mxu0 0.0
      %4891 = vmatpush.xpose.msra.mxu0 0.0
      %4892 = vmatpush.xpose.msra.mxu0 0.0
      %4893 = vmatpush.xpose.msra.mxu0 0.0
      %4894 = vmatpush.xpose.msra.mxu0 0.0
      %4895 = vmatpush.xpose.msra.mxu0 0.0
      %4896 = vmatpush.xpose.msra.mxu0 0.0
      %4897 = vmatpush.xpose.msra.mxu0 0.0
      %4898 = vmatpush.xpose.msra.mxu0 0.0
      %4899 = vmatpush.xpose.msra.mxu0 0.0
      %4900 = vmatpush.xpose.msra.mxu0 %v4793
      %4901 = vmatmul.f32.gmra.mxu0 %v4774
      %v4902 = vpop.f32.mrf.mxu0
      %v4903 = vadd.f32 %v4883, %v4902
      %4904 = vdwg.mxu0
      %4905 = vmatpush.xpose.msra.mxu0 0.0
      %4906 = vmatpush.xpose.msra.mxu0 0.0
      %4907 = vmatpush.xpose.msra.mxu0 0.0
      %4908 = vmatpush.xpose.msra.mxu0 0.0
      %4909 = vmatpush.xpose.msra.mxu0 0.0
      %4910 = vmatpush.xpose.msra.mxu0 0.0
      %4911 = vmatpush.xpose.msra.mxu0 0.0
      %4912 = vmatpush.xpose.msra.mxu0 0.0
      %4913 = vmatpush.xpose.msra.mxu0 0.0
      %4914 = vmatpush.xpose.msra.mxu0 0.0
      %4915 = vmatpush.xpose.msra.mxu0 0.0
      %4916 = vmatpush.xpose.msra.mxu0 0.0
      %4917 = vmatpush.xpose.msra.mxu0 0.0
      %4918 = vmatpush.xpose.msra.mxu0 0.0
      %4919 = vmatpush.xpose.msra.mxu0 0.0
      %4920 = vmatpush.xpose.msra.mxu0 %v4794
      %4921 = vmatmul.f32.gmra.mxu0 %v4775
      %v4922 = vpop.f32.mrf.mxu0
      %v4923 = vadd.f32 %v4903, %v4922
      %4924 = vdwg.mxu0
      %4925 = vmatpush.xpose.msra.mxu0 0.0
      %4926 = vmatpush.xpose.msra.mxu0 0.0
      %4927 = vmatpush.xpose.msra.mxu0 0.0
      %4928 = vmatpush.xpose.msra.mxu0 0.0
      %4929 = vmatpush.xpose.msra.mxu0 0.0
      %4930 = vmatpush.xpose.msra.mxu0 0.0
      %4931 = vmatpush.xpose.msra.mxu0 0.0
      %4932 = vmatpush.xpose.msra.mxu0 0.0
      %4933 = vmatpush.xpose.msra.mxu0 0.0
      %4934 = vmatpush.xpose.msra.mxu0 0.0
      %4935 = vmatpush.xpose.msra.mxu0 0.0
      %4936 = vmatpush.xpose.msra.mxu0 0.0
      %4937 = vmatpush.xpose.msra.mxu0 0.0
      %4938 = vmatpush.xpose.msra.mxu0 0.0
      %4939 = vmatpush.xpose.msra.mxu0 0.0
      %4940 = vmatpush.xpose.msra.mxu0 %v4795
      %4941 = vmatmul.f32.gmra.mxu0 %v4776
      %v4942 = vpop.f32.mrf.mxu0
      %v4943 = vadd.f32 %v4923, %v4942
      %4944 = vdwg.mxu0
      %4945 = vmatpush.xpose.msra.mxu0 0.0
      %4946 = vmatpush.xpose.msra.mxu0 0.0
      %4947 = vmatpush.xpose.msra.mxu0 0.0
      %4948 = vmatpush.xpose.msra.mxu0 0.0
      %4949 = vmatpush.xpose.msra.mxu0 0.0
      %4950 = vmatpush.xpose.msra.mxu0 0.0
      %4951 = vmatpush.xpose.msra.mxu0 0.0
      %4952 = vmatpush.xpose.msra.mxu0 0.0
      %4953 = vmatpush.xpose.msra.mxu0 0.0
      %4954 = vmatpush.xpose.msra.mxu0 0.0
      %4955 = vmatpush.xpose.msra.mxu0 0.0
      %4956 = vmatpush.xpose.msra.mxu0 0.0
      %4957 = vmatpush.xpose.msra.mxu0 0.0
      %4958 = vmatpush.xpose.msra.mxu0 0.0
      %4959 = vmatpush.xpose.msra.mxu0 0.0
      %4960 = vmatpush.xpose.msra.mxu0 %v4796
      %4961 = vmatmul.f32.gmra.mxu0 %v4777
      %v4962 = vpop.f32.mrf.mxu0
      %v4963 = vadd.f32 %v4943, %v4962
      %4964 = vdwg.mxu0
      %vm4965 = vcmask 27648
      %v4966 = vsel %vm4965, %v4963, 0.0
      %v4967 = vrot.slane %v4966, 4
      %v4968 = vadd.f32 %v4966, %v4967
      %v4969 = vrot.slane %v4968, 2
      %v4970 = vadd.f32 %v4968, %v4969
      %v4971 = vrot.slane %v4970, 1
      %v4972 = vadd.f32 %v4970, %v4971
      %v4973 = vmul.f32 %v4726, %v4760
      %v4974 = vmul.f32 %v4727, %v4761
      %v4975 = vmul.f32 %v4728, %v4754
      %v4976 = vmul.f32 %v4729, %v4755
      %v4977 = vmul.f32 %v4730, %v4756
      %v4978 = vmul.f32 %v4731, %v4757
      %v4979 = vmul.f32 %v4732, %v4758
      %v4980 = vmul.f32 %v4733, %v4759
      %4981 = vst [vmem:[#allocation1] ss:$2 sm:$0xff] %v4742
      %s4982 = scalar_lea.vmem [#allocation1], 16
      %4983 = vst [vmem:[%s4982] ss:$2 sm:$0xff] %v4743
      %s4984 = scalar_lea.vmem [#allocation1], 32
      %4985 = vst [vmem:[%s4984] ss:$2 sm:$0xff] %v4744
      %s4986 = scalar_lea.vmem [#allocation1], 48
      %4987 = vst [vmem:[%s4986] ss:$2 sm:$0xff] %v4745
      %v4988 = vld.sshfl [vmem:[#allocation1] sm:$0xff pattern:$0x75316420]
      %v4989 = vld.sshfl [vmem:[#allocation1 + $0x8] sm:$0xff pattern:$0x75316420]
      %v4990 = vld.sshfl [vmem:[#allocation1 + $0x10] sm:$0xff pattern:$0x75316420]
      %v4991 = vld.sshfl [vmem:[#allocation1 + $0x18] sm:$0xff pattern:$0x75316420]
      %v4992 = vld.sshfl [vmem:[#allocation1 + $0x20] sm:$0xff pattern:$0x75316420]
      %v4993 = vld.sshfl [vmem:[#allocation1 + $0x28] sm:$0xff pattern:$0x75316420]
      %v4994 = vld.sshfl [vmem:[#allocation1 + $0x30] sm:$0xff pattern:$0x75316420]
      %v4995 = vld.sshfl [vmem:[#allocation1 + $0x38] sm:$0xff pattern:$0x75316420]
      %5004 = vmatpush.xpose.msra.mxu0 0.0
      %5005 = vmatpush.xpose.msra.mxu0 0.0
      %5006 = vmatpush.xpose.msra.mxu0 0.0
      %5007 = vmatpush.xpose.msra.mxu0 0.0
      %5008 = vmatpush.xpose.msra.mxu0 0.0
      %5009 = vmatpush.xpose.msra.mxu0 0.0
      %5010 = vmatpush.xpose.msra.mxu0 0.0
      %5011 = vmatpush.xpose.msra.mxu0 0.0
      %5012 = vmatpush.xpose.msra.mxu0 0.0
      %5013 = vmatpush.xpose.msra.mxu0 0.0
      %5014 = vmatpush.xpose.msra.mxu0 0.0
      %5015 = vmatpush.xpose.msra.mxu0 0.0
      %5016 = vmatpush.xpose.msra.mxu0 0.0
      %5017 = vmatpush.xpose.msra.mxu0 0.0
      %5018 = vmatpush.xpose.msra.mxu0 0.0
      %5019 = vmatpush.xpose.msra.mxu0 %v4988
      %5020 = vmatmul.f32.gmra.mxu0 %v4973
      %v5021 = vpop.f32.mrf.mxu0
      %v5022 = vadd.f32 0.0, %v5021
      %5023 = vdwg.mxu0
      %5024 = vmatpush.xpose.msra.mxu0 0.0
      %5025 = vmatpush.xpose.msra.mxu0 0.0
      %5026 = vmatpush.xpose.msra.mxu0 0.0
      %5027 = vmatpush.xpose.msra.mxu0 0.0
      %5028 = vmatpush.xpose.msra.mxu0 0.0
      %5029 = vmatpush.xpose.msra.mxu0 0.0
      %5030 = vmatpush.xpose.msra.mxu0 0.0
      %5031 = vmatpush.xpose.msra.mxu0 0.0
      %5032 = vmatpush.xpose.msra.mxu0 0.0
      %5033 = vmatpush.xpose.msra.mxu0 0.0
      %5034 = vmatpush.xpose.msra.mxu0 0.0
      %5035 = vmatpush.xpose.msra.mxu0 0.0
      %5036 = vmatpush.xpose.msra.mxu0 0.0
      %5037 = vmatpush.xpose.msra.mxu0 0.0
      %5038 = vmatpush.xpose.msra.mxu0 0.0
      %5039 = vmatpush.xpose.msra.mxu0 %v4989
      %5040 = vmatmul.f32.gmra.mxu0 %v4974
      %v5041 = vpop.f32.mrf.mxu0
      %v5042 = vadd.f32 %v5022, %v5041
      %5043 = vdwg.mxu0
      %5044 = vmatpush.xpose.msra.mxu0 0.0
      %5045 = vmatpush.xpose.msra.mxu0 0.0
      %5046 = vmatpush.xpose.msra.mxu0 0.0
      %5047 = vmatpush.xpose.msra.mxu0 0.0
      %5048 = vmatpush.xpose.msra.mxu0 0.0
      %5049 = vmatpush.xpose.msra.mxu0 0.0
      %5050 = vmatpush.xpose.msra.mxu0 0.0
      %5051 = vmatpush.xpose.msra.mxu0 0.0
      %5052 = vmatpush.xpose.msra.mxu0 0.0
      %5053 = vmatpush.xpose.msra.mxu0 0.0
      %5054 = vmatpush.xpose.msra.mxu0 0.0
      %5055 = vmatpush.xpose.msra.mxu0 0.0
      %5056 = vmatpush.xpose.msra.mxu0 0.0
      %5057 = vmatpush.xpose.msra.mxu0 0.0
      %5058 = vmatpush.xpose.msra.mxu0 0.0
      %5059 = vmatpush.xpose.msra.mxu0 %v4990
      %5060 = vmatmul.f32.gmra.mxu0 %v4975
      %v5061 = vpop.f32.mrf.mxu0
      %v5062 = vadd.f32 %v5042, %v5061
      %5063 = vdwg.mxu0
      %5064 = vmatpush.xpose.msra.mxu0 0.0
      %5065 = vmatpush.xpose.msra.mxu0 0.0
      %5066 = vmatpush.xpose.msra.mxu0 0.0
      %5067 = vmatpush.xpose.msra.mxu0 0.0
      %5068 = vmatpush.xpose.msra.mxu0 0.0
      %5069 = vmatpush.xpose.msra.mxu0 0.0
      %5070 = vmatpush.xpose.msra.mxu0 0.0
      %5071 = vmatpush.xpose.msra.mxu0 0.0
      %5072 = vmatpush.xpose.msra.mxu0 0.0
      %5073 = vmatpush.xpose.msra.mxu0 0.0
      %5074 = vmatpush.xpose.msra.mxu0 0.0
      %5075 = vmatpush.xpose.msra.mxu0 0.0
      %5076 = vmatpush.xpose.msra.mxu0 0.0
      %5077 = vmatpush.xpose.msra.mxu0 0.0
      %5078 = vmatpush.xpose.msra.mxu0 0.0
      %5079 = vmatpush.xpose.msra.mxu0 %v4991
      %5080 = vmatmul.f32.gmra.mxu0 %v4976
      %v5081 = vpop.f32.mrf.mxu0
      %v5082 = vadd.f32 %v5062, %v5081
      %5083 = vdwg.mxu0
      %5084 = vmatpush.xpose.msra.mxu0 0.0
      %5085 = vmatpush.xpose.msra.mxu0 0.0
      %5086 = vmatpush.xpose.msra.mxu0 0.0
      %5087 = vmatpush.xpose.msra.mxu0 0.0
      %5088 = vmatpush.xpose.msra.mxu0 0.0
      %5089 = vmatpush.xpose.msra.mxu0 0.0
      %5090 = vmatpush.xpose.msra.mxu0 0.0
      %5091 = vmatpush.xpose.msra.mxu0 0.0
      %5092 = vmatpush.xpose.msra.mxu0 0.0
      %5093 = vmatpush.xpose.msra.mxu0 0.0
      %5094 = vmatpush.xpose.msra.mxu0 0.0
      %5095 = vmatpush.xpose.msra.mxu0 0.0
      %5096 = vmatpush.xpose.msra.mxu0 0.0
      %5097 = vmatpush.xpose.msra.mxu0 0.0
      %5098 = vmatpush.xpose.msra.mxu0 0.0
      %5099 = vmatpush.xpose.msra.mxu0 %v4992
      %5100 = vmatmul.f32.gmra.mxu0 %v4977
      %v5101 = vpop.f32.mrf.mxu0
      %v5102 = vadd.f32 %v5082, %v5101
      %5103 = vdwg.mxu0
      %5104 = vmatpush.xpose.msra.mxu0 0.0
      %5105 = vmatpush.xpose.msra.mxu0 0.0
      %5106 = vmatpush.xpose.msra.mxu0 0.0
      %5107 = vmatpush.xpose.msra.mxu0 0.0
      %5108 = vmatpush.xpose.msra.mxu0 0.0
      %5109 = vmatpush.xpose.msra.mxu0 0.0
      %5110 = vmatpush.xpose.msra.mxu0 0.0
      %5111 = vmatpush.xpose.msra.mxu0 0.0
      %5112 = vmatpush.xpose.msra.mxu0 0.0
      %5113 = vmatpush.xpose.msra.mxu0 0.0
      %5114 = vmatpush.xpose.msra.mxu0 0.0
      %5115 = vmatpush.xpose.msra.mxu0 0.0
      %5116 = vmatpush.xpose.msra.mxu0 0.0
      %5117 = vmatpush.xpose.msra.mxu0 0.0
      %5118 = vmatpush.xpose.msra.mxu0 0.0
      %5119 = vmatpush.xpose.msra.mxu0 %v4993
      %5120 = vmatmul.f32.gmra.mxu0 %v4978
      %v5121 = vpop.f32.mrf.mxu0
      %v5122 = vadd.f32 %v5102, %v5121
      %5123 = vdwg.mxu0
      %5124 = vmatpush.xpose.msra.mxu0 0.0
      %5125 = vmatpush.xpose.msra.mxu0 0.0
      %5126 = vmatpush.xpose.msra.mxu0 0.0
      %5127 = vmatpush.xpose.msra.mxu0 0.0
      %5128 = vmatpush.xpose.msra.mxu0 0.0
      %5129 = vmatpush.xpose.msra.mxu0 0.0
      %5130 = vmatpush.xpose.msra.mxu0 0.0
      %5131 = vmatpush.xpose.msra.mxu0 0.0
      %5132 = vmatpush.xpose.msra.mxu0 0.0
      %5133 = vmatpush.xpose.msra.mxu0 0.0
      %5134 = vmatpush.xpose.msra.mxu0 0.0
      %5135 = vmatpush.xpose.msra.mxu0 0.0
      %5136 = vmatpush.xpose.msra.mxu0 0.0
      %5137 = vmatpush.xpose.msra.mxu0 0.0
      %5138 = vmatpush.xpose.msra.mxu0 0.0
      %5139 = vmatpush.xpose.msra.mxu0 %v4994
      %5140 = vmatmul.f32.gmra.mxu0 %v4979
      %v5141 = vpop.f32.mrf.mxu0
      %v5142 = vadd.f32 %v5122, %v5141
      %5143 = vdwg.mxu0
      %5144 = vmatpush.xpose.msra.mxu0 0.0
      %5145 = vmatpush.xpose.msra.mxu0 0.0
      %5146 = vmatpush.xpose.msra.mxu0 0.0
      %5147 = vmatpush.xpose.msra.mxu0 0.0
      %5148 = vmatpush.xpose.msra.mxu0 0.0
      %5149 = vmatpush.xpose.msra.mxu0 0.0
      %5150 = vmatpush.xpose.msra.mxu0 0.0
      %5151 = vmatpush.xpose.msra.mxu0 0.0
      %5152 = vmatpush.xpose.msra.mxu0 0.0
      %5153 = vmatpush.xpose.msra.mxu0 0.0
      %5154 = vmatpush.xpose.msra.mxu0 0.0
      %5155 = vmatpush.xpose.msra.mxu0 0.0
      %5156 = vmatpush.xpose.msra.mxu0 0.0
      %5157 = vmatpush.xpose.msra.mxu0 0.0
      %5158 = vmatpush.xpose.msra.mxu0 0.0
      %5159 = vmatpush.xpose.msra.mxu0 %v4995
      %5160 = vmatmul.f32.gmra.mxu0 %v4980
      %v5161 = vpop.f32.mrf.mxu0
      %v5162 = vadd.f32 %v5142, %v5161
      %5163 = vdwg.mxu0
      %v5164 = vsel %vm4965, %v5162, 0.0
      %v5165 = vrot.slane %v5164, 4
      %v5166 = vadd.f32 %v5164, %v5165
      %v5167 = vrot.slane %v5166, 2
      %v5168 = vadd.f32 %v5166, %v5167
      %v5169 = vrot.slane %v5168, 1
      %v5170 = vadd.f32 %v5168, %v5169
      %v5171 = vmul.f32 %v4726, %v4758
      %v5172 = vmul.f32 %v4727, %v4759
      %v5173 = vmul.f32 %v4728, %v4760
      %v5174 = vmul.f32 %v4729, %v4761
      %v5175 = vmul.f32 %v4730, %v4754
      %v5176 = vmul.f32 %v4731, %v4755
      %v5177 = vmul.f32 %v4732, %v4756
      %v5178 = vmul.f32 %v4733, %v4757
      %5179 = vst [vmem:[#allocation1] ss:$2 sm:$0xff] %v4742
      %s5180 = scalar_lea.vmem [#allocation1], 16
      %5181 = vst [vmem:[%s5180] ss:$2 sm:$0xff] %v4743
      %s5182 = scalar_lea.vmem [#allocation1], 32
      %5183 = vst [vmem:[%s5182] ss:$2 sm:$0xff] %v4744
      %s5184 = scalar_lea.vmem [#allocation1], 48
      %5185 = vst [vmem:[%s5184] ss:$2 sm:$0xff] %v4745
      %v5186 = vld.sshfl [vmem:[#allocation1] sm:$0xff pattern:$0x75316420]
      %v5187 = vld.sshfl [vmem:[#allocation1 + $0x8] sm:$0xff pattern:$0x75316420]
      %v5188 = vld.sshfl [vmem:[#allocation1 + $0x10] sm:$0xff pattern:$0x75316420]
      %v5189 = vld.sshfl [vmem:[#allocation1 + $0x18] sm:$0xff pattern:$0x75316420]
      %v5190 = vld.sshfl [vmem:[#allocation1 + $0x20] sm:$0xff pattern:$0x75316420]
      %v5191 = vld.sshfl [vmem:[#allocation1 + $0x28] sm:$0xff pattern:$0x75316420]
      %v5192 = vld.sshfl [vmem:[#allocation1 + $0x30] sm:$0xff pattern:$0x75316420]
      %v5193 = vld.sshfl [vmem:[#allocation1 + $0x38] sm:$0xff pattern:$0x75316420]
      %5202 = vmatpush.xpose.msra.mxu0 0.0
      %5203 = vmatpush.xpose.msra.mxu0 0.0
      %5204 = vmatpush.xpose.msra.mxu0 0.0
      %5205 = vmatpush.xpose.msra.mxu0 0.0
      %5206 = vmatpush.xpose.msra.mxu0 0.0
      %5207 = vmatpush.xpose.msra.mxu0 0.0
      %5208 = vmatpush.xpose.msra.mxu0 0.0
      %5209 = vmatpush.xpose.msra.mxu0 0.0
      %5210 = vmatpush.xpose.msra.mxu0 0.0
      %5211 = vmatpush.xpose.msra.mxu0 0.0
      %5212 = vmatpush.xpose.msra.mxu0 0.0
      %5213 = vmatpush.xpose.msra.mxu0 0.0
      %5214 = vmatpush.xpose.msra.mxu0 0.0
      %5215 = vmatpush.xpose.msra.mxu0 0.0
      %5216 = vmatpush.xpose.msra.mxu0 0.0
      %5217 = vmatpush.xpose.msra.mxu0 %v5186
      %5218 = vmatmul.f32.gmra.mxu0 %v5171
      %v5219 = vpop.f32.mrf.mxu0
      %v5220 = vadd.f32 0.0, %v5219
      %5221 = vdwg.mxu0
      %5222 = vmatpush.xpose.msra.mxu0 0.0
      %5223 = vmatpush.xpose.msra.mxu0 0.0
      %5224 = vmatpush.xpose.msra.mxu0 0.0
      %5225 = vmatpush.xpose.msra.mxu0 0.0
      %5226 = vmatpush.xpose.msra.mxu0 0.0
      %5227 = vmatpush.xpose.msra.mxu0 0.0
      %5228 = vmatpush.xpose.msra.mxu0 0.0
      %5229 = vmatpush.xpose.msra.mxu0 0.0
      %5230 = vmatpush.xpose.msra.mxu0 0.0
      %5231 = vmatpush.xpose.msra.mxu0 0.0
      %5232 = vmatpush.xpose.msra.mxu0 0.0
      %5233 = vmatpush.xpose.msra.mxu0 0.0
      %5234 = vmatpush.xpose.msra.mxu0 0.0
      %5235 = vmatpush.xpose.msra.mxu0 0.0
      %5236 = vmatpush.xpose.msra.mxu0 0.0
      %5237 = vmatpush.xpose.msra.mxu0 %v5187
      %5238 = vmatmul.f32.gmra.mxu0 %v5172
      %v5239 = vpop.f32.mrf.mxu0
      %v5240 = vadd.f32 %v5220, %v5239
      %5241 = vdwg.mxu0
      %5242 = vmatpush.xpose.msra.mxu0 0.0
      %5243 = vmatpush.xpose.msra.mxu0 0.0
      %5244 = vmatpush.xpose.msra.mxu0 0.0
      %5245 = vmatpush.xpose.msra.mxu0 0.0
      %5246 = vmatpush.xpose.msra.mxu0 0.0
      %5247 = vmatpush.xpose.msra.mxu0 0.0
      %5248 = vmatpush.xpose.msra.mxu0 0.0
      %5249 = vmatpush.xpose.msra.mxu0 0.0
      %5250 = vmatpush.xpose.msra.mxu0 0.0
      %5251 = vmatpush.xpose.msra.mxu0 0.0
      %5252 = vmatpush.xpose.msra.mxu0 0.0
      %5253 = vmatpush.xpose.msra.mxu0 0.0
      %5254 = vmatpush.xpose.msra.mxu0 0.0
      %5255 = vmatpush.xpose.msra.mxu0 0.0
      %5256 = vmatpush.xpose.msra.mxu0 0.0
      %5257 = vmatpush.xpose.msra.mxu0 %v5188
      %5258 = vmatmul.f32.gmra.mxu0 %v5173
      %v5259 = vpop.f32.mrf.mxu0
      %v5260 = vadd.f32 %v5240, %v5259
      %5261 = vdwg.mxu0
      %5262 = vmatpush.xpose.msra.mxu0 0.0
      %5263 = vmatpush.xpose.msra.mxu0 0.0
      %5264 = vmatpush.xpose.msra.mxu0 0.0
      %5265 = vmatpush.xpose.msra.mxu0 0.0
      %5266 = vmatpush.xpose.msra.mxu0 0.0
      %5267 = vmatpush.xpose.msra.mxu0 0.0
      %5268 = vmatpush.xpose.msra.mxu0 0.0
      %5269 = vmatpush.xpose.msra.mxu0 0.0
      %5270 = vmatpush.xpose.msra.mxu0 0.0
      %5271 = vmatpush.xpose.msra.mxu0 0.0
      %5272 = vmatpush.xpose.msra.mxu0 0.0
      %5273 = vmatpush.xpose.msra.mxu0 0.0
      %5274 = vmatpush.xpose.msra.mxu0 0.0
      %5275 = vmatpush.xpose.msra.mxu0 0.0
      %5276 = vmatpush.xpose.msra.mxu0 0.0
      %5277 = vmatpush.xpose.msra.mxu0 %v5189
      %5278 = vmatmul.f32.gmra.mxu0 %v5174
      %v5279 = vpop.f32.mrf.mxu0
      %v5280 = vadd.f32 %v5260, %v5279
      %5281 = vdwg.mxu0
      %5282 = vmatpush.xpose.msra.mxu0 0.0
      %5283 = vmatpush.xpose.msra.mxu0 0.0
      %5284 = vmatpush.xpose.msra.mxu0 0.0
      %5285 = vmatpush.xpose.msra.mxu0 0.0
      %5286 = vmatpush.xpose.msra.mxu0 0.0
      %5287 = vmatpush.xpose.msra.mxu0 0.0
      %5288 = vmatpush.xpose.msra.mxu0 0.0
      %5289 = vmatpush.xpose.msra.mxu0 0.0
      %5290 = vmatpush.xpose.msra.mxu0 0.0
      %5291 = vmatpush.xpose.msra.mxu0 0.0
      %5292 = vmatpush.xpose.msra.mxu0 0.0
      %5293 = vmatpush.xpose.msra.mxu0 0.0
      %5294 = vmatpush.xpose.msra.mxu0 0.0
      %5295 = vmatpush.xpose.msra.mxu0 0.0
      %5296 = vmatpush.xpose.msra.mxu0 0.0
      %5297 = vmatpush.xpose.msra.mxu0 %v5190
      %5298 = vmatmul.f32.gmra.mxu0 %v5175
      %v5299 = vpop.f32.mrf.mxu0
      %v5300 = vadd.f32 %v5280, %v5299
      %5301 = vdwg.mxu0
      %5302 = vmatpush.xpose.msra.mxu0 0.0
      %5303 = vmatpush.xpose.msra.mxu0 0.0
      %5304 = vmatpush.xpose.msra.mxu0 0.0
      %5305 = vmatpush.xpose.msra.mxu0 0.0
      %5306 = vmatpush.xpose.msra.mxu0 0.0
      %5307 = vmatpush.xpose.msra.mxu0 0.0
      %5308 = vmatpush.xpose.msra.mxu0 0.0
      %5309 = vmatpush.xpose.msra.mxu0 0.0
      %5310 = vmatpush.xpose.msra.mxu0 0.0
      %5311 = vmatpush.xpose.msra.mxu0 0.0
      %5312 = vmatpush.xpose.msra.mxu0 0.0
      %5313 = vmatpush.xpose.msra.mxu0 0.0
      %5314 = vmatpush.xpose.msra.mxu0 0.0
      %5315 = vmatpush.xpose.msra.mxu0 0.0
      %5316 = vmatpush.xpose.msra.mxu0 0.0
      %5317 = vmatpush.xpose.msra.mxu0 %v5191
      %5318 = vmatmul.f32.gmra.mxu0 %v5176
      %v5319 = vpop.f32.mrf.mxu0
      %v5320 = vadd.f32 %v5300, %v5319
      %5321 = vdwg.mxu0
      %5322 = vmatpush.xpose.msra.mxu0 0.0
      %5323 = vmatpush.xpose.msra.mxu0 0.0
      %5324 = vmatpush.xpose.msra.mxu0 0.0
      %5325 = vmatpush.xpose.msra.mxu0 0.0
      %5326 = vmatpush.xpose.msra.mxu0 0.0
      %5327 = vmatpush.xpose.msra.mxu0 0.0
      %5328 = vmatpush.xpose.msra.mxu0 0.0
      %5329 = vmatpush.xpose.msra.mxu0 0.0
      %5330 = vmatpush.xpose.msra.mxu0 0.0
      %5331 = vmatpush.xpose.msra.mxu0 0.0
      %5332 = vmatpush.xpose.msra.mxu0 0.0
      %5333 = vmatpush.xpose.msra.mxu0 0.0
      %5334 = vmatpush.xpose.msra.mxu0 0.0
      %5335 = vmatpush.xpose.msra.mxu0 0.0
      %5336 = vmatpush.xpose.msra.mxu0 0.0
      %5337 = vmatpush.xpose.msra.mxu0 %v5192
      %5338 = vmatmul.f32.gmra.mxu0 %v5177
      %v5339 = vpop.f32.mrf.mxu0
      %v5340 = vadd.f32 %v5320, %v5339
      %5341 = vdwg.mxu0
      %5342 = vmatpush.xpose.msra.mxu0 0.0
      %5343 = vmatpush.xpose.msra.mxu0 0.0
      %5344 = vmatpush.xpose.msra.mxu0 0.0
      %5345 = vmatpush.xpose.msra.mxu0 0.0
      %5346 = vmatpush.xpose.msra.mxu0 0.0
      %5347 = vmatpush.xpose.msra.mxu0 0.0
      %5348 = vmatpush.xpose.msra.mxu0 0.0
      %5349 = vmatpush.xpose.msra.mxu0 0.0
      %5350 = vmatpush.xpose.msra.mxu0 0.0
      %5351 = vmatpush.xpose.msra.mxu0 0.0
      %5352 = vmatpush.xpose.msra.mxu0 0.0
      %5353 = vmatpush.xpose.msra.mxu0 0.0
      %5354 = vmatpush.xpose.msra.mxu0 0.0
      %5355 = vmatpush.xpose.msra.mxu0 0.0
      %5356 = vmatpush.xpose.msra.mxu0 0.0
      %5357 = vmatpush.xpose.msra.mxu0 %v5193
      %5358 = vmatmul.f32.gmra.mxu0 %v5178
      %v5359 = vpop.f32.mrf.mxu0
      %v5360 = vadd.f32 %v5340, %v5359
      %5361 = vdwg.mxu0
      %v5362 = vsel %vm4965, %v5360, 0.0
      %v5363 = vrot.slane %v5362, 4
      %v5364 = vadd.f32 %v5362, %v5363
      %v5365 = vrot.slane %v5364, 2
      %v5366 = vadd.f32 %v5364, %v5365
      %v5367 = vrot.slane %v5366, 1
      %v5368 = vadd.f32 %v5366, %v5367
      %v5369 = vmul.f32 %v4726, %v4756
      %v5370 = vmul.f32 %v4727, %v4757
      %v5371 = vmul.f32 %v4728, %v4758
      %v5372 = vmul.f32 %v4729, %v4759
      %v5373 = vmul.f32 %v4730, %v4760
      %v5374 = vmul.f32 %v4731, %v4761
      %v5375 = vmul.f32 %v4732, %v4754
      %v5376 = vmul.f32 %v4733, %v4755
      %5377 = vst [vmem:[#allocation1] ss:$2 sm:$0xff] %v4742
      %s5378 = scalar_lea.vmem [#allocation1], 16
      %5379 = vst [vmem:[%s5378] ss:$2 sm:$0xff] %v4743
      %s5380 = scalar_lea.vmem [#allocation1], 32
      %5381 = vst [vmem:[%s5380] ss:$2 sm:$0xff] %v4744
      %s5382 = scalar_lea.vmem [#allocation1], 48
      %5383 = vst [vmem:[%s5382] ss:$2 sm:$0xff] %v4745
      %v5384 = vld.sshfl [vmem:[#allocation1] sm:$0xff pattern:$0x75316420]
      %v5385 = vld.sshfl [vmem:[#allocation1 + $0x8] sm:$0xff pattern:$0x75316420]
      %v5386 = vld.sshfl [vmem:[#allocation1 + $0x10] sm:$0xff pattern:$0x75316420]
      %v5387 = vld.sshfl [vmem:[#allocation1 + $0x18] sm:$0xff pattern:$0x75316420]
      %v5388 = vld.sshfl [vmem:[#allocation1 + $0x20] sm:$0xff pattern:$0x75316420]
      %v5389 = vld.sshfl [vmem:[#allocation1 + $0x28] sm:$0xff pattern:$0x75316420]
      %v5390 = vld.sshfl [vmem:[#allocation1 + $0x30] sm:$0xff pattern:$0x75316420]
      %v5391 = vld.sshfl [vmem:[#allocation1 + $0x38] sm:$0xff pattern:$0x75316420]
      %5400 = vmatpush.xpose.msra.mxu0 0.0
      %5401 = vmatpush.xpose.msra.mxu0 0.0
      %5402 = vmatpush.xpose.msra.mxu0 0.0
      %5403 = vmatpush.xpose.msra.mxu0 0.0
      %5404 = vmatpush.xpose.msra.mxu0 0.0
      %5405 = vmatpush.xpose.msra.mxu0 0.0
      %5406 = vmatpush.xpose.msra.mxu0 0.0
      %5407 = vmatpush.xpose.msra.mxu0 0.0
      %5408 = vmatpush.xpose.msra.mxu0 0.0
      %5409 = vmatpush.xpose.msra.mxu0 0.0
      %5410 = vmatpush.xpose.msra.mxu0 0.0
      %5411 = vmatpush.xpose.msra.mxu0 0.0
      %5412 = vmatpush.xpose.msra.mxu0 0.0
      %5413 = vmatpush.xpose.msra.mxu0 0.0
      %5414 = vmatpush.xpose.msra.mxu0 0.0
      %5415 = vmatpush.xpose.msra.mxu0 %v5384
      %5416 = vmatmul.f32.gmra.mxu0 %v5369
      %v5417 = vpop.f32.mrf.mxu0
      %v5418 = vadd.f32 0.0, %v5417
      %5419 = vdwg.mxu0
      %5420 = vmatpush.xpose.msra.mxu0 0.0
      %5421 = vmatpush.xpose.msra.mxu0 0.0
      %5422 = vmatpush.xpose.msra.mxu0 0.0
      %5423 = vmatpush.xpose.msra.mxu0 0.0
      %5424 = vmatpush.xpose.msra.mxu0 0.0
      %5425 = vmatpush.xpose.msra.mxu0 0.0
      %5426 = vmatpush.xpose.msra.mxu0 0.0
      %5427 = vmatpush.xpose.msra.mxu0 0.0
      %5428 = vmatpush.xpose.msra.mxu0 0.0
      %5429 = vmatpush.xpose.msra.mxu0 0.0
      %5430 = vmatpush.xpose.msra.mxu0 0.0
      %5431 = vmatpush.xpose.msra.mxu0 0.0
      %5432 = vmatpush.xpose.msra.mxu0 0.0
      %5433 = vmatpush.xpose.msra.mxu0 0.0
      %5434 = vmatpush.xpose.msra.mxu0 0.0
      %5435 = vmatpush.xpose.msra.mxu0 %v5385
      %5436 = vmatmul.f32.gmra.mxu0 %v5370
      %v5437 = vpop.f32.mrf.mxu0
      %v5438 = vadd.f32 %v5418, %v5437
      %5439 = vdwg.mxu0
      %5440 = vmatpush.xpose.msra.mxu0 0.0
      %5441 = vmatpush.xpose.msra.mxu0 0.0
      %5442 = vmatpush.xpose.msra.mxu0 0.0
      %5443 = vmatpush.xpose.msra.mxu0 0.0
      %5444 = vmatpush.xpose.msra.mxu0 0.0
      %5445 = vmatpush.xpose.msra.mxu0 0.0
      %5446 = vmatpush.xpose.msra.mxu0 0.0
      %5447 = vmatpush.xpose.msra.mxu0 0.0
      %5448 = vmatpush.xpose.msra.mxu0 0.0
      %5449 = vmatpush.xpose.msra.mxu0 0.0
      %5450 = vmatpush.xpose.msra.mxu0 0.0
      %5451 = vmatpush.xpose.msra.mxu0 0.0
      %5452 = vmatpush.xpose.msra.mxu0 0.0
      %5453 = vmatpush.xpose.msra.mxu0 0.0
      %5454 = vmatpush.xpose.msra.mxu0 0.0
      %5455 = vmatpush.xpose.msra.mxu0 %v5386
      %5456 = vmatmul.f32.gmra.mxu0 %v5371
      %v5457 = vpop.f32.mrf.mxu0
      %v5458 = vadd.f32 %v5438, %v5457
      %5459 = vdwg.mxu0
      %5460 = vmatpush.xpose.msra.mxu0 0.0
      %5461 = vmatpush.xpose.msra.mxu0 0.0
      %5462 = vmatpush.xpose.msra.mxu0 0.0
      %5463 = vmatpush.xpose.msra.mxu0 0.0
      %5464 = vmatpush.xpose.msra.mxu0 0.0
      %5465 = vmatpush.xpose.msra.mxu0 0.0
      %5466 = vmatpush.xpose.msra.mxu0 0.0
      %5467 = vmatpush.xpose.msra.mxu0 0.0
      %5468 = vmatpush.xpose.msra.mxu0 0.0
      %5469 = vmatpush.xpose.msra.mxu0 0.0
      %5470 = vmatpush.xpose.msra.mxu0 0.0
      %5471 = vmatpush.xpose.msra.mxu0 0.0
      %5472 = vmatpush.xpose.msra.mxu0 0.0
      %5473 = vmatpush.xpose.msra.mxu0 0.0
      %5474 = vmatpush.xpose.msra.mxu0 0.0
      %5475 = vmatpush.xpose.msra.mxu0 %v5387
      %5476 = vmatmul.f32.gmra.mxu0 %v5372
      %v5477 = vpop.f32.mrf.mxu0
      %v5478 = vadd.f32 %v5458, %v5477
      %5479 = vdwg.mxu0
      %5480 = vmatpush.xpose.msra.mxu0 0.0
      %5481 = vmatpush.xpose.msra.mxu0 0.0
      %5482 = vmatpush.xpose.msra.mxu0 0.0
      %5483 = vmatpush.xpose.msra.mxu0 0.0
      %5484 = vmatpush.xpose.msra.mxu0 0.0
      %5485 = vmatpush.xpose.msra.mxu0 0.0
      %5486 = vmatpush.xpose.msra.mxu0 0.0
      %5487 = vmatpush.xpose.msra.mxu0 0.0
      %5488 = vmatpush.xpose.msra.mxu0 0.0
      %5489 = vmatpush.xpose.msra.mxu0 0.0
      %5490 = vmatpush.xpose.msra.mxu0 0.0
      %5491 = vmatpush.xpose.msra.mxu0 0.0
      %5492 = vmatpush.xpose.msra.mxu0 0.0
      %5493 = vmatpush.xpose.msra.mxu0 0.0
      %5494 = vmatpush.xpose.msra.mxu0 0.0
      %5495 = vmatpush.xpose.msra.mxu0 %v5388
      %5496 = vmatmul.f32.gmra.mxu0 %v5373
      %v5497 = vpop.f32.mrf.mxu0
      %v5498 = vadd.f32 %v5478, %v5497
      %5499 = vdwg.mxu0
      %5500 = vmatpush.xpose.msra.mxu0 0.0
      %5501 = vmatpush.xpose.msra.mxu0 0.0
      %5502 = vmatpush.xpose.msra.mxu0 0.0
      %5503 = vmatpush.xpose.msra.mxu0 0.0
      %5504 = vmatpush.xpose.msra.mxu0 0.0
      %5505 = vmatpush.xpose.msra.mxu0 0.0
      %5506 = vmatpush.xpose.msra.mxu0 0.0
      %5507 = vmatpush.xpose.msra.mxu0 0.0
      %5508 = vmatpush.xpose.msra.mxu0 0.0
      %5509 = vmatpush.xpose.msra.mxu0 0.0
      %5510 = vmatpush.xpose.msra.mxu0 0.0
      %5511 = vmatpush.xpose.msra.mxu0 0.0
      %5512 = vmatpush.xpose.msra.mxu0 0.0
      %5513 = vmatpush.xpose.msra.mxu0 0.0
      %5514 = vmatpush.xpose.msra.mxu0 0.0
      %5515 = vmatpush.xpose.msra.mxu0 %v5389
      %5516 = vmatmul.f32.gmra.mxu0 %v5374
      %v5517 = vpop.f32.mrf.mxu0
      %v5518 = vadd.f32 %v5498, %v5517
      %5519 = vdwg.mxu0
      %5520 = vmatpush.xpose.msra.mxu0 0.0
      %5521 = vmatpush.xpose.msra.mxu0 0.0
      %5522 = vmatpush.xpose.msra.mxu0 0.0
      %5523 = vmatpush.xpose.msra.mxu0 0.0
      %5524 = vmatpush.xpose.msra.mxu0 0.0
      %5525 = vmatpush.xpose.msra.mxu0 0.0
      %5526 = vmatpush.xpose.msra.mxu0 0.0
      %5527 = vmatpush.xpose.msra.mxu0 0.0
      %5528 = vmatpush.xpose.msra.mxu0 0.0
      %5529 = vmatpush.xpose.msra.mxu0 0.0
      %5530 = vmatpush.xpose.msra.mxu0 0.0
      %5531 = vmatpush.xpose.msra.mxu0 0.0
      %5532 = vmatpush.xpose.msra.mxu0 0.0
      %5533 = vmatpush.xpose.msra.mxu0 0.0
      %5534 = vmatpush.xpose.msra.mxu0 0.0
      %5535 = vmatpush.xpose.msra.mxu0 %v5390
      %5536 = vmatmul.f32.gmra.mxu0 %v5375
      %v5537 = vpop.f32.mrf.mxu0
      %v5538 = vadd.f32 %v5518, %v5537
      %5539 = vdwg.mxu0
      %5540 = vmatpush.xpose.msra.mxu0 0.0
      %5541 = vmatpush.xpose.msra.mxu0 0.0
      %5542 = vmatpush.xpose.msra.mxu0 0.0
      %5543 = vmatpush.xpose.msra.mxu0 0.0
      %5544 = vmatpush.xpose.msra.mxu0 0.0
      %5545 = vmatpush.xpose.msra.mxu0 0.0
      %5546 = vmatpush.xpose.msra.mxu0 0.0
      %5547 = vmatpush.xpose.msra.mxu0 0.0
      %5548 = vmatpush.xpose.msra.mxu0 0.0
      %5549 = vmatpush.xpose.msra.mxu0 0.0
      %5550 = vmatpush.xpose.msra.mxu0 0.0
      %5551 = vmatpush.xpose.msra.mxu0 0.0
      %5552 = vmatpush.xpose.msra.mxu0 0.0
      %5553 = vmatpush.xpose.msra.mxu0 0.0
      %5554 = vmatpush.xpose.msra.mxu0 0.0
      %5555 = vmatpush.xpose.msra.mxu0 %v5391
      %5556 = vmatmul.f32.gmra.mxu0 %v5376
      %v5557 = vpop.f32.mrf.mxu0
      %v5558 = vadd.f32 %v5538, %v5557
      %5559 = vdwg.mxu0
      %v5560 = vsel %vm4965, %v5558, 0.0
      %v5561 = vrot.slane %v5560, 4
      %v5562 = vadd.f32 %v5560, %v5561
      %v5563 = vrot.slane %v5562, 2
      %v5564 = vadd.f32 %v5562, %v5563
      %v5565 = vrot.slane %v5564, 1
      %v5566 = vadd.f32 %v5564, %v5565
      %vm5567 = vcmask 1040384
      %v5568 = vsel %vm5567, %v4972, %v5170
      %v5569 = vsel %vm481, %v5568, %v5368
      %vm5570 = vcmask 1042432
      %v5571 = vsel %vm5570, %v5569, %v5566
      %v5572 = vsel %vm4965, %v5571, -inf
      %v5573 = vrot.slane %v5572, 4
      %v5574 = vmax.f32 %v5572, %v5573
      %v5575 = vrot.slane %v5574, 2
      %v5576 = vmax.f32 %v5574, %v5575
      %v5577 = vrot.slane %v5576, 1
      %v5578 = vmax.f32 %v5576, %v5577
      %v5579 = vsub.f32 %v5571, %v5578
      %v5580 = vmul.f32 %v5579, 1.442695
      %v5581 = vpow.pop %v5580
      %v5582 = vsel %vm4965, %v5581, 0.0
      %v5583 = vrot.slane %v5582, 4
      %v5584 = vadd.f32 %v5582, %v5583
      %v5585 = vrot.slane %v5584, 2
      %v5586 = vadd.f32 %v5584, %v5585
      %v5587 = vrot.slane %v5586, 1
      %v5588 = vadd.f32 %v5586, %v5587
      %v5589 = vrcp.pop %v5588
      %v5590 = vmul.f32 %v5588, %v5589
      %v5591 = vsub.f32 1.0, %v5590
      %v5592 = vmul.f32 %v5589, %v5591
      %v5593 = vadd.f32 %v5589, %v5592
      %vm5594 = vweird.f32 %v5588
      %vm5595 = vweird.f32 %v5589
      %vm5596 = vmor %vm5594, %vm5595
      %v5597 = vsel %vm5596, %v5589, %v5593
      %v5598 = vand.u32 2147483647, %v5588
      %vm5599 = vcmp.eq.f32.partialorder %v5598, 8.507059e+37
      %v5600 = vand.u32 %v5588, 2147483648
      %v5601 = vor.u32 1.1754944e-38, %v5600
      %v5602 = vsel %vm5599, %v5601, %v5597
      %v5603 = vmul.f32 %v5581, %v5602
      %5604 = vst [vmem:[#allocation1] ss:$2 sm:$0xff] %v4742
      %s5605 = scalar_lea.vmem [#allocation1], 16
      %5606 = vst [vmem:[%s5605] ss:$2 sm:$0xff] %v4743
      %s5607 = scalar_lea.vmem [#allocation1], 32
      %5608 = vst [vmem:[%s5607] ss:$2 sm:$0xff] %v4744
      %s5609 = scalar_lea.vmem [#allocation1], 48
      %5610 = vst [vmem:[%s5609] ss:$2 sm:$0xff] %v4745
      %v5611 = vld.sshfl [vmem:[#allocation1] sm:$0xff pattern:$0x75316420]
      %v5612 = vld.sshfl [vmem:[#allocation1 + $0x8] sm:$0xff pattern:$0x75316420]
      %v5613 = vld.sshfl [vmem:[#allocation1 + $0x10] sm:$0xff pattern:$0x75316420]
      %v5614 = vld.sshfl [vmem:[#allocation1 + $0x18] sm:$0xff pattern:$0x75316420]
      %v5615 = vld.sshfl [vmem:[#allocation1 + $0x20] sm:$0xff pattern:$0x75316420]
      %v5616 = vld.sshfl [vmem:[#allocation1 + $0x28] sm:$0xff pattern:$0x75316420]
      %v5617 = vld.sshfl [vmem:[#allocation1 + $0x30] sm:$0xff pattern:$0x75316420]
      %v5618 = vld.sshfl [vmem:[#allocation1 + $0x38] sm:$0xff pattern:$0x75316420]
      %v5620 = vsel %vm477, %v5603, 0
      %vm5622 = vcmask 1043456
      %v5623 = vsel %vm5622, %v5611, 0
      %v5625 = vsel %vm5622, %v5612, 0
      %v5627 = vsel %vm5622, %v5613, 0
      %v5629 = vsel %vm5622, %v5614, 0
      %v5631 = vsel %vm5622, %v5615, 0
      %v5633 = vsel %vm5622, %v5616, 0
      %v5635 = vsel %vm5622, %v5617, 0
      %v5637 = vsel %vm5622, %v5618, 0
      %5639 = vmatpush.msra.mxu0 0.0
      %5640 = vmatpush.msra.mxu0 0.0
      %5641 = vmatpush.msra.mxu0 0.0
      %5642 = vmatpush.msra.mxu0 0.0
      %5643 = vmatpush.msra.mxu0 0.0
      %5644 = vmatpush.msra.mxu0 0.0
      %5645 = vmatpush.msra.mxu0 0.0
      %5646 = vmatpush.msra.mxu0 0.0
      %5647 = vmatpush.msra.mxu0 0.0
      %5648 = vmatpush.msra.mxu0 0.0
      %5649 = vmatpush.msra.mxu0 0.0
      %5650 = vmatpush.msra.mxu0 0.0
      %5651 = vmatpush.msra.mxu0 0.0
      %5652 = vmatpush.msra.mxu0 0.0
      %5653 = vmatpush.msra.mxu0 0.0
      %5654 = vmatpush.msra.mxu0 %v5623
      %5655 = vmatmul.f32.gmra.mxu0 %v5620
      %v5656 = vpop.f32.mrf.mxu0
      %v5657 = vadd.f32 0.0, %v5656
      %5658 = vdwg.mxu0
      %5659 = vmatpush.msra.mxu0 0.0
      %5660 = vmatpush.msra.mxu0 0.0
      %5661 = vmatpush.msra.mxu0 0.0
      %5662 = vmatpush.msra.mxu0 0.0
      %5663 = vmatpush.msra.mxu0 0.0
      %5664 = vmatpush.msra.mxu0 0.0
      %5665 = vmatpush.msra.mxu0 0.0
      %5666 = vmatpush.msra.mxu0 0.0
      %5667 = vmatpush.msra.mxu0 0.0
      %5668 = vmatpush.msra.mxu0 0.0
      %5669 = vmatpush.msra.mxu0 0.0
      %5670 = vmatpush.msra.mxu0 0.0
      %5671 = vmatpush.msra.mxu0 0.0
      %5672 = vmatpush.msra.mxu0 0.0
      %5673 = vmatpush.msra.mxu0 0.0
      %5674 = vmatpush.msra.mxu0 %v5625
      %5675 = vmatmul.f32.gmra.mxu0 %v5620
      %v5676 = vpop.f32.mrf.mxu0
      %v5677 = vadd.f32 0.0, %v5676
      %5678 = vdwg.mxu0
      %5679 = vmatpush.msra.mxu0 0.0
      %5680 = vmatpush.msra.mxu0 0.0
      %5681 = vmatpush.msra.mxu0 0.0
      %5682 = vmatpush.msra.mxu0 0.0
      %5683 = vmatpush.msra.mxu0 0.0
      %5684 = vmatpush.msra.mxu0 0.0
      %5685 = vmatpush.msra.mxu0 0.0
      %5686 = vmatpush.msra.mxu0 0.0
      %5687 = vmatpush.msra.mxu0 0.0
      %5688 = vmatpush.msra.mxu0 0.0
      %5689 = vmatpush.msra.mxu0 0.0
      %5690 = vmatpush.msra.mxu0 0.0
      %5691 = vmatpush.msra.mxu0 0.0
      %5692 = vmatpush.msra.mxu0 0.0
      %5693 = vmatpush.msra.mxu0 0.0
      %5694 = vmatpush.msra.mxu0 %v5627
      %5695 = vmatmul.f32.gmra.mxu0 %v5620
      %v5696 = vpop.f32.mrf.mxu0
      %v5697 = vadd.f32 0.0, %v5696
      %5698 = vdwg.mxu0
      %5699 = vmatpush.msra.mxu0 0.0
      %5700 = vmatpush.msra.mxu0 0.0
      %5701 = vmatpush.msra.mxu0 0.0
      %5702 = vmatpush.msra.mxu0 0.0
      %5703 = vmatpush.msra.mxu0 0.0
      %5704 = vmatpush.msra.mxu0 0.0
      %5705 = vmatpush.msra.mxu0 0.0
      %5706 = vmatpush.msra.mxu0 0.0
      %5707 = vmatpush.msra.mxu0 0.0
      %5708 = vmatpush.msra.mxu0 0.0
      %5709 = vmatpush.msra.mxu0 0.0
      %5710 = vmatpush.msra.mxu0 0.0
      %5711 = vmatpush.msra.mxu0 0.0
      %5712 = vmatpush.msra.mxu0 0.0
      %5713 = vmatpush.msra.mxu0 0.0
      %5714 = vmatpush.msra.mxu0 %v5629
      %5715 = vmatmul.f32.gmra.mxu0 %v5620
      %v5716 = vpop.f32.mrf.mxu0
      %v5717 = vadd.f32 0.0, %v5716
      %5718 = vdwg.mxu0
      %5719 = vmatpush.msra.mxu0 0.0
      %5720 = vmatpush.msra.mxu0 0.0
      %5721 = vmatpush.msra.mxu0 0.0
      %5722 = vmatpush.msra.mxu0 0.0
      %5723 = vmatpush.msra.mxu0 0.0
      %5724 = vmatpush.msra.mxu0 0.0
      %5725 = vmatpush.msra.mxu0 0.0
      %5726 = vmatpush.msra.mxu0 0.0
      %5727 = vmatpush.msra.mxu0 0.0
      %5728 = vmatpush.msra.mxu0 0.0
      %5729 = vmatpush.msra.mxu0 0.0
      %5730 = vmatpush.msra.mxu0 0.0
      %5731 = vmatpush.msra.mxu0 0.0
      %5732 = vmatpush.msra.mxu0 0.0
      %5733 = vmatpush.msra.mxu0 0.0
      %5734 = vmatpush.msra.mxu0 %v5631
      %5735 = vmatmul.f32.gmra.mxu0 %v5620
      %v5736 = vpop.f32.mrf.mxu0
      %v5737 = vadd.f32 0.0, %v5736
      %5738 = vdwg.mxu0
      %5739 = vmatpush.msra.mxu0 0.0
      %5740 = vmatpush.msra.mxu0 0.0
      %5741 = vmatpush.msra.mxu0 0.0
      %5742 = vmatpush.msra.mxu0 0.0
      %5743 = vmatpush.msra.mxu0 0.0
      %5744 = vmatpush.msra.mxu0 0.0
      %5745 = vmatpush.msra.mxu0 0.0
      %5746 = vmatpush.msra.mxu0 0.0
      %5747 = vmatpush.msra.mxu0 0.0
      %5748 = vmatpush.msra.mxu0 0.0
      %5749 = vmatpush.msra.mxu0 0.0
      %5750 = vmatpush.msra.mxu0 0.0
      %5751 = vmatpush.msra.mxu0 0.0
      %5752 = vmatpush.msra.mxu0 0.0
      %5753 = vmatpush.msra.mxu0 0.0
      %5754 = vmatpush.msra.mxu0 %v5633
      %5755 = vmatmul.f32.gmra.mxu0 %v5620
      %v5756 = vpop.f32.mrf.mxu0
      %v5757 = vadd.f32 0.0, %v5756
      %5758 = vdwg.mxu0
      %5759 = vmatpush.msra.mxu0 0.0
      %5760 = vmatpush.msra.mxu0 0.0
      %5761 = vmatpush.msra.mxu0 0.0
      %5762 = vmatpush.msra.mxu0 0.0
      %5763 = vmatpush.msra.mxu0 0.0
      %5764 = vmatpush.msra.mxu0 0.0
      %5765 = vmatpush.msra.mxu0 0.0
      %5766 = vmatpush.msra.mxu0 0.0
      %5767 = vmatpush.msra.mxu0 0.0
      %5768 = vmatpush.msra.mxu0 0.0
      %5769 = vmatpush.msra.mxu0 0.0
      %5770 = vmatpush.msra.mxu0 0.0
      %5771 = vmatpush.msra.mxu0 0.0
      %5772 = vmatpush.msra.mxu0 0.0
      %5773 = vmatpush.msra.mxu0 0.0
      %5774 = vmatpush.msra.mxu0 %v5635
      %5775 = vmatmul.f32.gmra.mxu0 %v5620
      %v5776 = vpop.f32.mrf.mxu0
      %v5777 = vadd.f32 0.0, %v5776
      %5778 = vdwg.mxu0
      %5779 = vmatpush.msra.mxu0 0.0
      %5780 = vmatpush.msra.mxu0 0.0
      %5781 = vmatpush.msra.mxu0 0.0
      %5782 = vmatpush.msra.mxu0 0.0
      %5783 = vmatpush.msra.mxu0 0.0
      %5784 = vmatpush.msra.mxu0 0.0
      %5785 = vmatpush.msra.mxu0 0.0
      %5786 = vmatpush.msra.mxu0 0.0
      %5787 = vmatpush.msra.mxu0 0.0
      %5788 = vmatpush.msra.mxu0 0.0
      %5789 = vmatpush.msra.mxu0 0.0
      %5790 = vmatpush.msra.mxu0 0.0
      %5791 = vmatpush.msra.mxu0 0.0
      %5792 = vmatpush.msra.mxu0 0.0
      %5793 = vmatpush.msra.mxu0 0.0
      %5794 = vmatpush.msra.mxu0 %v5637
      %5795 = vmatmul.f32.gmra.mxu0 %v5620
      %v5796 = vpop.f32.mrf.mxu0
      %v5797 = vadd.f32 0.0, %v5796
      %5798 = vdwg.mxu0
      %v5799 = vperm.slane %v5657, 0
      %v5800 = vperm.slane %v5677, 0
      %v5801 = vperm.slane %v5697, 0
      %v5802 = vperm.slane %v5717, 0
      %v5803 = vperm.slane %v5737, 0
      %v5804 = vperm.slane %v5757, 0
      %v5805 = vperm.slane %v5777, 0
      %v5806 = vperm.slane %v5797, 0
      %v5807 = vmul.f32 %v5799, %v4734
      %v5808 = vmul.f32 %v5800, %v4735
      %v5809 = vmul.f32 %v5801, %v4736
      %v5810 = vmul.f32 %v5802, %v4737
      %v5811 = vmul.f32 %v5803, %v4738
      %v5812 = vmul.f32 %v5804, %v4739
      %v5813 = vmul.f32 %v5805, %v4740
      %v5814 = vmul.f32 %v5806, %v4741
      %v5823 = vrot.slane %v5808, 4
      %v5824 = vrot.slane %v5810, 4
      %v5825 = vrot.slane %v5812, 4
      %v5826 = vrot.slane %v5814, 4
      %v5827 = vsel %vm5622, %v5807, %v5823
      %v5828 = vsel %vm5622, %v5809, %v5824
      %v5829 = vsel %vm5622, %v5811, %v5825
      %v5830 = vsel %vm5622, %v5813, %v5826
      %v5835 = vadd.f32 %v280, %v5827
      %v5836 = vadd.f32 %v281, %v5828
      %v5837 = vadd.f32 %v282, %v5829
      %v5838 = vadd.f32 %v283, %v5830
      %v5839 = vperm.slane %v5657, 1
      %v5840 = vperm.slane %v5677, 1
      %v5841 = vperm.slane %v5697, 1
      %v5842 = vperm.slane %v5717, 1
      %v5843 = vperm.slane %v5737, 1
      %v5844 = vperm.slane %v5757, 1
      %v5845 = vperm.slane %v5777, 1
      %v5846 = vperm.slane %v5797, 1
      %v5847 = vmul.f32 %v5839, %v4740
      %v5848 = vmul.f32 %v5840, %v4741
      %v5849 = vmul.f32 %v5841, %v4734
      %v5850 = vmul.f32 %v5842, %v4735
      %v5851 = vmul.f32 %v5843, %v4736
      %v5852 = vmul.f32 %v5844, %v4737
      %v5853 = vmul.f32 %v5845, %v4738
      %v5854 = vmul.f32 %v5846, %v4739
      %v5863 = vrot.slane %v5848, 4
      %v5864 = vrot.slane %v5850, 4
      %v5865 = vrot.slane %v5852, 4
      %v5866 = vrot.slane %v5854, 4
      %v5867 = vsel %vm5622, %v5847, %v5863
      %v5868 = vsel %vm5622, %v5849, %v5864
      %v5869 = vsel %vm5622, %v5851, %v5865
      %v5870 = vsel %vm5622, %v5853, %v5866
      %v5875 = vadd.f32 %v5835, %v5867
      %v5876 = vadd.f32 %v5836, %v5868
      %v5877 = vadd.f32 %v5837, %v5869
      %v5878 = vadd.f32 %v5838, %v5870
      %v5879 = vperm.slane %v5657, 2
      %v5880 = vperm.slane %v5677, 2
      %v5881 = vperm.slane %v5697, 2
      %v5882 = vperm.slane %v5717, 2
      %v5883 = vperm.slane %v5737, 2
      %v5884 = vperm.slane %v5757, 2
      %v5885 = vperm.slane %v5777, 2
      %v5886 = vperm.slane %v5797, 2
      %v5887 = vmul.f32 %v5879, %v4738
      %v5888 = vmul.f32 %v5880, %v4739
      %v5889 = vmul.f32 %v5881, %v4740
      %v5890 = vmul.f32 %v5882, %v4741
      %v5891 = vmul.f32 %v5883, %v4734
      %v5892 = vmul.f32 %v5884, %v4735
      %v5893 = vmul.f32 %v5885, %v4736
      %v5894 = vmul.f32 %v5886, %v4737
      %v5903 = vrot.slane %v5888, 4
      %v5904 = vrot.slane %v5890, 4
      %v5905 = vrot.slane %v5892, 4
      %v5906 = vrot.slane %v5894, 4
      %v5907 = vsel %vm5622, %v5887, %v5903
      %v5908 = vsel %vm5622, %v5889, %v5904
      %v5909 = vsel %vm5622, %v5891, %v5905
      %v5910 = vsel %vm5622, %v5893, %v5906
      %v5915 = vadd.f32 %v5875, %v5907
      %v5916 = vadd.f32 %v5876, %v5908
      %v5917 = vadd.f32 %v5877, %v5909
      %v5918 = vadd.f32 %v5878, %v5910
      %v5919 = vperm.slane %v5657, 3
      %v5920 = vperm.slane %v5677, 3
      %v5921 = vperm.slane %v5697, 3
      %v5922 = vperm.slane %v5717, 3
      %v5923 = vperm.slane %v5737, 3
      %v5924 = vperm.slane %v5757, 3
      %v5925 = vperm.slane %v5777, 3
      %v5926 = vperm.slane %v5797, 3
      %v5927 = vmul.f32 %v5919, %v4736
      %v5928 = vmul.f32 %v5920, %v4737
      %v5929 = vmul.f32 %v5921, %v4738
      %v5930 = vmul.f32 %v5922, %v4739
      %v5931 = vmul.f32 %v5923, %v4740
      %v5932 = vmul.f32 %v5924, %v4741
      %v5933 = vmul.f32 %v5925, %v4734
      %v5934 = vmul.f32 %v5926, %v4735
      %v5943 = vrot.slane %v5928, 4
      %v5944 = vrot.slane %v5930, 4
      %v5945 = vrot.slane %v5932, 4
      %v5946 = vrot.slane %v5934, 4
      %v5947 = vsel %vm5622, %v5927, %v5943
      %v5948 = vsel %vm5622, %v5929, %v5944
      %v5949 = vsel %vm5622, %v5931, %v5945
      %v5950 = vsel %vm5622, %v5933, %v5946
      %v5955 = vadd.f32 %v5915, %v5947
      %v5956 = vadd.f32 %v5916, %v5948
      %v5957 = vadd.f32 %v5917, %v5949
      %v5958 = vadd.f32 %v5918, %v5950
      %5959 = vst [vmem:[%s278] sm:$0xff] %v5955
      %5960 = vst [vmem:[%s278 + $0x8] sm:$0xff] %v5956
      %5961 = vst [vmem:[%s278 + $0x10] sm:$0xff] %v5957
      %5962 = vst [vmem:[%s278 + $0x18] sm:$0xff] %v5958
      %p5963 = scmp.lt.s32.totalorder %s18, 1
      %s5964 = scalar_select %p5963, %s18, 1
      %s5965 = smul.addr %s5964, 8
      %s5966 = smul.addr %s5965, 4
      %s5967 = scalar_lea.vmem %s7, %s5966
      // Predicated region
      $region49: #{multi_frame_attention.1} parent=47 // pred_check
        %p5968 = pneg %p188
      $region50: #{multi_frame_attention.1} parent=47 // pred_check_branch
        %5970 = sbr.rel (%p5968) target = $region52
      $region51: #{multi_frame_attention.1} parent=47 // pred_region
        _
      $region52: #{multi_frame_attention.1} parent=47 // pred_fallthru
        _
    $region48: #{multi_frame_attention.1} parent=5 // pred_fallthru
      _
    %p5971 = scmp.le.s32.totalorder 2, %s13
    // Predicated region
    $region53: #{multi_frame_attention.1} parent=5 // pred_check
      %p5972 = pneg %p5971
    $region54: #{multi_frame_attention.1} parent=5 // pred_check_branch
      %5974 = sbr.rel (%p5972) target = $region56
    $region55: #{multi_frame_attention.1} parent=5 // pred_region
      %s5975 = ssub.s32 %s13, 2
      // Predicated region
      $region57: #{multi_frame_attention.1} parent=55 // pred_check
        %p5976 = pneg %p194
      $region58: #{multi_frame_attention.1} parent=55 // pred_check_branch
        %5978 = sbr.rel (%p5976) target = $region60
      $region59: #{multi_frame_attention.1} parent=55 // pred_region
        %p5979 = scmp.lt.s32.totalorder %s19, 1
        %s5980 = scalar_select %p5979, %s19, 1
        %s5981 = smul.addr %s5980, 8
        %s5982 = smul.addr %s5981, 4
        %s5983 = scalar_lea.vmem %s7, %s5982
      $region60: #{multi_frame_attention.1} parent=55 // pred_fallthru
        _
    $region56: #{multi_frame_attention.1} parent=5 // pred_fallthru
      _
  $region6: #{multi_frame_attention.1} parent=0 // loop_footer
    %s17 = sadd.s32 1, %s13
  $region7: #{multi_frame_attention.1} parent=0 // loop_footer_branch
    %12 = sbr.rel target = $region3
  $region8: #{multi_frame_attention.1} parent=0 // loop_exit
    _

</llo_original>
